<compile_context>
chip_gen: v7x
topology: tpu7x:2x2x1
jax: 0.10.0
libtpu: 0.0.40
codegen_flags: <defaults>
</compile_context>

<pallas_src>
import functools
import math

import jax
import jax.numpy as jnp
import numpy as np
from jax.experimental import pallas as pl
from jax.experimental.pallas import tpu as pltpu


# ----------------------------- in-kernel helpers -----------------------------

def _layernorm(x, w, b, eps):
    # x: (T, D) f32, w/b: (1, D) f32  (biased variance, like PyTorch)
    mu = jnp.mean(x, axis=-1, keepdims=True)
    var = jnp.mean((x - mu) ** 2, axis=-1, keepdims=True)
    return (x - mu) * jax.lax.rsqrt(var + eps) * w + b


def _mha(x, kv, wq, wk, wv, bq, bk, bv, wo, bo, *, nhead):
    """Multi-head attention, heads as a dot_general batch dim (no slices/concat).

    x:  (T, D) f32   query source
    kv: (S, D) f32   key/value source
    wq/wk/wv: (H, D, hd) bf16     bq/bk/bv: (H, 1, hd) f32
    wo: (H, hd, D) bf16           bo: (1, D) f32
    """
    H = nhead
    T, D = x.shape
    S = kv.shape[0]
    hd = D // H

    xb = jnp.broadcast_to(x.astype(jnp.bfloat16)[None], (H, T, D))
    kvb = jnp.broadcast_to(kv.astype(jnp.bfloat16)[None], (H, S, D))

    # Per-head projections (bf16 MXU inputs, f32 accumulate).
    q = jnp.einsum('htd,hdk->htk', xb, wq, preferred_element_type=jnp.float32) + bq
    k = jnp.einsum('hsd,hdk->hsk', kvb, wk, preferred_element_type=jnp.float32) + bk
    v = jnp.einsum('hsd,hdk->hsk', kvb, wv, preferred_element_type=jnp.float32) + bv

    scale = 1.0 / math.sqrt(float(hd))
    s = jnp.einsum('htk,hsk->hts', q.astype(jnp.bfloat16), k.astype(jnp.bfloat16),
                   preferred_element_type=jnp.float32) * scale

    # Numerically-stable softmax; divide goes to the EUP via approx reciprocal.
    s = s - jnp.max(s, axis=-1, keepdims=True)
    p = jnp.exp(s)
    p = p * pl.reciprocal(jnp.sum(p, axis=-1, keepdims=True), approx=True)

    o = jnp.einsum('hts,hsk->htk', p.astype(jnp.bfloat16), v.astype(jnp.bfloat16),
                   preferred_element_type=jnp.float32)
    # Per-head output projection, then reduce over heads (== concat + matmul).
    out = jnp.einsum('htk,hkd->htd', o.astype(jnp.bfloat16), wo,
                     preferred_element_type=jnp.float32)
    return jnp.sum(out, axis=0) + bo


# --------------- Pallas kernel: one full decoder layer per batch -------------

def decoder_layer_kernel(tgt_ref, mem_ref,
                         sa_wq, sa_wk, sa_wv, sa_bq, sa_bk, sa_bv, sa_wo, sa_bo,
                         ca_wq, ca_wk, ca_wv, ca_bq, ca_bk, ca_bv, ca_wo, ca_bo,
                         w1_ref, b1_ref, w2_ref, b2_ref,
                         ln1w, ln1b, ln2w, ln2b, ln3w, ln3b,
                         out_ref, *, nhead, eps):
    x = tgt_ref[0]      # (T, D) f32
    mem = mem_ref[0]    # (S, D) f32

    # self-attention + residual + norm1  (dropout1 == identity)
    sa = _mha(x, x, sa_wq[...], sa_wk[...], sa_wv[...],
              sa_bq[...], sa_bk[...], sa_bv[...], sa_wo[...], sa_bo[...],
              nhead=nhead)
    x = _layernorm(x + sa, ln1w[...], ln1b[...], eps)

    # cross-attention + residual + norm2  (dropout2 == identity)
    ca = _mha(x, mem, ca_wq[...], ca_wk[...], ca_wv[...],
              ca_bq[...], ca_bk[...], ca_bv[...], ca_wo[...], ca_bo[...],
              nhead=nhead)
    x = _layernorm(x + ca, ln2w[...], ln2b[...], eps)

    # feed-forward (relu) + residual + norm3  (dropout/dropout3 == identity)
    h = jnp.dot(x.astype(jnp.bfloat16), w1_ref[...],
                preferred_element_type=jnp.float32) + b1_ref[...]
    h = jnp.maximum(h, 0.0)
    ff = jnp.dot(h.astype(jnp.bfloat16), w2_ref[...],
                 preferred_element_type=jnp.float32) + b2_ref[...]
    x = _layernorm(x + ff, ln3w[...], ln3b[...], eps)

    out_ref[0] = x.astype(out_ref.dtype)


# ------------------- wrapper: one-time weight layout work --------------------

def _prep_attention_params(w_in, b_in, w_out, b_out, *, nhead):
    """PyTorch MHA params -> kernel-friendly per-head, pre-transposed, bf16."""
    D = w_out.shape[0]
    hd = D // nhead

    def split_proj(w, b):
        # w: (D, D) (out, in) -> (H, D, hd) so kernel computes x @ w_h per head.
        wt = jnp.transpose(w).reshape(D, nhead, hd).transpose(1, 0, 2)
        bh = b.reshape(nhead, 1, hd)
        return wt.astype(jnp.bfloat16), bh.astype(jnp.float32)

    wq, bq = split_proj(w_in[0:D], b_in[:, 0:D])
    wk, bk = split_proj(w_in[D:2 * D], b_in[:, D:2 * D])
    wv, bv = split_proj(w_in[2 * D:3 * D], b_in[:, 2 * D:3 * D])
    wo = jnp.transpose(w_out).reshape(nhead, hd, D).astype(jnp.bfloat16)
    bo = b_out.astype(jnp.float32)
    return (wq, wk, wv, bq, bk, bv, wo, bo)


def transformer_decoder_layer(tgt_sbd, memory_sbd, params, *, nhead, eps=1e-5):
    """tgt_sbd: (T, B, D), memory_sbd: (S, B, D)  (PyTorch batch_first=False)."""
    tgt = jnp.transpose(tgt_sbd, (1, 0, 2))      # (B, T, D)
    mem = jnp.transpose(memory_sbd, (1, 0, 2))   # (B, S, D)
    B, T, D = tgt.shape
    S = mem.shape[1]
    F = params["w1"].shape[0]
    H = nhead
    hd = D // H

    sa = _prep_attention_params(params["sa_w_in"], params["sa_b_in"],
                                params["sa_w_out"], params["sa_b_out"], nhead=H)
    ca = _prep_attention_params(params["ca_w_in"], params["ca_b_in"],
                                params["ca_w_out"], params["ca_b_out"], nhead=H)
    w1t = jnp.transpose(params["w1"]).astype(jnp.bfloat16)   # (D, F)
    w2t = jnp.transpose(params["w2"]).astype(jnp.bfloat16)   # (F, D)

    def full_spec(shape):
        return pl.BlockSpec(shape, lambda b, _s=len(shape): (0,) * _s)

    attn_specs = [full_spec((H, D, hd)), full_spec((H, D, hd)), full_spec((H, D, hd)),
                  full_spec((H, 1, hd)), full_spec((H, 1, hd)), full_spec((H, 1, hd)),
                  full_spec((H, hd, D)), full_spec((1, D))]

    in_specs = (
        [pl.BlockSpec((1, T, D), lambda b: (b, 0, 0)),    # tgt
         pl.BlockSpec((1, S, D), lambda b: (b, 0, 0))]    # memory
        + attn_specs + attn_specs
        + [full_spec((D, F)), full_spec((1, F)), full_spec((F, D)), full_spec((1, D))]
        + [full_spec((1, D))] * 6
    )

    flops = 2 * B * (4 * T * D * D + 2 * T * T * D            # self-attention
                     + 2 * T * D * D + 2 * S * D * D + 2 * T * S * D   # cross-attn
                     + 2 * T * D * F)                          # feed-forward
    bytes_accessed = 4 * (B * T * D * 2 + B * S * D) + 2 * (8 * D * D + 2 * D * F)
    cost = pl.CostEstimate(flops=int(flops),
                           transcendentals=int(B * H * (T * T + T * S)),
                           bytes_accessed=int(bytes_accessed))

    out = pl.pallas_call(
        functools.partial(decoder_layer_kernel, nhead=H, eps=eps),
        out_shape=jax.ShapeDtypeStruct((B, T, D), jnp.float32),
        grid_spec=pltpu.PrefetchScalarGridSpec(
            num_scalar_prefetch=0,
            grid=(B,),
            in_specs=in_specs,
            out_specs=pl.BlockSpec((1, T, D), lambda b: (b, 0, 0)),
        ),
        compiler_params=pltpu.CompilerParams(
            dimension_semantics=("parallel",)),
        cost_estimate=cost,
    )(tgt, mem, *sa, *ca,
      w1t, params["b1"], w2t, params["b2"],
      params["ln1_w"], params["ln1_b"], params["ln2_w"], params["ln2_b"],
      params["ln3_w"], params["ln3_b"])

    return jnp.transpose(out, (1, 0, 2))  # back to (T, B, D)


# ---------------- pure-JAX f32 reference (PyTorch semantics) -----------------

def reference_decoder_layer(tgt_sbd, memory_sbd, p, *, nhead, eps=1e-5):
    def ln(x, w, b):
        mu = jnp.mean(x, axis=-1, keepdims=True)
        var = jnp.mean((x - mu) ** 2, axis=-1, keepdims=True)
        return (x - mu) * jax.lax.rsqrt(var + eps) * w + b

    def mha(q_in, kv_in, w_in, b_in, w_out, b_out):
        D = q_in.shape[-1]
        hd = D // nhead
        q = q_in @ w_in[0:D].T + b_in[:, 0:D]
        k = kv_in @ w_in[D:2 * D].T + b_in[:, D:2 * D]
        v = kv_in @ w_in[2 * D:3 * D].T + b_in[:, 2 * D:3 * D]
        outs = []
        for h in range(nhead):
            qh, kh, vh = (a[:, h * hd:(h + 1) * hd] for a in (q, k, v))
            s = qh @ kh.T / math.sqrt(float(hd))
            pmat = jax.nn.softmax(s, axis=-1)
            outs.append(pmat @ vh)
        return jnp.concatenate(outs, -1) @ w_out.T + b_out

    tgt = jnp.transpose(tgt_sbd, (1, 0, 2))
    mem = jnp.transpose(memory_sbd, (1, 0, 2))
    outs = []
    for b in range(tgt.shape[0]):
        x, m = tgt[b], mem[b]
        x = ln(x + mha(x, x, p["sa_w_in"], p["sa_b_in"], p["sa_w_out"], p["sa_b_out"]),
               p["ln1_w"], p["ln1_b"])
        x = ln(x + mha(x, m, p["ca_w_in"], p["ca_b_in"], p["ca_w_out"], p["ca_b_out"]),
               p["ln2_w"], p["ln2_b"])
        ff = jnp.maximum(x @ p["w1"].T + p["b1"], 0.0) @ p["w2"].T + p["b2"]
        x = ln(x + ff, p["ln3_w"], p["ln3_b"])
        outs.append(x)
    return jnp.transpose(jnp.stack(outs, 0), (1, 0, 2))


# ------------------------------------ main ------------------------------------

if __name__ == "__main__":
    D = 32          # d_model
    NHEAD = 4
    FF = 64         # dim_feedforward
    T = 8           # target sequence length
    S = 8           # memory sequence length
    B = 2           # batch

    key = jax.random.PRNGKey(0)
    keys = jax.random.split(key, 20)

    def nrm(k, shape, scale=0.1):
        return (scale * jax.random.normal(k, shape)).astype(jnp.float32)

    params = {
        # self-attention (PyTorch in_proj/out_proj layout)
        "sa_w_in":  nrm(keys[0], (3 * D, D)),
        "sa_b_in":  nrm(keys[1], (1, 3 * D)),
        "sa_w_out": nrm(keys[2], (D, D)),
        "sa_b_out": nrm(keys[3], (1, D)),
        # cross-attention
        "ca_w_in":  nrm(keys[4], (3 * D, D)),
        "ca_b_in":  nrm(keys[5], (1, 3 * D)),
        "ca_w_out": nrm(keys[6], (D, D)),
        "ca_b_out": nrm(keys[7], (1, D)),
        # feed-forward
        "w1": nrm(keys[8], (FF, D)),
        "b1": nrm(keys[9], (1, FF)),
        "w2": nrm(keys[10], (D, FF)),
        "b2": nrm(keys[11], (1, D)),
        # layer norms (gamma=1, beta=0 like PyTorch init)
        "ln1_w": jnp.ones((1, D), jnp.float32), "ln1_b": jnp.zeros((1, D), jnp.float32),
        "ln2_w": jnp.ones((1, D), jnp.float32), "ln2_b": jnp.zeros((1, D), jnp.float32),
        "ln3_w": jnp.ones((1, D), jnp.float32), "ln3_b": jnp.zeros((1, D), jnp.float32),
    }

    tgt = jax.random.normal(keys[12], (T, B, D), jnp.float32)       # (seq, batch, d_model)
    memory = jax.random.normal(keys[13], (S, B, D), jnp.float32)

    out = transformer_decoder_layer(tgt, memory, params, nhead=NHEAD)
    out = jax.block_until_ready(out)

    ref = reference_decoder_layer(tgt, memory, params, nhead=NHEAD)
    # Tolerance reflects bf16 MXU inputs (f32 accumulation) vs. the pure-f32
    # reference; structural errors would be O(0.1-1).
    np.testing.assert_allclose(np.asarray(out), np.asarray(ref), rtol=4e-2, atol=4e-2)

    # TODO(synk): attn_mask / key_padding_mask arguments are not modeled (forward is
    # exercised with them as None, matching the default call signature).
    print("KERNEL_OK")
</pallas_src>

<mosaic_0001>
module attributes {stable_mosaic.version = 11 : i64} {
  func.func @decoder_layer_kernel(%arg0: i32, %arg1: memref<1x8x32xf32, #tpu.memory_space<vmem>>, %arg2: memref<1x8x32xf32, #tpu.memory_space<vmem>>, %arg3: memref<4x32x8xbf16, #tpu.memory_space<vmem>>, %arg4: memref<4x32x8xbf16, #tpu.memory_space<vmem>>, %arg5: memref<4x32x8xbf16, #tpu.memory_space<vmem>>, %arg6: memref<4x1x8xf32, #tpu.memory_space<vmem>>, %arg7: memref<4x1x8xf32, #tpu.memory_space<vmem>>, %arg8: memref<4x1x8xf32, #tpu.memory_space<vmem>>, %arg9: memref<4x8x32xbf16, #tpu.memory_space<vmem>>, %arg10: memref<1x32xf32, #tpu.memory_space<vmem>>, %arg11: memref<4x32x8xbf16, #tpu.memory_space<vmem>>, %arg12: memref<4x32x8xbf16, #tpu.memory_space<vmem>>, %arg13: memref<4x32x8xbf16, #tpu.memory_space<vmem>>, %arg14: memref<4x1x8xf32, #tpu.memory_space<vmem>>, %arg15: memref<4x1x8xf32, #tpu.memory_space<vmem>>, %arg16: memref<4x1x8xf32, #tpu.memory_space<vmem>>, %arg17: memref<4x8x32xbf16, #tpu.memory_space<vmem>>, %arg18: memref<1x32xf32, #tpu.memory_space<vmem>>, %arg19: memref<32x64xbf16, #tpu.memory_space<vmem>>, %arg20: memref<1x64xf32, #tpu.memory_space<vmem>>, %arg21: memref<64x32xbf16, #tpu.memory_space<vmem>>, %arg22: memref<1x32xf32, #tpu.memory_space<vmem>>, %arg23: memref<1x32xf32, #tpu.memory_space<vmem>>, %arg24: memref<1x32xf32, #tpu.memory_space<vmem>>, %arg25: memref<1x32xf32, #tpu.memory_space<vmem>>, %arg26: memref<1x32xf32, #tpu.memory_space<vmem>>, %arg27: memref<1x32xf32, #tpu.memory_space<vmem>>, %arg28: memref<1x32xf32, #tpu.memory_space<vmem>>, %arg29: memref<1x8x32xf32, #tpu.memory_space<vmem>>) attributes {dimension_semantics = [#tpu.dimension_semantics<parallel>], iteration_bounds = array<i64: 2>, scalar_prefetch = 0 : i64, scratch_operands = 0 : i64, tpu.core_type = #tpu.core_type<tc>, window_params = [{transform_indices = @transform_0, window_bounds = array<i64: 1, 8, 32>}, {transform_indices = @transform_1, window_bounds = array<i64: 1, 8, 32>}, {pipeline_mode = #tpu.pipeline_mode<synchronous>, transform_indices = @transform_2, window_bounds = array<i64: 4, 32, 8>}, {pipeline_mode = #tpu.pipeline_mode<synchronous>, transform_indices = @transform_3, window_bounds = array<i64: 4, 32, 8>}, {pipeline_mode = #tpu.pipeline_mode<synchronous>, transform_indices = @transform_4, window_bounds = array<i64: 4, 32, 8>}, {pipeline_mode = #tpu.pipeline_mode<synchronous>, transform_indices = @transform_5, window_bounds = array<i64: 4, 1, 8>}, {pipeline_mode = #tpu.pipeline_mode<synchronous>, transform_indices = @transform_6, window_bounds = array<i64: 4, 1, 8>}, {pipeline_mode = #tpu.pipeline_mode<synchronous>, transform_indices = @transform_7, window_bounds = array<i64: 4, 1, 8>}, {pipeline_mode = #tpu.pipeline_mode<synchronous>, transform_indices = @transform_8, window_bounds = array<i64: 4, 8, 32>}, {pipeline_mode = #tpu.pipeline_mode<synchronous>, transform_indices = @transform_9, window_bounds = array<i64: 1, 32>}, {pipeline_mode = #tpu.pipeline_mode<synchronous>, transform_indices = @transform_10, window_bounds = array<i64: 4, 32, 8>}, {pipeline_mode = #tpu.pipeline_mode<synchronous>, transform_indices = @transform_11, window_bounds = array<i64: 4, 32, 8>}, {pipeline_mode = #tpu.pipeline_mode<synchronous>, transform_indices = @transform_12, window_bounds = array<i64: 4, 32, 8>}, {pipeline_mode = #tpu.pipeline_mode<synchronous>, transform_indices = @transform_13, window_bounds = array<i64: 4, 1, 8>}, {pipeline_mode = #tpu.pipeline_mode<synchronous>, transform_indices = @transform_14, window_bounds = array<i64: 4, 1, 8>}, {pipeline_mode = #tpu.pipeline_mode<synchronous>, transform_indices = @transform_15, window_bounds = array<i64: 4, 1, 8>}, {pipeline_mode = #tpu.pipeline_mode<synchronous>, transform_indices = @transform_16, window_bounds = array<i64: 4, 8, 32>}, {pipeline_mode = #tpu.pipeline_mode<synchronous>, transform_indices = @transform_17, window_bounds = array<i64: 1, 32>}, {pipeline_mode = #tpu.pipeline_mode<synchronous>, transform_indices = @transform_18, window_bounds = array<i64: 32, 64>}, {pipeline_mode = #tpu.pipeline_mode<synchronous>, transform_indices = @transform_19, window_bounds = array<i64: 1, 64>}, {pipeline_mode = #tpu.pipeline_mode<synchronous>, transform_indices = @transform_20, window_bounds = array<i64: 64, 32>}, {pipeline_mode = #tpu.pipeline_mode<synchronous>, transform_indices = @transform_21, window_bounds = array<i64: 1, 32>}, {pipeline_mode = #tpu.pipeline_mode<synchronous>, transform_indices = @transform_22, window_bounds = array<i64: 1, 32>}, {pipeline_mode = #tpu.pipeline_mode<synchronous>, transform_indices = @transform_23, window_bounds = array<i64: 1, 32>}, {pipeline_mode = #tpu.pipeline_mode<synchronous>, transform_indices = @transform_24, window_bounds = array<i64: 1, 32>}, {pipeline_mode = #tpu.pipeline_mode<synchronous>, transform_indices = @transform_25, window_bounds = array<i64: 1, 32>}, {pipeline_mode = #tpu.pipeline_mode<synchronous>, transform_indices = @transform_26, window_bounds = array<i64: 1, 32>}, {pipeline_mode = #tpu.pipeline_mode<synchronous>, transform_indices = @transform_27, window_bounds = array<i64: 1, 32>}, {transform_indices = @transform_28, window_bounds = array<i64: 1, 8, 32>}]} {
    %c0 = arith.constant 0 : index
    %c0_0 = arith.constant 0 : index
    %c0_1 = arith.constant 0 : index
    %0 = vector.load %arg1[%c0, %c0_0, %c0_1] : memref<1x8x32xf32, #tpu.memory_space<vmem>>, vector<1x8x32xf32>
    %1 = vector.shape_cast %0 : vector<1x8x32xf32> to vector<8x32xf32>
    %c0_2 = arith.constant 0 : index
    %c0_3 = arith.constant 0 : index
    %c0_4 = arith.constant 0 : index
    %2 = vector.load %arg2[%c0_2, %c0_3, %c0_4] : memref<1x8x32xf32, #tpu.memory_space<vmem>>, vector<1x8x32xf32>
    %3 = vector.shape_cast %2 : vector<1x8x32xf32> to vector<8x32xf32>
    %c0_5 = arith.constant 0 : index
    %c0_6 = arith.constant 0 : index
    %c0_7 = arith.constant 0 : index
    %4 = vector.load %arg3[%c0_5, %c0_6, %c0_7] : memref<4x32x8xbf16, #tpu.memory_space<vmem>>, vector<4x32x8xbf16>
    %c0_8 = arith.constant 0 : index
    %c0_9 = arith.constant 0 : index
    %c0_10 = arith.constant 0 : index
    %5 = vector.load %arg4[%c0_8, %c0_9, %c0_10] : memref<4x32x8xbf16, #tpu.memory_space<vmem>>, vector<4x32x8xbf16>
    %c0_11 = arith.constant 0 : index
    %c0_12 = arith.constant 0 : index
    %c0_13 = arith.constant 0 : index
    %6 = vector.load %arg5[%c0_11, %c0_12, %c0_13] : memref<4x32x8xbf16, #tpu.memory_space<vmem>>, vector<4x32x8xbf16>
    %c0_14 = arith.constant 0 : index
    %c0_15 = arith.constant 0 : index
    %c0_16 = arith.constant 0 : index
    %7 = vector.load %arg6[%c0_14, %c0_15, %c0_16] : memref<4x1x8xf32, #tpu.memory_space<vmem>>, vector<4x1x8xf32>
    %c0_17 = arith.constant 0 : index
    %c0_18 = arith.constant 0 : index
    %c0_19 = arith.constant 0 : index
    %8 = vector.load %arg7[%c0_17, %c0_18, %c0_19] : memref<4x1x8xf32, #tpu.memory_space<vmem>>, vector<4x1x8xf32>
    %c0_20 = arith.constant 0 : index
    %c0_21 = arith.constant 0 : index
    %c0_22 = arith.constant 0 : index
    %9 = vector.load %arg8[%c0_20, %c0_21, %c0_22] : memref<4x1x8xf32, #tpu.memory_space<vmem>>, vector<4x1x8xf32>
    %c0_23 = arith.constant 0 : index
    %c0_24 = arith.constant 0 : index
    %c0_25 = arith.constant 0 : index
    %10 = vector.load %arg9[%c0_23, %c0_24, %c0_25] : memref<4x8x32xbf16, #tpu.memory_space<vmem>>, vector<4x8x32xbf16>
    %c0_26 = arith.constant 0 : index
    %c0_27 = arith.constant 0 : index
    %11 = vector.load %arg10[%c0_26, %c0_27] : memref<1x32xf32, #tpu.memory_space<vmem>>, vector<1x32xf32>
    %12 = arith.truncf %1 : vector<8x32xf32> to vector<8x32xbf16>
    %13 = vector.shape_cast %12 : vector<8x32xbf16> to vector<1x8x32xbf16>
    %14 = vector.shape_cast %13 : vector<1x8x32xbf16> to vector<1x8x32xbf16>
    %15 = vector.broadcast %14 : vector<1x8x32xbf16> to vector<4x8x32xbf16>
    %16 = arith.truncf %1 : vector<8x32xf32> to vector<8x32xbf16>
    %17 = vector.shape_cast %16 : vector<8x32xbf16> to vector<1x8x32xbf16>
    %18 = vector.shape_cast %17 : vector<1x8x32xbf16> to vector<1x8x32xbf16>
    %19 = vector.broadcast %18 : vector<1x8x32xbf16> to vector<4x8x32xbf16>
    "tpu.trace_start"() <{level = 10 : i32, message = "htd,hdk->htk"}> : () -> ()
    %cst = arith.constant dense<0.000000e+00> : vector<4x8x8xf32>
    %20 = tpu.matmul %15, %4, %cst {dimension_numbers = #tpu.dot_dimension_numbers<[2], [1], [1], [2], [0, 0, 0, 1, 1, 2], [0], [0]>} : vector<4x8x32xbf16>, vector<4x32x8xbf16>, vector<4x8x8xf32> -> vector<4x8x8xf32>
    "tpu.trace_stop"() : () -> ()
    %21 = vector.broadcast %7 : vector<4x1x8xf32> to vector<4x8x8xf32>
    %22 = arith.addf %20, %21 : vector<4x8x8xf32>
    "tpu.trace_start"() <{level = 10 : i32, message = "hsd,hdk->hsk"}> : () -> ()
    %cst_28 = arith.constant dense<0.000000e+00> : vector<4x8x8xf32>
    %23 = tpu.matmul %19, %5, %cst_28 {dimension_numbers = #tpu.dot_dimension_numbers<[2], [1], [1], [2], [0, 0, 0, 1, 1, 2], [0], [0]>} : vector<4x8x32xbf16>, vector<4x32x8xbf16>, vector<4x8x8xf32> -> vector<4x8x8xf32>
    "tpu.trace_stop"() : () -> ()
    %24 = vector.broadcast %8 : vector<4x1x8xf32> to vector<4x8x8xf32>
    %25 = arith.addf %23, %24 : vector<4x8x8xf32>
    "tpu.trace_start"() <{level = 10 : i32, message = "hsd,hdk->hsk"}> : () -> ()
    %cst_29 = arith.constant dense<0.000000e+00> : vector<4x8x8xf32>
    %26 = tpu.matmul %19, %6, %cst_29 {dimension_numbers = #tpu.dot_dimension_numbers<[2], [1], [1], [2], [0, 0, 0, 1, 1, 2], [0], [0]>} : vector<4x8x32xbf16>, vector<4x32x8xbf16>, vector<4x8x8xf32> -> vector<4x8x8xf32>
    "tpu.trace_stop"() : () -> ()
    %27 = vector.broadcast %9 : vector<4x1x8xf32> to vector<4x8x8xf32>
    %28 = arith.addf %26, %27 : vector<4x8x8xf32>
    %29 = arith.truncf %22 : vector<4x8x8xf32> to vector<4x8x8xbf16>
    %30 = arith.truncf %25 : vector<4x8x8xf32> to vector<4x8x8xbf16>
    "tpu.trace_start"() <{level = 10 : i32, message = "htk,hsk->hts"}> : () -> ()
    %cst_30 = arith.constant dense<0.000000e+00> : vector<4x8x8xf32>
    %31 = tpu.matmul %29, %30, %cst_30 {dimension_numbers = #tpu.dot_dimension_numbers<[2], [2], [1], [1], [0, 0, 0, 1, 1, 1], [0], [0]>} : vector<4x8x8xbf16>, vector<4x8x8xbf16>, vector<4x8x8xf32> -> vector<4x8x8xf32>
    "tpu.trace_stop"() : () -> ()
    %cst_31 = arith.constant 0.353553385 : f32
    %32 = vector.broadcast %cst_31 : f32 to vector<4x8x8xf32>
    %33 = arith.mulf %31, %32 : vector<4x8x8xf32>
    %cst_32 = arith.constant dense<0xFF800000> : vector<4x8xf32>
    %34 = vector.multi_reduction <maximumf>, %33, %cst_32 [2] : vector<4x8x8xf32> to vector<4x8xf32>
    %35 = vector.shape_cast %34 : vector<4x8xf32> to vector<4x8x1xf32>
    %36 = vector.broadcast %35 : vector<4x8x1xf32> to vector<4x8x8xf32>
    %37 = arith.subf %33, %36 : vector<4x8x8xf32>
    %38 = math.exp %37 : vector<4x8x8xf32>
    %cst_33 = arith.constant dense<0.000000e+00> : vector<4x8xf32>
    %39 = vector.multi_reduction <add>, %38, %cst_33 [2] : vector<4x8x8xf32> to vector<4x8xf32>
    %40 = vector.shape_cast %39 : vector<4x8xf32> to vector<4x8x1xf32>
    %41 = tpu.reciprocal %40 {approx = true} : vector<4x8x1xf32> -> vector<4x8x1xf32>
    %42 = vector.broadcast %41 : vector<4x8x1xf32> to vector<4x8x8xf32>
    %43 = arith.mulf %38, %42 : vector<4x8x8xf32>
    %44 = arith.truncf %43 : vector<4x8x8xf32> to vector<4x8x8xbf16>
    %45 = arith.truncf %28 : vector<4x8x8xf32> to vector<4x8x8xbf16>
    "tpu.trace_start"() <{level = 10 : i32, message = "hts,hsk->htk"}> : () -> ()
    %cst_34 = arith.constant dense<0.000000e+00> : vector<4x8x8xf32>
    %46 = tpu.matmul %44, %45, %cst_34 {dimension_numbers = #tpu.dot_dimension_numbers<[2], [1], [1], [2], [0, 0, 0, 1, 1, 2], [0], [0]>} : vector<4x8x8xbf16>, vector<4x8x8xbf16>, vector<4x8x8xf32> -> vector<4x8x8xf32>
    "tpu.trace_stop"() : () -> ()
    %47 = arith.truncf %46 : vector<4x8x8xf32> to vector<4x8x8xbf16>
    "tpu.trace_start"() <{level = 10 : i32, message = "htk,hkd->htd"}> : () -> ()
    %cst_35 = arith.constant dense<0.000000e+00> : vector<4x8x32xf32>
    %48 = tpu.matmul %47, %10, %cst_35 {dimension_numbers = #tpu.dot_dimension_numbers<[2], [1], [1], [2], [0, 0, 0, 1, 1, 2], [0], [0]>} : vector<4x8x8xbf16>, vector<4x8x32xbf16>, vector<4x8x32xf32> -> vector<4x8x32xf32>
    "tpu.trace_stop"() : () -> ()
    %cst_36 = arith.constant dense<0.000000e+00> : vector<8x32xf32>
    %49 = vector.multi_reduction <add>, %48, %cst_36 [0] : vector<4x8x32xf32> to vector<8x32xf32>
    %50 = vector.broadcast %11 : vector<1x32xf32> to vector<8x32xf32>
    %51 = arith.addf %49, %50 : vector<8x32xf32>
    %52 = arith.addf %1, %51 : vector<8x32xf32>
    %c0_37 = arith.constant 0 : index
    %c0_38 = arith.constant 0 : index
    %53 = vector.load %arg23[%c0_37, %c0_38] : memref<1x32xf32, #tpu.memory_space<vmem>>, vector<1x32xf32>
    %c0_39 = arith.constant 0 : index
    %c0_40 = arith.constant 0 : index
    %54 = vector.load %arg24[%c0_39, %c0_40] : memref<1x32xf32, #tpu.memory_space<vmem>>, vector<1x32xf32>
    %cst_41 = arith.constant dense<0.000000e+00> : vector<8xf32>
    %55 = vector.multi_reduction <add>, %52, %cst_41 [1] : vector<8x32xf32> to vector<8xf32>
    %56 = vector.shape_cast %55 : vector<8xf32> to vector<8x1xf32>
    %cst_42 = arith.constant 3.200000e+01 : f32
    %57 = vector.broadcast %cst_42 : f32 to vector<8x1xf32>
    %58 = arith.divf %56, %57 : vector<8x1xf32>
    %59 = vector.broadcast %58 : vector<8x1xf32> to vector<8x32xf32>
    %60 = arith.subf %52, %59 : vector<8x32xf32>
    %61 = arith.mulf %60, %60 : vector<8x32xf32>
    %cst_43 = arith.constant dense<0.000000e+00> : vector<8xf32>
    %62 = vector.multi_reduction <add>, %61, %cst_43 [1] : vector<8x32xf32> to vector<8xf32>
    %63 = vector.shape_cast %62 : vector<8xf32> to vector<8x1xf32>
    %cst_44 = arith.constant 3.200000e+01 : f32
    %64 = vector.broadcast %cst_44 : f32 to vector<8x1xf32>
    %65 = arith.divf %63, %64 : vector<8x1xf32>
    %66 = vector.broadcast %58 : vector<8x1xf32> to vector<8x32xf32>
    %67 = arith.subf %52, %66 : vector<8x32xf32>
    %cst_45 = arith.constant 9.99999974E-6 : f32
    %68 = vector.broadcast %cst_45 : f32 to vector<8x1xf32>
    %69 = arith.addf %65, %68 : vector<8x1xf32>
    %70 = math.rsqrt %69 : vector<8x1xf32>
    %71 = vector.broadcast %70 : vector<8x1xf32> to vector<8x32xf32>
    %72 = arith.mulf %67, %71 : vector<8x32xf32>
    %73 = vector.broadcast %53 : vector<1x32xf32> to vector<8x32xf32>
    %74 = arith.mulf %72, %73 : vector<8x32xf32>
    %75 = vector.broadcast %54 : vector<1x32xf32> to vector<8x32xf32>
    %76 = arith.addf %74, %75 : vector<8x32xf32>
    %c0_46 = arith.constant 0 : index
    %c0_47 = arith.constant 0 : index
    %c0_48 = arith.constant 0 : index
    %77 = vector.load %arg11[%c0_46, %c0_47, %c0_48] : memref<4x32x8xbf16, #tpu.memory_space<vmem>>, vector<4x32x8xbf16>
    %c0_49 = arith.constant 0 : index
    %c0_50 = arith.constant 0 : index
    %c0_51 = arith.constant 0 : index
    %78 = vector.load %arg12[%c0_49, %c0_50, %c0_51] : memref<4x32x8xbf16, #tpu.memory_space<vmem>>, vector<4x32x8xbf16>
    %c0_52 = arith.constant 0 : index
    %c0_53 = arith.constant 0 : index
    %c0_54 = arith.constant 0 : index
    %79 = vector.load %arg13[%c0_52, %c0_53, %c0_54] : memref<4x32x8xbf16, #tpu.memory_space<vmem>>, vector<4x32x8xbf16>
    %c0_55 = arith.constant 0 : index
    %c0_56 = arith.constant 0 : index
    %c0_57 = arith.constant 0 : index
    %80 = vector.load %arg14[%c0_55, %c0_56, %c0_57] : memref<4x1x8xf32, #tpu.memory_space<vmem>>, vector<4x1x8xf32>
    %c0_58 = arith.constant 0 : index
    %c0_59 = arith.constant 0 : index
    %c0_60 = arith.constant 0 : index
    %81 = vector.load %arg15[%c0_58, %c0_59, %c0_60] : memref<4x1x8xf32, #tpu.memory_space<vmem>>, vector<4x1x8xf32>
    %c0_61 = arith.constant 0 : index
    %c0_62 = arith.constant 0 : index
    %c0_63 = arith.constant 0 : index
    %82 = vector.load %arg16[%c0_61, %c0_62, %c0_63] : memref<4x1x8xf32, #tpu.memory_space<vmem>>, vector<4x1x8xf32>
    %c0_64 = arith.constant 0 : index
    %c0_65 = arith.constant 0 : index
    %c0_66 = arith.constant 0 : index
    %83 = vector.load %arg17[%c0_64, %c0_65, %c0_66] : memref<4x8x32xbf16, #tpu.memory_space<vmem>>, vector<4x8x32xbf16>
    %c0_67 = arith.constant 0 : index
    %c0_68 = arith.constant 0 : index
    %84 = vector.load %arg18[%c0_67, %c0_68] : memref<1x32xf32, #tpu.memory_space<vmem>>, vector<1x32xf32>
    %85 = arith.truncf %76 : vector<8x32xf32> to vector<8x32xbf16>
    %86 = vector.shape_cast %85 : vector<8x32xbf16> to vector<1x8x32xbf16>
    %87 = vector.shape_cast %86 : vector<1x8x32xbf16> to vector<1x8x32xbf16>
    %88 = vector.broadcast %87 : vector<1x8x32xbf16> to vector<4x8x32xbf16>
    %89 = arith.truncf %3 : vector<8x32xf32> to vector<8x32xbf16>
    %90 = vector.shape_cast %89 : vector<8x32xbf16> to vector<1x8x32xbf16>
    %91 = vector.shape_cast %90 : vector<1x8x32xbf16> to vector<1x8x32xbf16>
    %92 = vector.broadcast %91 : vector<1x8x32xbf16> to vector<4x8x32xbf16>
    "tpu.trace_start"() <{level = 10 : i32, message = "htd,hdk->htk"}> : () -> ()
    %cst_69 = arith.constant dense<0.000000e+00> : vector<4x8x8xf32>
    %93 = tpu.matmul %88, %77, %cst_69 {dimension_numbers = #tpu.dot_dimension_numbers<[2], [1], [1], [2], [0, 0, 0, 1, 1, 2], [0], [0]>} : vector<4x8x32xbf16>, vector<4x32x8xbf16>, vector<4x8x8xf32> -> vector<4x8x8xf32>
    "tpu.trace_stop"() : () -> ()
    %94 = vector.broadcast %80 : vector<4x1x8xf32> to vector<4x8x8xf32>
    %95 = arith.addf %93, %94 : vector<4x8x8xf32>
    "tpu.trace_start"() <{level = 10 : i32, message = "hsd,hdk->hsk"}> : () -> ()
    %cst_70 = arith.constant dense<0.000000e+00> : vector<4x8x8xf32>
    %96 = tpu.matmul %92, %78, %cst_70 {dimension_numbers = #tpu.dot_dimension_numbers<[2], [1], [1], [2], [0, 0, 0, 1, 1, 2], [0], [0]>} : vector<4x8x32xbf16>, vector<4x32x8xbf16>, vector<4x8x8xf32> -> vector<4x8x8xf32>
    "tpu.trace_stop"() : () -> ()
    %97 = vector.broadcast %81 : vector<4x1x8xf32> to vector<4x8x8xf32>
    %98 = arith.addf %96, %97 : vector<4x8x8xf32>
    "tpu.trace_start"() <{level = 10 : i32, message = "hsd,hdk->hsk"}> : () -> ()
    %cst_71 = arith.constant dense<0.000000e+00> : vector<4x8x8xf32>
    %99 = tpu.matmul %92, %79, %cst_71 {dimension_numbers = #tpu.dot_dimension_numbers<[2], [1], [1], [2], [0, 0, 0, 1, 1, 2], [0], [0]>} : vector<4x8x32xbf16>, vector<4x32x8xbf16>, vector<4x8x8xf32> -> vector<4x8x8xf32>
    "tpu.trace_stop"() : () -> ()
    %100 = vector.broadcast %82 : vector<4x1x8xf32> to vector<4x8x8xf32>
    %101 = arith.addf %99, %100 : vector<4x8x8xf32>
    %102 = arith.truncf %95 : vector<4x8x8xf32> to vector<4x8x8xbf16>
    %103 = arith.truncf %98 : vector<4x8x8xf32> to vector<4x8x8xbf16>
    "tpu.trace_start"() <{level = 10 : i32, message = "htk,hsk->hts"}> : () -> ()
    %cst_72 = arith.constant dense<0.000000e+00> : vector<4x8x8xf32>
    %104 = tpu.matmul %102, %103, %cst_72 {dimension_numbers = #tpu.dot_dimension_numbers<[2], [2], [1], [1], [0, 0, 0, 1, 1, 1], [0], [0]>} : vector<4x8x8xbf16>, vector<4x8x8xbf16>, vector<4x8x8xf32> -> vector<4x8x8xf32>
    "tpu.trace_stop"() : () -> ()
    %cst_73 = arith.constant 0.353553385 : f32
    %105 = vector.broadcast %cst_73 : f32 to vector<4x8x8xf32>
    %106 = arith.mulf %104, %105 : vector<4x8x8xf32>
    %cst_74 = arith.constant dense<0xFF800000> : vector<4x8xf32>
    %107 = vector.multi_reduction <maximumf>, %106, %cst_74 [2] : vector<4x8x8xf32> to vector<4x8xf32>
    %108 = vector.shape_cast %107 : vector<4x8xf32> to vector<4x8x1xf32>
    %109 = vector.broadcast %108 : vector<4x8x1xf32> to vector<4x8x8xf32>
    %110 = arith.subf %106, %109 : vector<4x8x8xf32>
    %111 = math.exp %110 : vector<4x8x8xf32>
    %cst_75 = arith.constant dense<0.000000e+00> : vector<4x8xf32>
    %112 = vector.multi_reduction <add>, %111, %cst_75 [2] : vector<4x8x8xf32> to vector<4x8xf32>
    %113 = vector.shape_cast %112 : vector<4x8xf32> to vector<4x8x1xf32>
    %114 = tpu.reciprocal %113 {approx = true} : vector<4x8x1xf32> -> vector<4x8x1xf32>
    %115 = vector.broadcast %114 : vector<4x8x1xf32> to vector<4x8x8xf32>
    %116 = arith.mulf %111, %115 : vector<4x8x8xf32>
    %117 = arith.truncf %116 : vector<4x8x8xf32> to vector<4x8x8xbf16>
    %118 = arith.truncf %101 : vector<4x8x8xf32> to vector<4x8x8xbf16>
    "tpu.trace_start"() <{level = 10 : i32, message = "hts,hsk->htk"}> : () -> ()
    %cst_76 = arith.constant dense<0.000000e+00> : vector<4x8x8xf32>
    %119 = tpu.matmul %117, %118, %cst_76 {dimension_numbers = #tpu.dot_dimension_numbers<[2], [1], [1], [2], [0, 0, 0, 1, 1, 2], [0], [0]>} : vector<4x8x8xbf16>, vector<4x8x8xbf16>, vector<4x8x8xf32> -> vector<4x8x8xf32>
    "tpu.trace_stop"() : () -> ()
    %120 = arith.truncf %119 : vector<4x8x8xf32> to vector<4x8x8xbf16>
    "tpu.trace_start"() <{level = 10 : i32, message = "htk,hkd->htd"}> : () -> ()
    %cst_77 = arith.constant dense<0.000000e+00> : vector<4x8x32xf32>
    %121 = tpu.matmul %120, %83, %cst_77 {dimension_numbers = #tpu.dot_dimension_numbers<[2], [1], [1], [2], [0, 0, 0, 1, 1, 2], [0], [0]>} : vector<4x8x8xbf16>, vector<4x8x32xbf16>, vector<4x8x32xf32> -> vector<4x8x32xf32>
    "tpu.trace_stop"() : () -> ()
    %cst_78 = arith.constant dense<0.000000e+00> : vector<8x32xf32>
    %122 = vector.multi_reduction <add>, %121, %cst_78 [0] : vector<4x8x32xf32> to vector<8x32xf32>
    %123 = vector.broadcast %84 : vector<1x32xf32> to vector<8x32xf32>
    %124 = arith.addf %122, %123 : vector<8x32xf32>
    %125 = arith.addf %76, %124 : vector<8x32xf32>
    %c0_79 = arith.constant 0 : index
    %c0_80 = arith.constant 0 : index
    %126 = vector.load %arg25[%c0_79, %c0_80] : memref<1x32xf32, #tpu.memory_space<vmem>>, vector<1x32xf32>
    %c0_81 = arith.constant 0 : index
    %c0_82 = arith.constant 0 : index
    %127 = vector.load %arg26[%c0_81, %c0_82] : memref<1x32xf32, #tpu.memory_space<vmem>>, vector<1x32xf32>
    %cst_83 = arith.constant dense<0.000000e+00> : vector<8xf32>
    %128 = vector.multi_reduction <add>, %125, %cst_83 [1] : vector<8x32xf32> to vector<8xf32>
    %129 = vector.shape_cast %128 : vector<8xf32> to vector<8x1xf32>
    %cst_84 = arith.constant 3.200000e+01 : f32
    %130 = vector.broadcast %cst_84 : f32 to vector<8x1xf32>
    %131 = arith.divf %129, %130 : vector<8x1xf32>
    %132 = vector.broadcast %131 : vector<8x1xf32> to vector<8x32xf32>
    %133 = arith.subf %125, %132 : vector<8x32xf32>
    %134 = arith.mulf %133, %133 : vector<8x32xf32>
    %cst_85 = arith.constant dense<0.000000e+00> : vector<8xf32>
    %135 = vector.multi_reduction <add>, %134, %cst_85 [1] : vector<8x32xf32> to vector<8xf32>
    %136 = vector.shape_cast %135 : vector<8xf32> to vector<8x1xf32>
    %cst_86 = arith.constant 3.200000e+01 : f32
    %137 = vector.broadcast %cst_86 : f32 to vector<8x1xf32>
    %138 = arith.divf %136, %137 : vector<8x1xf32>
    %139 = vector.broadcast %131 : vector<8x1xf32> to vector<8x32xf32>
    %140 = arith.subf %125, %139 : vector<8x32xf32>
    %cst_87 = arith.constant 9.99999974E-6 : f32
    %141 = vector.broadcast %cst_87 : f32 to vector<8x1xf32>
    %142 = arith.addf %138, %141 : vector<8x1xf32>
    %143 = math.rsqrt %142 : vector<8x1xf32>
    %144 = vector.broadcast %143 : vector<8x1xf32> to vector<8x32xf32>
    %145 = arith.mulf %140, %144 : vector<8x32xf32>
    %146 = vector.broadcast %126 : vector<1x32xf32> to vector<8x32xf32>
    %147 = arith.mulf %145, %146 : vector<8x32xf32>
    %148 = vector.broadcast %127 : vector<1x32xf32> to vector<8x32xf32>
    %149 = arith.addf %147, %148 : vector<8x32xf32>
    %150 = arith.truncf %149 : vector<8x32xf32> to vector<8x32xbf16>
    %c0_88 = arith.constant 0 : index
    %c0_89 = arith.constant 0 : index
    %151 = vector.load %arg19[%c0_88, %c0_89] : memref<32x64xbf16, #tpu.memory_space<vmem>>, vector<32x64xbf16>
    %cst_90 = arith.constant dense<0.000000e+00> : vector<8x64xf32>
    %152 = tpu.matmul %150, %151, %cst_90 {dimension_numbers = #tpu.dot_dimension_numbers<[1], [0], [0], [1], [0, 0, 1, 1], [], []>} : vector<8x32xbf16>, vector<32x64xbf16>, vector<8x64xf32> -> vector<8x64xf32>
    %c0_91 = arith.constant 0 : index
    %c0_92 = arith.constant 0 : index
    %153 = vector.load %arg20[%c0_91, %c0_92] : memref<1x64xf32, #tpu.memory_space<vmem>>, vector<1x64xf32>
    %154 = vector.broadcast %153 : vector<1x64xf32> to vector<8x64xf32>
    %155 = arith.addf %152, %154 : vector<8x64xf32>
    %cst_93 = arith.constant 0.000000e+00 : f32
    %156 = vector.broadcast %cst_93 : f32 to vector<8x64xf32>
    %157 = arith.maximumf %155, %156 : vector<8x64xf32>
    %158 = arith.truncf %157 : vector<8x64xf32> to vector<8x64xbf16>
    %c0_94 = arith.constant 0 : index
    %c0_95 = arith.constant 0 : index
    %159 = vector.load %arg21[%c0_94, %c0_95] : memref<64x32xbf16, #tpu.memory_space<vmem>>, vector<64x32xbf16>
    %cst_96 = arith.constant dense<0.000000e+00> : vector<8x32xf32>
    %160 = tpu.matmul %158, %159, %cst_96 {dimension_numbers = #tpu.dot_dimension_numbers<[1], [0], [0], [1], [0, 0, 1, 1], [], []>} : vector<8x64xbf16>, vector<64x32xbf16>, vector<8x32xf32> -> vector<8x32xf32>
    %c0_97 = arith.constant 0 : index
    %c0_98 = arith.constant 0 : index
    %161 = vector.load %arg22[%c0_97, %c0_98] : memref<1x32xf32, #tpu.memory_space<vmem>>, vector<1x32xf32>
    %162 = vector.broadcast %161 : vector<1x32xf32> to vector<8x32xf32>
    %163 = arith.addf %160, %162 : vector<8x32xf32>
    %164 = arith.addf %149, %163 : vector<8x32xf32>
    %c0_99 = arith.constant 0 : index
    %c0_100 = arith.constant 0 : index
    %165 = vector.load %arg27[%c0_99, %c0_100] : memref<1x32xf32, #tpu.memory_space<vmem>>, vector<1x32xf32>
    %c0_101 = arith.constant 0 : index
    %c0_102 = arith.constant 0 : index
    %166 = vector.load %arg28[%c0_101, %c0_102] : memref<1x32xf32, #tpu.memory_space<vmem>>, vector<1x32xf32>
    %cst_103 = arith.constant dense<0.000000e+00> : vector<8xf32>
    %167 = vector.multi_reduction <add>, %164, %cst_103 [1] : vector<8x32xf32> to vector<8xf32>
    %168 = vector.shape_cast %167 : vector<8xf32> to vector<8x1xf32>
    %cst_104 = arith.constant 3.200000e+01 : f32
    %169 = vector.broadcast %cst_104 : f32 to vector<8x1xf32>
    %170 = arith.divf %168, %169 : vector<8x1xf32>
    %171 = vector.broadcast %170 : vector<8x1xf32> to vector<8x32xf32>
    %172 = arith.subf %164, %171 : vector<8x32xf32>
    %173 = arith.mulf %172, %172 : vector<8x32xf32>
    %cst_105 = arith.constant dense<0.000000e+00> : vector<8xf32>
    %174 = vector.multi_reduction <add>, %173, %cst_105 [1] : vector<8x32xf32> to vector<8xf32>
    %175 = vector.shape_cast %174 : vector<8xf32> to vector<8x1xf32>
    %cst_106 = arith.constant 3.200000e+01 : f32
    %176 = vector.broadcast %cst_106 : f32 to vector<8x1xf32>
    %177 = arith.divf %175, %176 : vector<8x1xf32>
    %178 = vector.broadcast %170 : vector<8x1xf32> to vector<8x32xf32>
    %179 = arith.subf %164, %178 : vector<8x32xf32>
    %cst_107 = arith.constant 9.99999974E-6 : f32
    %180 = vector.broadcast %cst_107 : f32 to vector<8x1xf32>
    %181 = arith.addf %177, %180 : vector<8x1xf32>
    %182 = math.rsqrt %181 : vector<8x1xf32>
    %183 = vector.broadcast %182 : vector<8x1xf32> to vector<8x32xf32>
    %184 = arith.mulf %179, %183 : vector<8x32xf32>
    %185 = vector.broadcast %165 : vector<1x32xf32> to vector<8x32xf32>
    %186 = arith.mulf %184, %185 : vector<8x32xf32>
    %187 = vector.broadcast %166 : vector<1x32xf32> to vector<8x32xf32>
    %188 = arith.addf %186, %187 : vector<8x32xf32>
    %c0_108 = arith.constant 0 : index
    %c0_109 = arith.constant 0 : index
    %c0_110 = arith.constant 0 : index
    %189 = vector.load %arg29[%c0_108, %c0_109, %c0_110] : memref<1x8x32xf32, #tpu.memory_space<vmem>>, vector<1x8x32xf32>
    %190 = vector.shape_cast %189 : vector<1x8x32xf32> to vector<8x32xf32>
    %191 = vector.shape_cast %188 : vector<8x32xf32> to vector<1x8x32xf32>
    tpu.vector_store %arg29[%c0_108, %c0_109, %c0_110], %191 {strides = array<i32>} : memref<1x8x32xf32, #tpu.memory_space<vmem>>, vector<1x8x32xf32>,
    return
  }
  func.func @transform_0(%arg0: i32) -> (i32, i32, i32) {
    %c0_i32 = arith.constant 0 : i32
    %c0_i32_0 = arith.constant 0 : i32
    %c0_i32_1 = arith.constant 0 : i32
    return %arg0, %c0_i32, %c0_i32_0 : i32, i32, i32
  }
  func.func @transform_1(%arg0: i32) -> (i32, i32, i32) {
    %c0_i32 = arith.constant 0 : i32
    %c0_i32_0 = arith.constant 0 : i32
    %c0_i32_1 = arith.constant 0 : i32
    return %arg0, %c0_i32, %c0_i32_0 : i32, i32, i32
  }
  func.func @transform_2(%arg0: i32) -> (i32, i32, i32) {
    %c0_i32 = arith.constant 0 : i32
    %c0_i32_0 = arith.constant 0 : i32
    %c0_i32_1 = arith.constant 0 : i32
    %c0_i32_2 = arith.constant 0 : i32
    return %c0_i32, %c0_i32_0, %c0_i32_1 : i32, i32, i32
  }
  func.func @transform_3(%arg0: i32) -> (i32, i32, i32) {
    %c0_i32 = arith.constant 0 : i32
    %c0_i32_0 = arith.constant 0 : i32
    %c0_i32_1 = arith.constant 0 : i32
    %c0_i32_2 = arith.constant 0 : i32
    return %c0_i32, %c0_i32_0, %c0_i32_1 : i32, i32, i32
  }
  func.func @transform_4(%arg0: i32) -> (i32, i32, i32) {
    %c0_i32 = arith.constant 0 : i32
    %c0_i32_0 = arith.constant 0 : i32
    %c0_i32_1 = arith.constant 0 : i32
    %c0_i32_2 = arith.constant 0 : i32
    return %c0_i32, %c0_i32_0, %c0_i32_1 : i32, i32, i32
  }
  func.func @transform_5(%arg0: i32) -> (i32, i32, i32) {
    %c0_i32 = arith.constant 0 : i32
    %c0_i32_0 = arith.constant 0 : i32
    %c0_i32_1 = arith.constant 0 : i32
    %c0_i32_2 = arith.constant 0 : i32
    return %c0_i32, %c0_i32_0, %c0_i32_1 : i32, i32, i32
  }
  func.func @transform_6(%arg0: i32) -> (i32, i32, i32) {
    %c0_i32 = arith.constant 0 : i32
    %c0_i32_0 = arith.constant 0 : i32
    %c0_i32_1 = arith.constant 0 : i32
    %c0_i32_2 = arith.constant 0 : i32
    return %c0_i32, %c0_i32_0, %c0_i32_1 : i32, i32, i32
  }
  func.func @transform_7(%arg0: i32) -> (i32, i32, i32) {
    %c0_i32 = arith.constant 0 : i32
    %c0_i32_0 = arith.constant 0 : i32
    %c0_i32_1 = arith.constant 0 : i32
    %c0_i32_2 = arith.constant 0 : i32
    return %c0_i32, %c0_i32_0, %c0_i32_1 : i32, i32, i32
  }
  func.func @transform_8(%arg0: i32) -> (i32, i32, i32) {
    %c0_i32 = arith.constant 0 : i32
    %c0_i32_0 = arith.constant 0 : i32
    %c0_i32_1 = arith.constant 0 : i32
    %c0_i32_2 = arith.constant 0 : i32
    return %c0_i32, %c0_i32_0, %c0_i32_1 : i32, i32, i32
  }
  func.func @transform_9(%arg0: i32) -> (i32, i32) {
    %c0_i32 = arith.constant 0 : i32
    %c0_i32_0 = arith.constant 0 : i32
    %c0_i32_1 = arith.constant 0 : i32
    return %c0_i32, %c0_i32_0 : i32, i32
  }
  func.func @transform_10(%arg0: i32) -> (i32, i32, i32) {
    %c0_i32 = arith.constant 0 : i32
    %c0_i32_0 = arith.constant 0 : i32
    %c0_i32_1 = arith.constant 0 : i32
    %c0_i32_2 = arith.constant 0 : i32
    return %c0_i32, %c0_i32_0, %c0_i32_1 : i32, i32, i32
  }
  func.func @transform_11(%arg0: i32) -> (i32, i32, i32) {
    %c0_i32 = arith.constant 0 : i32
    %c0_i32_0 = arith.constant 0 : i32
    %c0_i32_1 = arith.constant 0 : i32
    %c0_i32_2 = arith.constant 0 : i32
    return %c0_i32, %c0_i32_0, %c0_i32_1 : i32, i32, i32
  }
  func.func @transform_12(%arg0: i32) -> (i32, i32, i32) {
    %c0_i32 = arith.constant 0 : i32
    %c0_i32_0 = arith.constant 0 : i32
    %c0_i32_1 = arith.constant 0 : i32
    %c0_i32_2 = arith.constant 0 : i32
    return %c0_i32, %c0_i32_0, %c0_i32_1 : i32, i32, i32
  }
  func.func @transform_13(%arg0: i32) -> (i32, i32, i32) {
    %c0_i32 = arith.constant 0 : i32
    %c0_i32_0 = arith.constant 0 : i32
    %c0_i32_1 = arith.constant 0 : i32
    %c0_i32_2 = arith.constant 0 : i32
    return %c0_i32, %c0_i32_0, %c0_i32_1 : i32, i32, i32
  }
  func.func @transform_14(%arg0: i32) -> (i32, i32, i32) {
    %c0_i32 = arith.constant 0 : i32
    %c0_i32_0 = arith.constant 0 : i32
    %c0_i32_1 = arith.constant 0 : i32
    %c0_i32_2 = arith.constant 0 : i32
    return %c0_i32, %c0_i32_0, %c0_i32_1 : i32, i32, i32
  }
  func.func @transform_15(%arg0: i32) -> (i32, i32, i32) {
    %c0_i32 = arith.constant 0 : i32
    %c0_i32_0 = arith.constant 0 : i32
    %c0_i32_1 = arith.constant 0 : i32
    %c0_i32_2 = arith.constant 0 : i32
    return %c0_i32, %c0_i32_0, %c0_i32_1 : i32, i32, i32
  }
  func.func @transform_16(%arg0: i32) -> (i32, i32, i32) {
    %c0_i32 = arith.constant 0 : i32
    %c0_i32_0 = arith.constant 0 : i32
    %c0_i32_1 = arith.constant 0 : i32
    %c0_i32_2 = arith.constant 0 : i32
    return %c0_i32, %c0_i32_0, %c0_i32_1 : i32, i32, i32
  }
  func.func @transform_17(%arg0: i32) -> (i32, i32) {
    %c0_i32 = arith.constant 0 : i32
    %c0_i32_0 = arith.constant 0 : i32
    %c0_i32_1 = arith.constant 0 : i32
    return %c0_i32, %c0_i32_0 : i32, i32
  }
  func.func @transform_18(%arg0: i32) -> (i32, i32) {
    %c0_i32 = arith.constant 0 : i32
    %c0_i32_0 = arith.constant 0 : i32
    %c0_i32_1 = arith.constant 0 : i32
    return %c0_i32, %c0_i32_0 : i32, i32
  }
  func.func @transform_19(%arg0: i32) -> (i32, i32) {
    %c0_i32 = arith.constant 0 : i32
    %c0_i32_0 = arith.constant 0 : i32
    %c0_i32_1 = arith.constant 0 : i32
    return %c0_i32, %c0_i32_0 : i32, i32
  }
  func.func @transform_20(%arg0: i32) -> (i32, i32) {
    %c0_i32 = arith.constant 0 : i32
    %c0_i32_0 = arith.constant 0 : i32
    %c0_i32_1 = arith.constant 0 : i32
    return %c0_i32, %c0_i32_0 : i32, i32
  }
  func.func @transform_21(%arg0: i32) -> (i32, i32) {
    %c0_i32 = arith.constant 0 : i32
    %c0_i32_0 = arith.constant 0 : i32
    %c0_i32_1 = arith.constant 0 : i32
    return %c0_i32, %c0_i32_0 : i32, i32
  }
  func.func @transform_22(%arg0: i32) -> (i32, i32) {
    %c0_i32 = arith.constant 0 : i32
    %c0_i32_0 = arith.constant 0 : i32
    %c0_i32_1 = arith.constant 0 : i32
    return %c0_i32, %c0_i32_0 : i32, i32
  }
  func.func @transform_23(%arg0: i32) -> (i32, i32) {
    %c0_i32 = arith.constant 0 : i32
    %c0_i32_0 = arith.constant 0 : i32
    %c0_i32_1 = arith.constant 0 : i32
    return %c0_i32, %c0_i32_0 : i32, i32
  }
  func.func @transform_24(%arg0: i32) -> (i32, i32) {
    %c0_i32 = arith.constant 0 : i32
    %c0_i32_0 = arith.constant 0 : i32
    %c0_i32_1 = arith.constant 0 : i32
    return %c0_i32, %c0_i32_0 : i32, i32
  }
  func.func @transform_25(%arg0: i32) -> (i32, i32) {
    %c0_i32 = arith.constant 0 : i32
    %c0_i32_0 = arith.constant 0 : i32
    %c0_i32_1 = arith.constant 0 : i32
    return %c0_i32, %c0_i32_0 : i32, i32
  }
  func.func @transform_26(%arg0: i32) -> (i32, i32) {
    %c0_i32 = arith.constant 0 : i32
    %c0_i32_0 = arith.constant 0 : i32
    %c0_i32_1 = arith.constant 0 : i32
    return %c0_i32, %c0_i32_0 : i32, i32
  }
  func.func @transform_27(%arg0: i32) -> (i32, i32) {
    %c0_i32 = arith.constant 0 : i32
    %c0_i32_0 = arith.constant 0 : i32
    %c0_i32_1 = arith.constant 0 : i32
    return %c0_i32, %c0_i32_0 : i32, i32
  }
  func.func @transform_28(%arg0: i32) -> (i32, i32, i32) {
    %c0_i32 = arith.constant 0 : i32
    %c0_i32_0 = arith.constant 0 : i32
    %c0_i32_1 = arith.constant 0 : i32
    return %arg0, %c0_i32, %c0_i32_0 : i32, i32, i32
  }
}

</mosaic_0001>

<llo_original>
// kernel: tpu_custom_call.1
$region0: #{tpu_custom_call.1}
  #allocation0 [shape = 'u32[]', space=smem, size = 0x4, offset = 0x4, fixed_abs, tag = 'smem constant byte address 0x4 - core index']
  #allocation1 [shape = 'u32[144,128]{1,0:T(1,128)}', space=vmem, size = 0x12000, scoped, tag = 'internal scratch']
  %s0 = inlined_call_operand.vmem [shape: f32[2,8,32], index: 0, kind: input, shape index: {}]
  %s1 = inlined_call_operand.vmem [shape: f32[2,8,32], index: 1, kind: input, shape index: {}]
  %s2 = inlined_call_operand.vmem [shape: bf16[4,32,8], index: 2, kind: input, shape index: {}]
  %s3 = inlined_call_operand.vmem [shape: bf16[4,32,8], index: 3, kind: input, shape index: {}]
  %s4 = inlined_call_operand.vmem [shape: bf16[4,32,8], index: 4, kind: input, shape index: {}]
  %s5 = inlined_call_operand.vmem [shape: f32[4,1,8], index: 5, kind: input, shape index: {}]
  %s6 = inlined_call_operand.vmem [shape: f32[4,1,8], index: 6, kind: input, shape index: {}]
  %s7 = inlined_call_operand.vmem [shape: f32[4,1,8], index: 7, kind: input, shape index: {}]
  %s8 = inlined_call_operand.vmem [shape: bf16[4,8,32], index: 8, kind: input, shape index: {}]
  %s9 = inlined_call_operand.vmem [shape: f32[1,32], index: 9, kind: input, shape index: {}]
  %s10 = inlined_call_operand.vmem [shape: bf16[4,32,8], index: 10, kind: input, shape index: {}]
  %s11 = inlined_call_operand.vmem [shape: bf16[4,32,8], index: 11, kind: input, shape index: {}]
  %s12 = inlined_call_operand.vmem [shape: bf16[4,32,8], index: 12, kind: input, shape index: {}]
  %s13 = inlined_call_operand.vmem [shape: f32[4,1,8], index: 13, kind: input, shape index: {}]
  %s14 = inlined_call_operand.vmem [shape: f32[4,1,8], index: 14, kind: input, shape index: {}]
  %s15 = inlined_call_operand.vmem [shape: f32[4,1,8], index: 15, kind: input, shape index: {}]
  %s16 = inlined_call_operand.vmem [shape: bf16[4,8,32], index: 16, kind: input, shape index: {}]
  %s17 = inlined_call_operand.vmem [shape: f32[1,32], index: 17, kind: input, shape index: {}]
  %s18 = inlined_call_operand.vmem [shape: bf16[32,64], index: 18, kind: input, shape index: {}]
  %s19 = inlined_call_operand.vmem [shape: f32[1,64], index: 19, kind: input, shape index: {}]
  %s20 = inlined_call_operand.vmem [shape: bf16[64,32], index: 20, kind: input, shape index: {}]
  %s21 = inlined_call_operand.vmem [shape: f32[1,32], index: 21, kind: input, shape index: {}]
  %s22 = inlined_call_operand.vmem [shape: f32[1,32], index: 22, kind: input, shape index: {}]
  %s23 = inlined_call_operand.vmem [shape: f32[1,32], index: 23, kind: input, shape index: {}]
  %s24 = inlined_call_operand.vmem [shape: f32[1,32], index: 24, kind: input, shape index: {}]
  %s25 = inlined_call_operand.vmem [shape: f32[1,32], index: 25, kind: input, shape index: {}]
  %s26 = inlined_call_operand.vmem [shape: f32[1,32], index: 26, kind: input, shape index: {}]
  %s27 = inlined_call_operand.vmem [shape: f32[1,32], index: 27, kind: input, shape index: {}]
  %s28 = inlined_call_operand.hbm [shape: f32[2,8,32], index: 28, kind: output, shape index: {}]
  %s29 = sld [smem:[#allocation0]]
  $region145: #{tpu_custom_call.1} parent=0
    _
  %s31 = ssub.s32 1, %s29
  %s32 = scalar_select 0, %s31, %s29
  $region1: #{tpu_custom_call.1} parent=0
    #allocation2 [shape = 'u8[8192]{0}', space=vmem, size = 0x2000, scoped, tag = 'output window, operand 0']
    #allocation3 [shape = 's32[2]{0}', space=sflag, size = 0x8, scoped, tag = 'scoped memory for tpu_custom_call.1']
    %33 = vsyncpa [#allocation3], 0
    %s34 = scalar_lea.sflag [#allocation3], 1
    %35 = vsyncpa %s34, 0
    loop: start=0, step=1, limit=4
    $region2: #{tpu_custom_call.1} parent=1 // loop_pre_header
      _
    $region3: #{tpu_custom_call.1} parent=1 // loop_header
      %s37 = sphi 0, %s41
      %p38 = scmp.ge.s32.totalorder %s37, 4
      %s47 = sphi 0, %s49
      %s50 = sphi 0, %s47
      %s51 = sphi 0, %s50
      %s67 = sphi 0, %s51
      %s73 = sphi 0, %s75
      %s76 = sphi 0, %s73
      %s77 = sphi 0, %s76
      %s93 = sphi 0, %s77
      %s97 = sphi 0, %s97
      %s99 = sphi 0, %s97
      %s100 = sphi 0, %s99
      %s114 = sphi 0, %s100
      %s118 = sphi 0, %s118
      %s120 = sphi 0, %s118
      %s121 = sphi 0, %s120
      %s135 = sphi 0, %s121
      %s139 = sphi 0, %s139
      %s141 = sphi 0, %s139
      %s142 = sphi 0, %s141
      %s156 = sphi 0, %s142
      %s160 = sphi 0, %s160
      %s162 = sphi 0, %s160
      %s163 = sphi 0, %s162
      %s177 = sphi 0, %s163
      %s181 = sphi 0, %s181
      %s183 = sphi 0, %s181
      %s184 = sphi 0, %s183
      %s198 = sphi 0, %s184
      %s202 = sphi 0, %s202
      %s204 = sphi 0, %s202
      %s205 = sphi 0, %s204
      %s219 = sphi 0, %s205
      %s223 = sphi 0, %s223
      %s225 = sphi 0, %s223
      %s226 = sphi 0, %s225
      %s240 = sphi 0, %s226
      %s244 = sphi 0, %s244
      %s246 = sphi 0, %s244
      %s247 = sphi 0, %s246
      %s261 = sphi 0, %s247
      %s265 = sphi 0, %s265
      %s267 = sphi 0, %s265
      %s268 = sphi 0, %s267
      %s282 = sphi 0, %s268
      %s286 = sphi 0, %s286
      %s288 = sphi 0, %s286
      %s289 = sphi 0, %s288
      %s303 = sphi 0, %s289
      %s307 = sphi 0, %s307
      %s309 = sphi 0, %s307
      %s310 = sphi 0, %s309
      %s324 = sphi 0, %s310
      %s328 = sphi 0, %s328
      %s330 = sphi 0, %s328
      %s331 = sphi 0, %s330
      %s345 = sphi 0, %s331
      %s349 = sphi 0, %s349
      %s351 = sphi 0, %s349
      %s352 = sphi 0, %s351
      %s366 = sphi 0, %s352
      %s370 = sphi 0, %s370
      %s372 = sphi 0, %s370
      %s373 = sphi 0, %s372
      %s387 = sphi 0, %s373
      %s391 = sphi 0, %s391
      %s393 = sphi 0, %s391
      %s394 = sphi 0, %s393
      %s408 = sphi 0, %s394
      %s412 = sphi 0, %s412
      %s414 = sphi 0, %s412
      %s415 = sphi 0, %s414
      %s429 = sphi 0, %s415
      %s433 = sphi 0, %s433
      %s435 = sphi 0, %s433
      %s436 = sphi 0, %s435
      %s450 = sphi 0, %s436
      %s454 = sphi 0, %s454
      %s456 = sphi 0, %s454
      %s457 = sphi 0, %s456
      %s471 = sphi 0, %s457
      %s475 = sphi 0, %s475
      %s477 = sphi 0, %s475
      %s478 = sphi 0, %s477
      %s492 = sphi 0, %s478
      %s496 = sphi 0, %s496
      %s498 = sphi 0, %s496
      %s499 = sphi 0, %s498
      %s513 = sphi 0, %s499
      %s517 = sphi 0, %s517
      %s519 = sphi 0, %s517
      %s520 = sphi 0, %s519
      %s534 = sphi 0, %s520
      %s538 = sphi 0, %s538
      %s540 = sphi 0, %s538
      %s541 = sphi 0, %s540
      %s555 = sphi 0, %s541
      %s559 = sphi 0, %s559
      %s561 = sphi 0, %s559
      %s562 = sphi 0, %s561
      %s576 = sphi 0, %s562
      %s580 = sphi 0, %s580
      %s582 = sphi 0, %s580
      %s583 = sphi 0, %s582
      %s597 = sphi 0, %s583
      %s601 = sphi 0, %s601
      %s603 = sphi 0, %s601
      %s604 = sphi 0, %s603
      %s618 = sphi 0, %s604
      %s622 = sphi 0, %s622
      %s624 = sphi 0, %s622
      %s625 = sphi 0, %s624
      %s639 = sphi 0, %s625
      %s645 = sphi 0, %s647
      %s648 = sphi 0, %s645
      %s649 = sphi 0, %s648
      %s665 = sphi 0, %s649
    $region4: #{tpu_custom_call.1} parent=1 // loop_header_branch
      %40 = sbr.rel (%p38) target = $region8
    $region5: #{tpu_custom_call.1} parent=1 // loop_body
      %s42 = ssub.s32 %s37, 1
      %s43 = ssub.s32 %s37, 2
      %s44 = sadd.s32 %s37, 1
      %s45 = ssub.s32 %s37, %s44
      %p46 = scmp.eq.s32.totalorder %s45, 0
      %s48 = sadd.s32 %s47, 1
      %s49 = scalar_select %p46, %s47, %s48
      %p52 = pneg %p46
      %p53 = scmp.eq.s32.totalorder %s37, 1
      %p54 = por %p52, %p53
      %p55 = scmp.ne.s32.totalorder %s47, %s50
      %p56 = scmp.eq.s32.totalorder %s37, 0
      %p57 = por %p55, %p56
      %p58 = scmp.ne.s32.totalorder %s47, %s50
      %p59 = scmp.eq.s32.totalorder %s42, 1
      %p60 = por %p58, %p59
      %p61 = scmp.ne.s32.totalorder %s50, %s51
      %p62 = scmp.eq.s32.totalorder %s42, 0
      %p63 = por %p61, %p62
      %p64 = scmp.ne.s32.totalorder %s50, %s51
      %p65 = scmp.eq.s32.totalorder %s43, 1
      %p66 = por %p64, %p65
      %p68 = scmp.ne.s32.totalorder %s51, %s67
      %p69 = scmp.eq.s32.totalorder %s43, 0
      %p70 = por %p68, %p69
      %s71 = ssub.s32 %s37, %s44
      %p72 = scmp.eq.s32.totalorder %s71, 0
      %s74 = sadd.s32 %s73, 1
      %s75 = scalar_select %p72, %s73, %s74
      %p78 = pneg %p72
      %p79 = scmp.eq.s32.totalorder %s37, 1
      %p80 = por %p78, %p79
      %p81 = scmp.ne.s32.totalorder %s73, %s76
      %p82 = scmp.eq.s32.totalorder %s37, 0
      %p83 = por %p81, %p82
      %p84 = scmp.ne.s32.totalorder %s73, %s76
      %p85 = scmp.eq.s32.totalorder %s42, 1
      %p86 = por %p84, %p85
      %p87 = scmp.ne.s32.totalorder %s76, %s77
      %p88 = scmp.eq.s32.totalorder %s42, 0
      %p89 = por %p87, %p88
      %p90 = scmp.ne.s32.totalorder %s76, %s77
      %p91 = scmp.eq.s32.totalorder %s43, 1
      %p92 = por %p90, %p91
      %p94 = scmp.ne.s32.totalorder %s77, %s93
      %p95 = scmp.eq.s32.totalorder %s43, 0
      %p96 = por %p94, %p95
      %s98 = sadd.s32 %s97, 1
      %p101 = scmp.eq.s32.totalorder %s37, 1
      %p102 = scmp.ne.s32.totalorder %s97, %s99
      %p103 = scmp.eq.s32.totalorder %s37, 0
      %p104 = por %p102, %p103
      %p105 = scmp.ne.s32.totalorder %s97, %s99
      %p106 = scmp.eq.s32.totalorder %s42, 1
      %p107 = por %p105, %p106
      %p108 = scmp.ne.s32.totalorder %s99, %s100
      %p109 = scmp.eq.s32.totalorder %s42, 0
      %p110 = por %p108, %p109
      %p111 = scmp.ne.s32.totalorder %s99, %s100
      %p112 = scmp.eq.s32.totalorder %s43, 1
      %p113 = por %p111, %p112
      %p115 = scmp.ne.s32.totalorder %s100, %s114
      %p116 = scmp.eq.s32.totalorder %s43, 0
      %p117 = por %p115, %p116
      %s119 = sadd.s32 %s118, 1
      %p122 = scmp.eq.s32.totalorder %s37, 1
      %p123 = scmp.ne.s32.totalorder %s118, %s120
      %p124 = scmp.eq.s32.totalorder %s37, 0
      %p125 = por %p123, %p124
      %p126 = scmp.ne.s32.totalorder %s118, %s120
      %p127 = scmp.eq.s32.totalorder %s42, 1
      %p128 = por %p126, %p127
      %p129 = scmp.ne.s32.totalorder %s120, %s121
      %p130 = scmp.eq.s32.totalorder %s42, 0
      %p131 = por %p129, %p130
      %p132 = scmp.ne.s32.totalorder %s120, %s121
      %p133 = scmp.eq.s32.totalorder %s43, 1
      %p134 = por %p132, %p133
      %p136 = scmp.ne.s32.totalorder %s121, %s135
      %p137 = scmp.eq.s32.totalorder %s43, 0
      %p138 = por %p136, %p137
      %s140 = sadd.s32 %s139, 1
      %p143 = scmp.eq.s32.totalorder %s37, 1
      %p144 = scmp.ne.s32.totalorder %s139, %s141
      %p145 = scmp.eq.s32.totalorder %s37, 0
      %p146 = por %p144, %p145
      %p147 = scmp.ne.s32.totalorder %s139, %s141
      %p148 = scmp.eq.s32.totalorder %s42, 1
      %p149 = por %p147, %p148
      %p150 = scmp.ne.s32.totalorder %s141, %s142
      %p151 = scmp.eq.s32.totalorder %s42, 0
      %p152 = por %p150, %p151
      %p153 = scmp.ne.s32.totalorder %s141, %s142
      %p154 = scmp.eq.s32.totalorder %s43, 1
      %p155 = por %p153, %p154
      %p157 = scmp.ne.s32.totalorder %s142, %s156
      %p158 = scmp.eq.s32.totalorder %s43, 0
      %p159 = por %p157, %p158
      %s161 = sadd.s32 %s160, 1
      %p164 = scmp.eq.s32.totalorder %s37, 1
      %p165 = scmp.ne.s32.totalorder %s160, %s162
      %p166 = scmp.eq.s32.totalorder %s37, 0
      %p167 = por %p165, %p166
      %p168 = scmp.ne.s32.totalorder %s160, %s162
      %p169 = scmp.eq.s32.totalorder %s42, 1
      %p170 = por %p168, %p169
      %p171 = scmp.ne.s32.totalorder %s162, %s163
      %p172 = scmp.eq.s32.totalorder %s42, 0
      %p173 = por %p171, %p172
      %p174 = scmp.ne.s32.totalorder %s162, %s163
      %p175 = scmp.eq.s32.totalorder %s43, 1
      %p176 = por %p174, %p175
      %p178 = scmp.ne.s32.totalorder %s163, %s177
      %p179 = scmp.eq.s32.totalorder %s43, 0
      %p180 = por %p178, %p179
      %s182 = sadd.s32 %s181, 1
      %p185 = scmp.eq.s32.totalorder %s37, 1
      %p186 = scmp.ne.s32.totalorder %s181, %s183
      %p187 = scmp.eq.s32.totalorder %s37, 0
      %p188 = por %p186, %p187
      %p189 = scmp.ne.s32.totalorder %s181, %s183
      %p190 = scmp.eq.s32.totalorder %s42, 1
      %p191 = por %p189, %p190
      %p192 = scmp.ne.s32.totalorder %s183, %s184
      %p193 = scmp.eq.s32.totalorder %s42, 0
      %p194 = por %p192, %p193
      %p195 = scmp.ne.s32.totalorder %s183, %s184
      %p196 = scmp.eq.s32.totalorder %s43, 1
      %p197 = por %p195, %p196
      %p199 = scmp.ne.s32.totalorder %s184, %s198
      %p200 = scmp.eq.s32.totalorder %s43, 0
      %p201 = por %p199, %p200
      %s203 = sadd.s32 %s202, 1
      %p206 = scmp.eq.s32.totalorder %s37, 1
      %p207 = scmp.ne.s32.totalorder %s202, %s204
      %p208 = scmp.eq.s32.totalorder %s37, 0
      %p209 = por %p207, %p208
      %p210 = scmp.ne.s32.totalorder %s202, %s204
      %p211 = scmp.eq.s32.totalorder %s42, 1
      %p212 = por %p210, %p211
      %p213 = scmp.ne.s32.totalorder %s204, %s205
      %p214 = scmp.eq.s32.totalorder %s42, 0
      %p215 = por %p213, %p214
      %p216 = scmp.ne.s32.totalorder %s204, %s205
      %p217 = scmp.eq.s32.totalorder %s43, 1
      %p218 = por %p216, %p217
      %p220 = scmp.ne.s32.totalorder %s205, %s219
      %p221 = scmp.eq.s32.totalorder %s43, 0
      %p222 = por %p220, %p221
      %s224 = sadd.s32 %s223, 1
      %p227 = scmp.eq.s32.totalorder %s37, 1
      %p228 = scmp.ne.s32.totalorder %s223, %s225
      %p229 = scmp.eq.s32.totalorder %s37, 0
      %p230 = por %p228, %p229
      %p231 = scmp.ne.s32.totalorder %s223, %s225
      %p232 = scmp.eq.s32.totalorder %s42, 1
      %p233 = por %p231, %p232
      %p234 = scmp.ne.s32.totalorder %s225, %s226
      %p235 = scmp.eq.s32.totalorder %s42, 0
      %p236 = por %p234, %p235
      %p237 = scmp.ne.s32.totalorder %s225, %s226
      %p238 = scmp.eq.s32.totalorder %s43, 1
      %p239 = por %p237, %p238
      %p241 = scmp.ne.s32.totalorder %s226, %s240
      %p242 = scmp.eq.s32.totalorder %s43, 0
      %p243 = por %p241, %p242
      %s245 = sadd.s32 %s244, 1
      %p248 = scmp.eq.s32.totalorder %s37, 1
      %p249 = scmp.ne.s32.totalorder %s244, %s246
      %p250 = scmp.eq.s32.totalorder %s37, 0
      %p251 = por %p249, %p250
      %p252 = scmp.ne.s32.totalorder %s244, %s246
      %p253 = scmp.eq.s32.totalorder %s42, 1
      %p254 = por %p252, %p253
      %p255 = scmp.ne.s32.totalorder %s246, %s247
      %p256 = scmp.eq.s32.totalorder %s42, 0
      %p257 = por %p255, %p256
      %p258 = scmp.ne.s32.totalorder %s246, %s247
      %p259 = scmp.eq.s32.totalorder %s43, 1
      %p260 = por %p258, %p259
      %p262 = scmp.ne.s32.totalorder %s247, %s261
      %p263 = scmp.eq.s32.totalorder %s43, 0
      %p264 = por %p262, %p263
      %s266 = sadd.s32 %s265, 1
      %p269 = scmp.eq.s32.totalorder %s37, 1
      %p270 = scmp.ne.s32.totalorder %s265, %s267
      %p271 = scmp.eq.s32.totalorder %s37, 0
      %p272 = por %p270, %p271
      %p273 = scmp.ne.s32.totalorder %s265, %s267
      %p274 = scmp.eq.s32.totalorder %s42, 1
      %p275 = por %p273, %p274
      %p276 = scmp.ne.s32.totalorder %s267, %s268
      %p277 = scmp.eq.s32.totalorder %s42, 0
      %p278 = por %p276, %p277
      %p279 = scmp.ne.s32.totalorder %s267, %s268
      %p280 = scmp.eq.s32.totalorder %s43, 1
      %p281 = por %p279, %p280
      %p283 = scmp.ne.s32.totalorder %s268, %s282
      %p284 = scmp.eq.s32.totalorder %s43, 0
      %p285 = por %p283, %p284
      %s287 = sadd.s32 %s286, 1
      %p290 = scmp.eq.s32.totalorder %s37, 1
      %p291 = scmp.ne.s32.totalorder %s286, %s288
      %p292 = scmp.eq.s32.totalorder %s37, 0
      %p293 = por %p291, %p292
      %p294 = scmp.ne.s32.totalorder %s286, %s288
      %p295 = scmp.eq.s32.totalorder %s42, 1
      %p296 = por %p294, %p295
      %p297 = scmp.ne.s32.totalorder %s288, %s289
      %p298 = scmp.eq.s32.totalorder %s42, 0
      %p299 = por %p297, %p298
      %p300 = scmp.ne.s32.totalorder %s288, %s289
      %p301 = scmp.eq.s32.totalorder %s43, 1
      %p302 = por %p300, %p301
      %p304 = scmp.ne.s32.totalorder %s289, %s303
      %p305 = scmp.eq.s32.totalorder %s43, 0
      %p306 = por %p304, %p305
      %s308 = sadd.s32 %s307, 1
      %p311 = scmp.eq.s32.totalorder %s37, 1
      %p312 = scmp.ne.s32.totalorder %s307, %s309
      %p313 = scmp.eq.s32.totalorder %s37, 0
      %p314 = por %p312, %p313
      %p315 = scmp.ne.s32.totalorder %s307, %s309
      %p316 = scmp.eq.s32.totalorder %s42, 1
      %p317 = por %p315, %p316
      %p318 = scmp.ne.s32.totalorder %s309, %s310
      %p319 = scmp.eq.s32.totalorder %s42, 0
      %p320 = por %p318, %p319
      %p321 = scmp.ne.s32.totalorder %s309, %s310
      %p322 = scmp.eq.s32.totalorder %s43, 1
      %p323 = por %p321, %p322
      %p325 = scmp.ne.s32.totalorder %s310, %s324
      %p326 = scmp.eq.s32.totalorder %s43, 0
      %p327 = por %p325, %p326
      %s329 = sadd.s32 %s328, 1
      %p332 = scmp.eq.s32.totalorder %s37, 1
      %p333 = scmp.ne.s32.totalorder %s328, %s330
      %p334 = scmp.eq.s32.totalorder %s37, 0
      %p335 = por %p333, %p334
      %p336 = scmp.ne.s32.totalorder %s328, %s330
      %p337 = scmp.eq.s32.totalorder %s42, 1
      %p338 = por %p336, %p337
      %p339 = scmp.ne.s32.totalorder %s330, %s331
      %p340 = scmp.eq.s32.totalorder %s42, 0
      %p341 = por %p339, %p340
      %p342 = scmp.ne.s32.totalorder %s330, %s331
      %p343 = scmp.eq.s32.totalorder %s43, 1
      %p344 = por %p342, %p343
      %p346 = scmp.ne.s32.totalorder %s331, %s345
      %p347 = scmp.eq.s32.totalorder %s43, 0
      %p348 = por %p346, %p347
      %s350 = sadd.s32 %s349, 1
      %p353 = scmp.eq.s32.totalorder %s37, 1
      %p354 = scmp.ne.s32.totalorder %s349, %s351
      %p355 = scmp.eq.s32.totalorder %s37, 0
      %p356 = por %p354, %p355
      %p357 = scmp.ne.s32.totalorder %s349, %s351
      %p358 = scmp.eq.s32.totalorder %s42, 1
      %p359 = por %p357, %p358
      %p360 = scmp.ne.s32.totalorder %s351, %s352
      %p361 = scmp.eq.s32.totalorder %s42, 0
      %p362 = por %p360, %p361
      %p363 = scmp.ne.s32.totalorder %s351, %s352
      %p364 = scmp.eq.s32.totalorder %s43, 1
      %p365 = por %p363, %p364
      %p367 = scmp.ne.s32.totalorder %s352, %s366
      %p368 = scmp.eq.s32.totalorder %s43, 0
      %p369 = por %p367, %p368
      %s371 = sadd.s32 %s370, 1
      %p374 = scmp.eq.s32.totalorder %s37, 1
      %p375 = scmp.ne.s32.totalorder %s370, %s372
      %p376 = scmp.eq.s32.totalorder %s37, 0
      %p377 = por %p375, %p376
      %p378 = scmp.ne.s32.totalorder %s370, %s372
      %p379 = scmp.eq.s32.totalorder %s42, 1
      %p380 = por %p378, %p379
      %p381 = scmp.ne.s32.totalorder %s372, %s373
      %p382 = scmp.eq.s32.totalorder %s42, 0
      %p383 = por %p381, %p382
      %p384 = scmp.ne.s32.totalorder %s372, %s373
      %p385 = scmp.eq.s32.totalorder %s43, 1
      %p386 = por %p384, %p385
      %p388 = scmp.ne.s32.totalorder %s373, %s387
      %p389 = scmp.eq.s32.totalorder %s43, 0
      %p390 = por %p388, %p389
      %s392 = sadd.s32 %s391, 1
      %p395 = scmp.eq.s32.totalorder %s37, 1
      %p396 = scmp.ne.s32.totalorder %s391, %s393
      %p397 = scmp.eq.s32.totalorder %s37, 0
      %p398 = por %p396, %p397
      %p399 = scmp.ne.s32.totalorder %s391, %s393
      %p400 = scmp.eq.s32.totalorder %s42, 1
      %p401 = por %p399, %p400
      %p402 = scmp.ne.s32.totalorder %s393, %s394
      %p403 = scmp.eq.s32.totalorder %s42, 0
      %p404 = por %p402, %p403
      %p405 = scmp.ne.s32.totalorder %s393, %s394
      %p406 = scmp.eq.s32.totalorder %s43, 1
      %p407 = por %p405, %p406
      %p409 = scmp.ne.s32.totalorder %s394, %s408
      %p410 = scmp.eq.s32.totalorder %s43, 0
      %p411 = por %p409, %p410
      %s413 = sadd.s32 %s412, 1
      %p416 = scmp.eq.s32.totalorder %s37, 1
      %p417 = scmp.ne.s32.totalorder %s412, %s414
      %p418 = scmp.eq.s32.totalorder %s37, 0
      %p419 = por %p417, %p418
      %p420 = scmp.ne.s32.totalorder %s412, %s414
      %p421 = scmp.eq.s32.totalorder %s42, 1
      %p422 = por %p420, %p421
      %p423 = scmp.ne.s32.totalorder %s414, %s415
      %p424 = scmp.eq.s32.totalorder %s42, 0
      %p425 = por %p423, %p424
      %p426 = scmp.ne.s32.totalorder %s414, %s415
      %p427 = scmp.eq.s32.totalorder %s43, 1
      %p428 = por %p426, %p427
      %p430 = scmp.ne.s32.totalorder %s415, %s429
      %p431 = scmp.eq.s32.totalorder %s43, 0
      %p432 = por %p430, %p431
      %s434 = sadd.s32 %s433, 1
      %p437 = scmp.eq.s32.totalorder %s37, 1
      %p438 = scmp.ne.s32.totalorder %s433, %s435
      %p439 = scmp.eq.s32.totalorder %s37, 0
      %p440 = por %p438, %p439
      %p441 = scmp.ne.s32.totalorder %s433, %s435
      %p442 = scmp.eq.s32.totalorder %s42, 1
      %p443 = por %p441, %p442
      %p444 = scmp.ne.s32.totalorder %s435, %s436
      %p445 = scmp.eq.s32.totalorder %s42, 0
      %p446 = por %p444, %p445
      %p447 = scmp.ne.s32.totalorder %s435, %s436
      %p448 = scmp.eq.s32.totalorder %s43, 1
      %p449 = por %p447, %p448
      %p451 = scmp.ne.s32.totalorder %s436, %s450
      %p452 = scmp.eq.s32.totalorder %s43, 0
      %p453 = por %p451, %p452
      %s455 = sadd.s32 %s454, 1
      %p458 = scmp.eq.s32.totalorder %s37, 1
      %p459 = scmp.ne.s32.totalorder %s454, %s456
      %p460 = scmp.eq.s32.totalorder %s37, 0
      %p461 = por %p459, %p460
      %p462 = scmp.ne.s32.totalorder %s454, %s456
      %p463 = scmp.eq.s32.totalorder %s42, 1
      %p464 = por %p462, %p463
      %p465 = scmp.ne.s32.totalorder %s456, %s457
      %p466 = scmp.eq.s32.totalorder %s42, 0
      %p467 = por %p465, %p466
      %p468 = scmp.ne.s32.totalorder %s456, %s457
      %p469 = scmp.eq.s32.totalorder %s43, 1
      %p470 = por %p468, %p469
      %p472 = scmp.ne.s32.totalorder %s457, %s471
      %p473 = scmp.eq.s32.totalorder %s43, 0
      %p474 = por %p472, %p473
      %s476 = sadd.s32 %s475, 1
      %p479 = scmp.eq.s32.totalorder %s37, 1
      %p480 = scmp.ne.s32.totalorder %s475, %s477
      %p481 = scmp.eq.s32.totalorder %s37, 0
      %p482 = por %p480, %p481
      %p483 = scmp.ne.s32.totalorder %s475, %s477
      %p484 = scmp.eq.s32.totalorder %s42, 1
      %p485 = por %p483, %p484
      %p486 = scmp.ne.s32.totalorder %s477, %s478
      %p487 = scmp.eq.s32.totalorder %s42, 0
      %p488 = por %p486, %p487
      %p489 = scmp.ne.s32.totalorder %s477, %s478
      %p490 = scmp.eq.s32.totalorder %s43, 1
      %p491 = por %p489, %p490
      %p493 = scmp.ne.s32.totalorder %s478, %s492
      %p494 = scmp.eq.s32.totalorder %s43, 0
      %p495 = por %p493, %p494
      %s497 = sadd.s32 %s496, 1
      %p500 = scmp.eq.s32.totalorder %s37, 1
      %p501 = scmp.ne.s32.totalorder %s496, %s498
      %p502 = scmp.eq.s32.totalorder %s37, 0
      %p503 = por %p501, %p502
      %p504 = scmp.ne.s32.totalorder %s496, %s498
      %p505 = scmp.eq.s32.totalorder %s42, 1
      %p506 = por %p504, %p505
      %p507 = scmp.ne.s32.totalorder %s498, %s499
      %p508 = scmp.eq.s32.totalorder %s42, 0
      %p509 = por %p507, %p508
      %p510 = scmp.ne.s32.totalorder %s498, %s499
      %p511 = scmp.eq.s32.totalorder %s43, 1
      %p512 = por %p510, %p511
      %p514 = scmp.ne.s32.totalorder %s499, %s513
      %p515 = scmp.eq.s32.totalorder %s43, 0
      %p516 = por %p514, %p515
      %s518 = sadd.s32 %s517, 1
      %p521 = scmp.eq.s32.totalorder %s37, 1
      %p522 = scmp.ne.s32.totalorder %s517, %s519
      %p523 = scmp.eq.s32.totalorder %s37, 0
      %p524 = por %p522, %p523
      %p525 = scmp.ne.s32.totalorder %s517, %s519
      %p526 = scmp.eq.s32.totalorder %s42, 1
      %p527 = por %p525, %p526
      %p528 = scmp.ne.s32.totalorder %s519, %s520
      %p529 = scmp.eq.s32.totalorder %s42, 0
      %p530 = por %p528, %p529
      %p531 = scmp.ne.s32.totalorder %s519, %s520
      %p532 = scmp.eq.s32.totalorder %s43, 1
      %p533 = por %p531, %p532
      %p535 = scmp.ne.s32.totalorder %s520, %s534
      %p536 = scmp.eq.s32.totalorder %s43, 0
      %p537 = por %p535, %p536
      %s539 = sadd.s32 %s538, 1
      %p542 = scmp.eq.s32.totalorder %s37, 1
      %p543 = scmp.ne.s32.totalorder %s538, %s540
      %p544 = scmp.eq.s32.totalorder %s37, 0
      %p545 = por %p543, %p544
      %p546 = scmp.ne.s32.totalorder %s538, %s540
      %p547 = scmp.eq.s32.totalorder %s42, 1
      %p548 = por %p546, %p547
      %p549 = scmp.ne.s32.totalorder %s540, %s541
      %p550 = scmp.eq.s32.totalorder %s42, 0
      %p551 = por %p549, %p550
      %p552 = scmp.ne.s32.totalorder %s540, %s541
      %p553 = scmp.eq.s32.totalorder %s43, 1
      %p554 = por %p552, %p553
      %p556 = scmp.ne.s32.totalorder %s541, %s555
      %p557 = scmp.eq.s32.totalorder %s43, 0
      %p558 = por %p556, %p557
      %s560 = sadd.s32 %s559, 1
      %p563 = scmp.eq.s32.totalorder %s37, 1
      %p564 = scmp.ne.s32.totalorder %s559, %s561
      %p565 = scmp.eq.s32.totalorder %s37, 0
      %p566 = por %p564, %p565
      %p567 = scmp.ne.s32.totalorder %s559, %s561
      %p568 = scmp.eq.s32.totalorder %s42, 1
      %p569 = por %p567, %p568
      %p570 = scmp.ne.s32.totalorder %s561, %s562
      %p571 = scmp.eq.s32.totalorder %s42, 0
      %p572 = por %p570, %p571
      %p573 = scmp.ne.s32.totalorder %s561, %s562
      %p574 = scmp.eq.s32.totalorder %s43, 1
      %p575 = por %p573, %p574
      %p577 = scmp.ne.s32.totalorder %s562, %s576
      %p578 = scmp.eq.s32.totalorder %s43, 0
      %p579 = por %p577, %p578
      %s581 = sadd.s32 %s580, 1
      %p584 = scmp.eq.s32.totalorder %s37, 1
      %p585 = scmp.ne.s32.totalorder %s580, %s582
      %p586 = scmp.eq.s32.totalorder %s37, 0
      %p587 = por %p585, %p586
      %p588 = scmp.ne.s32.totalorder %s580, %s582
      %p589 = scmp.eq.s32.totalorder %s42, 1
      %p590 = por %p588, %p589
      %p591 = scmp.ne.s32.totalorder %s582, %s583
      %p592 = scmp.eq.s32.totalorder %s42, 0
      %p593 = por %p591, %p592
      %p594 = scmp.ne.s32.totalorder %s582, %s583
      %p595 = scmp.eq.s32.totalorder %s43, 1
      %p596 = por %p594, %p595
      %p598 = scmp.ne.s32.totalorder %s583, %s597
      %p599 = scmp.eq.s32.totalorder %s43, 0
      %p600 = por %p598, %p599
      %s602 = sadd.s32 %s601, 1
      %p605 = scmp.eq.s32.totalorder %s37, 1
      %p606 = scmp.ne.s32.totalorder %s601, %s603
      %p607 = scmp.eq.s32.totalorder %s37, 0
      %p608 = por %p606, %p607
      %p609 = scmp.ne.s32.totalorder %s601, %s603
      %p610 = scmp.eq.s32.totalorder %s42, 1
      %p611 = por %p609, %p610
      %p612 = scmp.ne.s32.totalorder %s603, %s604
      %p613 = scmp.eq.s32.totalorder %s42, 0
      %p614 = por %p612, %p613
      %p615 = scmp.ne.s32.totalorder %s603, %s604
      %p616 = scmp.eq.s32.totalorder %s43, 1
      %p617 = por %p615, %p616
      %p619 = scmp.ne.s32.totalorder %s604, %s618
      %p620 = scmp.eq.s32.totalorder %s43, 0
      %p621 = por %p619, %p620
      %s623 = sadd.s32 %s622, 1
      %p626 = scmp.eq.s32.totalorder %s37, 1
      %p627 = scmp.ne.s32.totalorder %s622, %s624
      %p628 = scmp.eq.s32.totalorder %s37, 0
      %p629 = por %p627, %p628
      %p630 = scmp.ne.s32.totalorder %s622, %s624
      %p631 = scmp.eq.s32.totalorder %s42, 1
      %p632 = por %p630, %p631
      %p633 = scmp.ne.s32.totalorder %s624, %s625
      %p634 = scmp.eq.s32.totalorder %s42, 0
      %p635 = por %p633, %p634
      %p636 = scmp.ne.s32.totalorder %s624, %s625
      %p637 = scmp.eq.s32.totalorder %s43, 1
      %p638 = por %p636, %p637
      %p640 = scmp.ne.s32.totalorder %s625, %s639
      %p641 = scmp.eq.s32.totalorder %s43, 0
      %p642 = por %p640, %p641
      %s643 = ssub.s32 %s37, %s44
      %p644 = scmp.eq.s32.totalorder %s643, 0
      %s646 = sadd.s32 %s645, 1
      %s647 = scalar_select %p644, %s645, %s646
      %p650 = pneg %p644
      %p651 = scmp.eq.s32.totalorder %s37, 1
      %p652 = por %p650, %p651
      %p653 = scmp.ne.s32.totalorder %s645, %s648
      %p654 = scmp.eq.s32.totalorder %s37, 0
      %p655 = por %p653, %p654
      %p656 = scmp.ne.s32.totalorder %s645, %s648
      %p657 = scmp.eq.s32.totalorder %s42, 1
      %p658 = por %p656, %p657
      %p659 = scmp.ne.s32.totalorder %s648, %s649
      %p660 = scmp.eq.s32.totalorder %s42, 0
      %p661 = por %p659, %p660
      %p662 = scmp.ne.s32.totalorder %s648, %s649
      %p663 = scmp.eq.s32.totalorder %s43, 1
      %p664 = por %p662, %p663
      %p666 = scmp.ne.s32.totalorder %s649, %s665
      %p667 = scmp.eq.s32.totalorder %s43, 0
      %p668 = por %p666, %p667
      %p669 = scmp.le.s32.totalorder 1, %s37
      %p670 = scmp.lt.s32.totalorder %s37, 3
      %p671 = pnand %p669, %p670
      %p672 = pneg %p671
      // Predicated region
      $region9: #{tpu_custom_call.1} parent=5 // pred_check
        _
      $region10: #{tpu_custom_call.1} parent=5 // pred_check_branch
        %674 = sbr.rel (%p671) target = $region12
      $region11: #{tpu_custom_call.1} parent=5 // pred_region
        %s675 = ssub.s32 %s37, 1
        // Predicated region
        $region13: #{tpu_custom_call.1} parent=11 // pred_check
          %p676 = pneg %p110
        $region14: #{tpu_custom_call.1} parent=11 // pred_check_branch
          %678 = sbr.rel (%p676) target = $region16
        $region15: #{tpu_custom_call.1} parent=11 // pred_region
          _
        $region16: #{tpu_custom_call.1} parent=11 // pred_fallthru
          _
        // Predicated region
        $region17: #{tpu_custom_call.1} parent=11 // pred_check
          %p679 = pneg %p131
        $region18: #{tpu_custom_call.1} parent=11 // pred_check_branch
          %681 = sbr.rel (%p679) target = $region20
        $region19: #{tpu_custom_call.1} parent=11 // pred_region
          _
        $region20: #{tpu_custom_call.1} parent=11 // pred_fallthru
          _
        // Predicated region
        $region21: #{tpu_custom_call.1} parent=11 // pred_check
          %p682 = pneg %p152
        $region22: #{tpu_custom_call.1} parent=11 // pred_check_branch
          %684 = sbr.rel (%p682) target = $region24
        $region23: #{tpu_custom_call.1} parent=11 // pred_region
          _
        $region24: #{tpu_custom_call.1} parent=11 // pred_fallthru
          _
        // Predicated region
        $region25: #{tpu_custom_call.1} parent=11 // pred_check
          %p685 = pneg %p173
        $region26: #{tpu_custom_call.1} parent=11 // pred_check_branch
          %687 = sbr.rel (%p685) target = $region28
        $region27: #{tpu_custom_call.1} parent=11 // pred_region
          _
        $region28: #{tpu_custom_call.1} parent=11 // pred_fallthru
          _
        // Predicated region
        $region29: #{tpu_custom_call.1} parent=11 // pred_check
          %p688 = pneg %p194
        $region30: #{tpu_custom_call.1} parent=11 // pred_check_branch
          %690 = sbr.rel (%p688) target = $region32
        $region31: #{tpu_custom_call.1} parent=11 // pred_region
          _
        $region32: #{tpu_custom_call.1} parent=11 // pred_fallthru
          _
        // Predicated region
        $region33: #{tpu_custom_call.1} parent=11 // pred_check
          %p691 = pneg %p215
        $region34: #{tpu_custom_call.1} parent=11 // pred_check_branch
          %693 = sbr.rel (%p691) target = $region36
        $region35: #{tpu_custom_call.1} parent=11 // pred_region
          _
        $region36: #{tpu_custom_call.1} parent=11 // pred_fallthru
          _
        // Predicated region
        $region37: #{tpu_custom_call.1} parent=11 // pred_check
          %p694 = pneg %p236
        $region38: #{tpu_custom_call.1} parent=11 // pred_check_branch
          %696 = sbr.rel (%p694) target = $region40
        $region39: #{tpu_custom_call.1} parent=11 // pred_region
          _
        $region40: #{tpu_custom_call.1} parent=11 // pred_fallthru
          _
        // Predicated region
        $region41: #{tpu_custom_call.1} parent=11 // pred_check
          %p697 = pneg %p257
        $region42: #{tpu_custom_call.1} parent=11 // pred_check_branch
          %699 = sbr.rel (%p697) target = $region44
        $region43: #{tpu_custom_call.1} parent=11 // pred_region
          _
        $region44: #{tpu_custom_call.1} parent=11 // pred_fallthru
          _
        // Predicated region
        $region45: #{tpu_custom_call.1} parent=11 // pred_check
          %p700 = pneg %p278
        $region46: #{tpu_custom_call.1} parent=11 // pred_check_branch
          %702 = sbr.rel (%p700) target = $region48
        $region47: #{tpu_custom_call.1} parent=11 // pred_region
          _
        $region48: #{tpu_custom_call.1} parent=11 // pred_fallthru
          _
        // Predicated region
        $region49: #{tpu_custom_call.1} parent=11 // pred_check
          %p703 = pneg %p299
        $region50: #{tpu_custom_call.1} parent=11 // pred_check_branch
          %705 = sbr.rel (%p703) target = $region52
        $region51: #{tpu_custom_call.1} parent=11 // pred_region
          _
        $region52: #{tpu_custom_call.1} parent=11 // pred_fallthru
          _
        // Predicated region
        $region53: #{tpu_custom_call.1} parent=11 // pred_check
          %p706 = pneg %p320
        $region54: #{tpu_custom_call.1} parent=11 // pred_check_branch
          %708 = sbr.rel (%p706) target = $region56
        $region55: #{tpu_custom_call.1} parent=11 // pred_region
          _
        $region56: #{tpu_custom_call.1} parent=11 // pred_fallthru
          _
        // Predicated region
        $region57: #{tpu_custom_call.1} parent=11 // pred_check
          %p709 = pneg %p341
        $region58: #{tpu_custom_call.1} parent=11 // pred_check_branch
          %711 = sbr.rel (%p709) target = $region60
        $region59: #{tpu_custom_call.1} parent=11 // pred_region
          _
        $region60: #{tpu_custom_call.1} parent=11 // pred_fallthru
          _
        // Predicated region
        $region61: #{tpu_custom_call.1} parent=11 // pred_check
          %p712 = pneg %p362
        $region62: #{tpu_custom_call.1} parent=11 // pred_check_branch
          %714 = sbr.rel (%p712) target = $region64
        $region63: #{tpu_custom_call.1} parent=11 // pred_region
          _
        $region64: #{tpu_custom_call.1} parent=11 // pred_fallthru
          _
        // Predicated region
        $region65: #{tpu_custom_call.1} parent=11 // pred_check
          %p715 = pneg %p383
        $region66: #{tpu_custom_call.1} parent=11 // pred_check_branch
          %717 = sbr.rel (%p715) target = $region68
        $region67: #{tpu_custom_call.1} parent=11 // pred_region
          _
        $region68: #{tpu_custom_call.1} parent=11 // pred_fallthru
          _
        // Predicated region
        $region69: #{tpu_custom_call.1} parent=11 // pred_check
          %p718 = pneg %p404
        $region70: #{tpu_custom_call.1} parent=11 // pred_check_branch
          %720 = sbr.rel (%p718) target = $region72
        $region71: #{tpu_custom_call.1} parent=11 // pred_region
          _
        $region72: #{tpu_custom_call.1} parent=11 // pred_fallthru
          _
        // Predicated region
        $region73: #{tpu_custom_call.1} parent=11 // pred_check
          %p721 = pneg %p425
        $region74: #{tpu_custom_call.1} parent=11 // pred_check_branch
          %723 = sbr.rel (%p721) target = $region76
        $region75: #{tpu_custom_call.1} parent=11 // pred_region
          _
        $region76: #{tpu_custom_call.1} parent=11 // pred_fallthru
          _
        // Predicated region
        $region77: #{tpu_custom_call.1} parent=11 // pred_check
          %p724 = pneg %p446
        $region78: #{tpu_custom_call.1} parent=11 // pred_check_branch
          %726 = sbr.rel (%p724) target = $region80
        $region79: #{tpu_custom_call.1} parent=11 // pred_region
          _
        $region80: #{tpu_custom_call.1} parent=11 // pred_fallthru
          _
        // Predicated region
        $region81: #{tpu_custom_call.1} parent=11 // pred_check
          %p727 = pneg %p467
        $region82: #{tpu_custom_call.1} parent=11 // pred_check_branch
          %729 = sbr.rel (%p727) target = $region84
        $region83: #{tpu_custom_call.1} parent=11 // pred_region
          _
        $region84: #{tpu_custom_call.1} parent=11 // pred_fallthru
          _
        // Predicated region
        $region85: #{tpu_custom_call.1} parent=11 // pred_check
          %p730 = pneg %p488
        $region86: #{tpu_custom_call.1} parent=11 // pred_check_branch
          %732 = sbr.rel (%p730) target = $region88
        $region87: #{tpu_custom_call.1} parent=11 // pred_region
          _
        $region88: #{tpu_custom_call.1} parent=11 // pred_fallthru
          _
        // Predicated region
        $region89: #{tpu_custom_call.1} parent=11 // pred_check
          %p733 = pneg %p509
        $region90: #{tpu_custom_call.1} parent=11 // pred_check_branch
          %735 = sbr.rel (%p733) target = $region92
        $region91: #{tpu_custom_call.1} parent=11 // pred_region
          _
        $region92: #{tpu_custom_call.1} parent=11 // pred_fallthru
          _
        // Predicated region
        $region93: #{tpu_custom_call.1} parent=11 // pred_check
          %p736 = pneg %p530
        $region94: #{tpu_custom_call.1} parent=11 // pred_check_branch
          %738 = sbr.rel (%p736) target = $region96
        $region95: #{tpu_custom_call.1} parent=11 // pred_region
          _
        $region96: #{tpu_custom_call.1} parent=11 // pred_fallthru
          _
        // Predicated region
        $region97: #{tpu_custom_call.1} parent=11 // pred_check
          %p739 = pneg %p551
        $region98: #{tpu_custom_call.1} parent=11 // pred_check_branch
          %741 = sbr.rel (%p739) target = $region100
        $region99: #{tpu_custom_call.1} parent=11 // pred_region
          _
        $region100: #{tpu_custom_call.1} parent=11 // pred_fallthru
          _
        // Predicated region
        $region101: #{tpu_custom_call.1} parent=11 // pred_check
          %p742 = pneg %p572
        $region102: #{tpu_custom_call.1} parent=11 // pred_check_branch
          %744 = sbr.rel (%p742) target = $region104
        $region103: #{tpu_custom_call.1} parent=11 // pred_region
          _
        $region104: #{tpu_custom_call.1} parent=11 // pred_fallthru
          _
        // Predicated region
        $region105: #{tpu_custom_call.1} parent=11 // pred_check
          %p745 = pneg %p593
        $region106: #{tpu_custom_call.1} parent=11 // pred_check_branch
          %747 = sbr.rel (%p745) target = $region108
        $region107: #{tpu_custom_call.1} parent=11 // pred_region
          _
        $region108: #{tpu_custom_call.1} parent=11 // pred_fallthru
          _
        // Predicated region
        $region109: #{tpu_custom_call.1} parent=11 // pred_check
          %p748 = pneg %p614
        $region110: #{tpu_custom_call.1} parent=11 // pred_check_branch
          %750 = sbr.rel (%p748) target = $region112
        $region111: #{tpu_custom_call.1} parent=11 // pred_region
          _
        $region112: #{tpu_custom_call.1} parent=11 // pred_fallthru
          _
        // Predicated region
        $region113: #{tpu_custom_call.1} parent=11 // pred_check
          %p751 = pneg %p635
        $region114: #{tpu_custom_call.1} parent=11 // pred_check_branch
          %753 = sbr.rel (%p751) target = $region116
        $region115: #{tpu_custom_call.1} parent=11 // pred_region
          _
        $region116: #{tpu_custom_call.1} parent=11 // pred_fallthru
          _
      $region12: #{tpu_custom_call.1} parent=5 // pred_fallthru
        _
      %p754 = scmp.lt.s32.totalorder %s37, 2
      // Predicated region
      $region117: #{tpu_custom_call.1} parent=5 // pred_check
        %p755 = pneg %p754
      $region118: #{tpu_custom_call.1} parent=5 // pred_check_branch
        %757 = sbr.rel (%p755) target = $region120
      $region119: #{tpu_custom_call.1} parent=5 // pred_region
        // Predicated region
        $region121: #{tpu_custom_call.1} parent=119 // pred_check
          %p758 = pneg %p57
        $region122: #{tpu_custom_call.1} parent=119 // pred_check_branch
          %760 = sbr.rel (%p758) target = $region124
        $region123: #{tpu_custom_call.1} parent=119 // pred_region
          %p761 = scmp.lt.s32.totalorder %s37, 1
          %s762 = scalar_select %p761, %s37, 1
          %s763 = smul.addr %s762, 8
          %s764 = scalar_lea.vmem %s0, %s763
        $region124: #{tpu_custom_call.1} parent=119 // pred_fallthru
          _
        // Predicated region
        $region125: #{tpu_custom_call.1} parent=119 // pred_check
          %p765 = pneg %p83
        $region126: #{tpu_custom_call.1} parent=119 // pred_check_branch
          %767 = sbr.rel (%p765) target = $region128
        $region127: #{tpu_custom_call.1} parent=119 // pred_region
          %p768 = scmp.lt.s32.totalorder %s37, 1
          %s769 = scalar_select %p768, %s37, 1
          %s770 = smul.addr %s769, 8
          %s771 = scalar_lea.vmem %s1, %s770
        $region128: #{tpu_custom_call.1} parent=119 // pred_fallthru
          _
      $region120: #{tpu_custom_call.1} parent=5 // pred_fallthru
        _
      %p772 = scmp.le.s32.totalorder 1, %s37
      %p773 = scmp.lt.s32.totalorder %s37, 3
      %p774 = pnand %p772, %p773
      %p775 = pneg %p774
      // Predicated region
      $region129: #{tpu_custom_call.1} parent=5 // pred_check
        _
      $region130: #{tpu_custom_call.1} parent=5 // pred_check_branch
        %777 = sbr.rel (%p774) target = $region132
      $region131: #{tpu_custom_call.1} parent=5 // pred_region
        %s778 = ssub.s32 %s37, 1
        %p779 = scmp.lt.s32.totalorder %s42, 1
        %s780 = scalar_select %p779, %s42, 1
        %s781 = smul.addr %s780, 8
        %s782 = scalar_lea.vmem %s0, %s781
        %p783 = pneg %p63
        %p784 = pneg %p60
        %p785 = scmp.lt.s32.totalorder %s42, 1
        %s786 = scalar_select %p785, %s42, 1
        %s787 = smul.addr %s786, 8
        %s788 = scalar_lea.vmem %s1, %s787
        %p789 = pneg %p89
        %p790 = pneg %p86
        %p791 = pneg %p110
        %p792 = pneg %p107
        %p793 = pneg %p131
        %p794 = pneg %p128
        %p795 = pneg %p152
        %p796 = pneg %p149
        %p797 = pneg %p173
        %p798 = pneg %p170
        %p799 = pneg %p194
        %p800 = pneg %p191
        %p801 = pneg %p215
        %p802 = pneg %p212
        %p803 = pneg %p236
        %p804 = pneg %p233
        %p805 = pneg %p257
        %p806 = pneg %p254
        %p807 = pneg %p278
        %p808 = pneg %p275
        %p809 = pneg %p299
        %p810 = pneg %p296
        %p811 = pneg %p320
        %p812 = pneg %p317
        %p813 = pneg %p341
        %p814 = pneg %p338
        %p815 = pneg %p362
        %p816 = pneg %p359
        %p817 = pneg %p383
        %p818 = pneg %p380
        %p819 = pneg %p404
        %p820 = pneg %p401
        %p821 = pneg %p425
        %p822 = pneg %p422
        %p823 = pneg %p446
        %p824 = pneg %p443
        %p825 = pneg %p467
        %p826 = pneg %p464
        %p827 = pneg %p488
        %p828 = pneg %p485
        %p829 = pneg %p509
        %p830 = pneg %p506
        %p831 = pneg %p530
        %p832 = pneg %p527
        %p833 = pneg %p551
        %p834 = pneg %p548
        %p835 = pneg %p572
        %p836 = pneg %p569
        %p837 = pneg %p593
        %p838 = pneg %p590
        %p839 = pneg %p614
        %p840 = pneg %p611
        %p841 = pneg %p635
        %p842 = pneg %p632
        %p843 = pneg %p661
        %p844 = pneg %p658
        %s845 = sand.u32 %s648, 1
        %s846 = scalar_lea.sflag [#allocation3], %s845
        %s847 = sand.u32 %s648, 1
        %s848 = smul.addr %s847, 8
        %s849 = scalar_lea.vmem [#allocation2], %s848
        %p850 = scmp.lt.s32.totalorder %s42, 1
        %s851 = scalar_select %p850, %s42, 1
        %s852 = smul.addr %s851, 8
        %s853 = scalar_lea.vmem %s0, %s852
        %p854 = scmp.lt.s32.totalorder %s42, 1
        %s855 = scalar_select %p854, %s42, 1
        %s856 = smul.addr %s855, 8
        %s857 = scalar_lea.vmem %s1, %s856
        %v859 = vld [vmem:[%s853] sm:$0xff]
        %v860 = vld [vmem:[%s857] sm:$0xff]
        %v861 = vld [vmem:[%s2] sm:$0xf]
        %v862 = vld [vmem:[%s2 + $0x4] sm:$0xf]
        %v863 = vld [vmem:[%s2 + $0x8] sm:$0xf]
        %v864 = vld [vmem:[%s2 + $0xc] sm:$0xf]
        %v865 = vld [vmem:[%s2 + $0x10] sm:$0xf]
        %v866 = vld [vmem:[%s2 + $0x14] sm:$0xf]
        %v867 = vld [vmem:[%s2 + $0x18] sm:$0xf]
        %v868 = vld [vmem:[%s2 + $0x1c] sm:$0xf]
        %v869 = vld [vmem:[%s2 + $0x20] sm:$0xf]
        %v870 = vld [vmem:[%s2 + $0x24] sm:$0xf]
        %v871 = vld [vmem:[%s2 + $0x28] sm:$0xf]
        %v872 = vld [vmem:[%s2 + $0x2c] sm:$0xf]
        %v873 = vld [vmem:[%s2 + $0x30] sm:$0xf]
        %v874 = vld [vmem:[%s2 + $0x34] sm:$0xf]
        %v875 = vld [vmem:[%s2 + $0x38] sm:$0xf]
        %v876 = vld [vmem:[%s2 + $0x3c] sm:$0xf]
        %v877 = vld [vmem:[%s3] sm:$0xf]
        %v878 = vld [vmem:[%s3 + $0x4] sm:$0xf]
        %v879 = vld [vmem:[%s3 + $0x8] sm:$0xf]
        %v880 = vld [vmem:[%s3 + $0xc] sm:$0xf]
        %v881 = vld [vmem:[%s3 + $0x10] sm:$0xf]
        %v882 = vld [vmem:[%s3 + $0x14] sm:$0xf]
        %v883 = vld [vmem:[%s3 + $0x18] sm:$0xf]
        %v884 = vld [vmem:[%s3 + $0x1c] sm:$0xf]
        %v885 = vld [vmem:[%s3 + $0x20] sm:$0xf]
        %v886 = vld [vmem:[%s3 + $0x24] sm:$0xf]
        %v887 = vld [vmem:[%s3 + $0x28] sm:$0xf]
        %v888 = vld [vmem:[%s3 + $0x2c] sm:$0xf]
        %v889 = vld [vmem:[%s3 + $0x30] sm:$0xf]
        %v890 = vld [vmem:[%s3 + $0x34] sm:$0xf]
        %v891 = vld [vmem:[%s3 + $0x38] sm:$0xf]
        %v892 = vld [vmem:[%s3 + $0x3c] sm:$0xf]
        %v893 = vld [vmem:[%s4] sm:$0xf]
        %v894 = vld [vmem:[%s4 + $0x4] sm:$0xf]
        %v895 = vld [vmem:[%s4 + $0x8] sm:$0xf]
        %v896 = vld [vmem:[%s4 + $0xc] sm:$0xf]
        %v897 = vld [vmem:[%s4 + $0x10] sm:$0xf]
        %v898 = vld [vmem:[%s4 + $0x14] sm:$0xf]
        %v899 = vld [vmem:[%s4 + $0x18] sm:$0xf]
        %v900 = vld [vmem:[%s4 + $0x1c] sm:$0xf]
        %v901 = vld [vmem:[%s4 + $0x20] sm:$0xf]
        %v902 = vld [vmem:[%s4 + $0x24] sm:$0xf]
        %v903 = vld [vmem:[%s4 + $0x28] sm:$0xf]
        %v904 = vld [vmem:[%s4 + $0x2c] sm:$0xf]
        %v905 = vld [vmem:[%s4 + $0x30] sm:$0xf]
        %v906 = vld [vmem:[%s4 + $0x34] sm:$0xf]
        %v907 = vld [vmem:[%s4 + $0x38] sm:$0xf]
        %v908 = vld [vmem:[%s4 + $0x3c] sm:$0xf]
        %v909 = vld [vmem:[%s5] sm:$0x1]
        %v910 = vld [vmem:[%s5 + $0x1] sm:$0x1]
        %v911 = vld [vmem:[%s5 + $0x2] sm:$0x1]
        %v912 = vld [vmem:[%s5 + $0x3] sm:$0x1]
        %v913 = vld [vmem:[%s6] sm:$0x1]
        %v914 = vld [vmem:[%s6 + $0x1] sm:$0x1]
        %v915 = vld [vmem:[%s6 + $0x2] sm:$0x1]
        %v916 = vld [vmem:[%s6 + $0x3] sm:$0x1]
        %v917 = vld [vmem:[%s7] sm:$0x1]
        %v918 = vld [vmem:[%s7 + $0x1] sm:$0x1]
        %v919 = vld [vmem:[%s7 + $0x2] sm:$0x1]
        %v920 = vld [vmem:[%s7 + $0x3] sm:$0x1]
        %v921 = vld [vmem:[%s8] sm:$0xf]
        %v922 = vld [vmem:[%s8 + $0x4] sm:$0xf]
        %v923 = vld [vmem:[%s8 + $0x8] sm:$0xf]
        %v924 = vld [vmem:[%s8 + $0xc] sm:$0xf]
        %v925 = vld [vmem:[%s9] sm:$0x1]
        %v926 = vpack.c.bf16 %v859, %v859
        %v931 = vlaneseq
        %v932 = vshrl.u32 %v931, 7
        %v933 = vsub.s32 0, %v932
        %v934 = vrot.slane %v909, %v933
        %v935 = vlaneseq
        %v936 = vshrl.u32 %v935, 7
        %v937 = vsub.s32 0, %v936
        %v938 = vrot.slane %v910, %v937
        %v939 = vlaneseq
        %v940 = vshrl.u32 %v939, 7
        %v941 = vsub.s32 0, %v940
        %v942 = vrot.slane %v911, %v941
        %v943 = vlaneseq
        %v944 = vshrl.u32 %v943, 7
        %v945 = vsub.s32 0, %v944
        %v946 = vrot.slane %v912, %v945
        %v955 = vunpack.c.l.b16 %v861
        %v956 = vunpack.c.l.b16 %v862
        %v957 = vunpack.c.l.b16 %v863
        %v958 = vunpack.c.l.b16 %v864
        %v959 = vpack.c.b16 %v956, %v955
        %v960 = vpack.c.b16 %v958, %v957
        %vm963 = vcmask 261120
        %v965 = vsel %vm963, %v926, 0
        %967 = vmatprep.subr.bf16.mxu0 0
        %968 = vmatpush1.bf16.msra.mxu0 %v959
        %969 = vmatprep.subr.bf16.mxu0 0
        %970 = vmatpush1.bf16.msra.mxu0 %v960
        %971 = vmatprep.subr.bf16.mxu0 0
        %972 = vmatpush1.bf16.msra.mxu0 0
        %973 = vmatprep.subr.bf16.mxu0 0
        %974 = vmatpush1.bf16.msra.mxu0 0
        %975 = vmatprep.subr.bf16.mxu0 0
        %976 = vmatpush1.bf16.msra.mxu0 0
        %977 = vmatprep.subr.bf16.mxu0 0
        %978 = vmatpush1.bf16.msra.mxu0 0
        %979 = vmatprep.subr.bf16.mxu0 0
        %980 = vmatpush1.bf16.msra.mxu0 0
        %981 = vmatprep.subr.bf16.mxu0 0
        %982 = vmatpush1.bf16.msra.mxu0 0
        %983 = vmatprep.subr.bf16.mxu0 0
        %984 = vmatpush1.bf16.msra.mxu0 0
        %985 = vmatprep.subr.bf16.mxu0 0
        %986 = vmatpush1.bf16.msra.mxu0 0
        %987 = vmatprep.subr.bf16.mxu0 0
        %988 = vmatpush1.bf16.msra.mxu0 0
        %989 = vmatprep.subr.bf16.mxu0 0
        %990 = vmatpush1.bf16.msra.mxu0 0
        %991 = vmatprep.subr.bf16.mxu0 0
        %992 = vmatpush1.bf16.msra.mxu0 0
        %993 = vmatprep.subr.bf16.mxu0 0
        %994 = vmatpush1.bf16.msra.mxu0 0
        %995 = vmatprep.subr.bf16.mxu0 0
        %996 = vmatpush1.bf16.msra.mxu0 0
        %997 = vmatprep.subr.bf16.mxu0 0
        %998 = vmatpush1.bf16.msra.mxu0 0
        %999 = vmatprep.mubr.bf16.mxu0 0
        %1000 = vmatmul.mubr.bf16.gmra.mrb[0].mxu0 %v965
        %v1001 = vpop.f32.mrb[0].mxu0
        %v1002 = vadd.f32 %v934, %v1001
        %v1003 = vpop.f32.mrb[0].mxu0
        %v1004 = vpop.f32.mrb[0].mxu0
        %v1005 = vpop.f32.mrb[0].mxu0
        %1006 = vdwg.mxu0
        %v1011 = vunpack.c.l.b16 %v865
        %v1012 = vunpack.c.l.b16 %v866
        %v1013 = vunpack.c.l.b16 %v867
        %v1014 = vunpack.c.l.b16 %v868
        %v1015 = vpack.c.b16 %v1012, %v1011
        %v1016 = vpack.c.b16 %v1014, %v1013
        %1019 = vmatprep.subr.bf16.mxu0 0
        %1020 = vmatpush1.bf16.msra.mxu0 %v1015
        %1021 = vmatprep.subr.bf16.mxu0 0
        %1022 = vmatpush1.bf16.msra.mxu0 %v1016
        %1023 = vmatprep.subr.bf16.mxu0 0
        %1024 = vmatpush1.bf16.msra.mxu0 0
        %1025 = vmatprep.subr.bf16.mxu0 0
        %1026 = vmatpush1.bf16.msra.mxu0 0
        %1027 = vmatprep.subr.bf16.mxu0 0
        %1028 = vmatpush1.bf16.msra.mxu0 0
        %1029 = vmatprep.subr.bf16.mxu0 0
        %1030 = vmatpush1.bf16.msra.mxu0 0
        %1031 = vmatprep.subr.bf16.mxu0 0
        %1032 = vmatpush1.bf16.msra.mxu0 0
        %1033 = vmatprep.subr.bf16.mxu0 0
        %1034 = vmatpush1.bf16.msra.mxu0 0
        %1035 = vmatprep.subr.bf16.mxu0 0
        %1036 = vmatpush1.bf16.msra.mxu0 0
        %1037 = vmatprep.subr.bf16.mxu0 0
        %1038 = vmatpush1.bf16.msra.mxu0 0
        %1039 = vmatprep.subr.bf16.mxu0 0
        %1040 = vmatpush1.bf16.msra.mxu0 0
        %1041 = vmatprep.subr.bf16.mxu0 0
        %1042 = vmatpush1.bf16.msra.mxu0 0
        %1043 = vmatprep.subr.bf16.mxu0 0
        %1044 = vmatpush1.bf16.msra.mxu0 0
        %1045 = vmatprep.subr.bf16.mxu0 0
        %1046 = vmatpush1.bf16.msra.mxu0 0
        %1047 = vmatprep.subr.bf16.mxu0 0
        %1048 = vmatpush1.bf16.msra.mxu0 0
        %1049 = vmatprep.subr.bf16.mxu0 0
        %1050 = vmatpush1.bf16.msra.mxu0 0
        %1051 = vmatprep.mubr.bf16.mxu0 0
        %1052 = vmatmul.mubr.bf16.gmra.mrb[0].mxu0 %v965
        %v1053 = vpop.f32.mrb[0].mxu0
        %v1054 = vadd.f32 %v938, %v1053
        %v1055 = vpop.f32.mrb[0].mxu0
        %v1056 = vpop.f32.mrb[0].mxu0
        %v1057 = vpop.f32.mrb[0].mxu0
        %1058 = vdwg.mxu0
        %v1063 = vunpack.c.l.b16 %v869
        %v1064 = vunpack.c.l.b16 %v870
        %v1065 = vunpack.c.l.b16 %v871
        %v1066 = vunpack.c.l.b16 %v872
        %v1067 = vpack.c.b16 %v1064, %v1063
        %v1068 = vpack.c.b16 %v1066, %v1065
        %1071 = vmatprep.subr.bf16.mxu0 0
        %1072 = vmatpush1.bf16.msra.mxu0 %v1067
        %1073 = vmatprep.subr.bf16.mxu0 0
        %1074 = vmatpush1.bf16.msra.mxu0 %v1068
        %1075 = vmatprep.subr.bf16.mxu0 0
        %1076 = vmatpush1.bf16.msra.mxu0 0
        %1077 = vmatprep.subr.bf16.mxu0 0
        %1078 = vmatpush1.bf16.msra.mxu0 0
        %1079 = vmatprep.subr.bf16.mxu0 0
        %1080 = vmatpush1.bf16.msra.mxu0 0
        %1081 = vmatprep.subr.bf16.mxu0 0
        %1082 = vmatpush1.bf16.msra.mxu0 0
        %1083 = vmatprep.subr.bf16.mxu0 0
        %1084 = vmatpush1.bf16.msra.mxu0 0
        %1085 = vmatprep.subr.bf16.mxu0 0
        %1086 = vmatpush1.bf16.msra.mxu0 0
        %1087 = vmatprep.subr.bf16.mxu0 0
        %1088 = vmatpush1.bf16.msra.mxu0 0
        %1089 = vmatprep.subr.bf16.mxu0 0
        %1090 = vmatpush1.bf16.msra.mxu0 0
        %1091 = vmatprep.subr.bf16.mxu0 0
        %1092 = vmatpush1.bf16.msra.mxu0 0
        %1093 = vmatprep.subr.bf16.mxu0 0
        %1094 = vmatpush1.bf16.msra.mxu0 0
        %1095 = vmatprep.subr.bf16.mxu0 0
        %1096 = vmatpush1.bf16.msra.mxu0 0
        %1097 = vmatprep.subr.bf16.mxu0 0
        %1098 = vmatpush1.bf16.msra.mxu0 0
        %1099 = vmatprep.subr.bf16.mxu0 0
        %1100 = vmatpush1.bf16.msra.mxu0 0
        %1101 = vmatprep.subr.bf16.mxu0 0
        %1102 = vmatpush1.bf16.msra.mxu0 0
        %1103 = vmatprep.mubr.bf16.mxu0 0
        %1104 = vmatmul.mubr.bf16.gmra.mrb[0].mxu0 %v965
        %v1105 = vpop.f32.mrb[0].mxu0
        %v1106 = vadd.f32 %v942, %v1105
        %v1107 = vpop.f32.mrb[0].mxu0
        %v1108 = vpop.f32.mrb[0].mxu0
        %v1109 = vpop.f32.mrb[0].mxu0
        %1110 = vdwg.mxu0
        %v1115 = vunpack.c.l.b16 %v873
        %v1116 = vunpack.c.l.b16 %v874
        %v1117 = vunpack.c.l.b16 %v875
        %v1118 = vunpack.c.l.b16 %v876
        %v1119 = vpack.c.b16 %v1116, %v1115
        %v1120 = vpack.c.b16 %v1118, %v1117
        %1123 = vmatprep.subr.bf16.mxu0 0
        %1124 = vmatpush1.bf16.msra.mxu0 %v1119
        %1125 = vmatprep.subr.bf16.mxu0 0
        %1126 = vmatpush1.bf16.msra.mxu0 %v1120
        %1127 = vmatprep.subr.bf16.mxu0 0
        %1128 = vmatpush1.bf16.msra.mxu0 0
        %1129 = vmatprep.subr.bf16.mxu0 0
        %1130 = vmatpush1.bf16.msra.mxu0 0
        %1131 = vmatprep.subr.bf16.mxu0 0
        %1132 = vmatpush1.bf16.msra.mxu0 0
        %1133 = vmatprep.subr.bf16.mxu0 0
        %1134 = vmatpush1.bf16.msra.mxu0 0
        %1135 = vmatprep.subr.bf16.mxu0 0
        %1136 = vmatpush1.bf16.msra.mxu0 0
        %1137 = vmatprep.subr.bf16.mxu0 0
        %1138 = vmatpush1.bf16.msra.mxu0 0
        %1139 = vmatprep.subr.bf16.mxu0 0
        %1140 = vmatpush1.bf16.msra.mxu0 0
        %1141 = vmatprep.subr.bf16.mxu0 0
        %1142 = vmatpush1.bf16.msra.mxu0 0
        %1143 = vmatprep.subr.bf16.mxu0 0
        %1144 = vmatpush1.bf16.msra.mxu0 0
        %1145 = vmatprep.subr.bf16.mxu0 0
        %1146 = vmatpush1.bf16.msra.mxu0 0
        %1147 = vmatprep.subr.bf16.mxu0 0
        %1148 = vmatpush1.bf16.msra.mxu0 0
        %1149 = vmatprep.subr.bf16.mxu0 0
        %1150 = vmatpush1.bf16.msra.mxu0 0
        %1151 = vmatprep.subr.bf16.mxu0 0
        %1152 = vmatpush1.bf16.msra.mxu0 0
        %1153 = vmatprep.subr.bf16.mxu0 0
        %1154 = vmatpush1.bf16.msra.mxu0 0
        %1155 = vmatprep.mubr.bf16.mxu0 0
        %1156 = vmatmul.mubr.bf16.gmra.mrb[0].mxu0 %v965
        %v1157 = vpop.f32.mrb[0].mxu0
        %v1158 = vadd.f32 %v946, %v1157
        %v1159 = vpop.f32.mrb[0].mxu0
        %v1160 = vpop.f32.mrb[0].mxu0
        %v1161 = vpop.f32.mrb[0].mxu0
        %1162 = vdwg.mxu0
        %v1167 = vlaneseq
        %v1168 = vshrl.u32 %v1167, 7
        %v1169 = vsub.s32 0, %v1168
        %v1170 = vrot.slane %v913, %v1169
        %v1171 = vlaneseq
        %v1172 = vshrl.u32 %v1171, 7
        %v1173 = vsub.s32 0, %v1172
        %v1174 = vrot.slane %v914, %v1173
        %v1175 = vlaneseq
        %v1176 = vshrl.u32 %v1175, 7
        %v1177 = vsub.s32 0, %v1176
        %v1178 = vrot.slane %v915, %v1177
        %v1179 = vlaneseq
        %v1180 = vshrl.u32 %v1179, 7
        %v1181 = vsub.s32 0, %v1180
        %v1182 = vrot.slane %v916, %v1181
        %v1191 = vunpack.c.l.b16 %v877
        %v1192 = vunpack.c.l.b16 %v878
        %v1193 = vunpack.c.l.b16 %v879
        %v1194 = vunpack.c.l.b16 %v880
        %v1195 = vpack.c.b16 %v1192, %v1191
        %v1196 = vpack.c.b16 %v1194, %v1193
        %1199 = vmatprep.subr.bf16.mxu0 0
        %1200 = vmatpush1.bf16.msra.mxu0 %v1195
        %1201 = vmatprep.subr.bf16.mxu0 0
        %1202 = vmatpush1.bf16.msra.mxu0 %v1196
        %1203 = vmatprep.subr.bf16.mxu0 0
        %1204 = vmatpush1.bf16.msra.mxu0 0
        %1205 = vmatprep.subr.bf16.mxu0 0
        %1206 = vmatpush1.bf16.msra.mxu0 0
        %1207 = vmatprep.subr.bf16.mxu0 0
        %1208 = vmatpush1.bf16.msra.mxu0 0
        %1209 = vmatprep.subr.bf16.mxu0 0
        %1210 = vmatpush1.bf16.msra.mxu0 0
        %1211 = vmatprep.subr.bf16.mxu0 0
        %1212 = vmatpush1.bf16.msra.mxu0 0
        %1213 = vmatprep.subr.bf16.mxu0 0
        %1214 = vmatpush1.bf16.msra.mxu0 0
        %1215 = vmatprep.subr.bf16.mxu0 0
        %1216 = vmatpush1.bf16.msra.mxu0 0
        %1217 = vmatprep.subr.bf16.mxu0 0
        %1218 = vmatpush1.bf16.msra.mxu0 0
        %1219 = vmatprep.subr.bf16.mxu0 0
        %1220 = vmatpush1.bf16.msra.mxu0 0
        %1221 = vmatprep.subr.bf16.mxu0 0
        %1222 = vmatpush1.bf16.msra.mxu0 0
        %1223 = vmatprep.subr.bf16.mxu0 0
        %1224 = vmatpush1.bf16.msra.mxu0 0
        %1225 = vmatprep.subr.bf16.mxu0 0
        %1226 = vmatpush1.bf16.msra.mxu0 0
        %1227 = vmatprep.subr.bf16.mxu0 0
        %1228 = vmatpush1.bf16.msra.mxu0 0
        %1229 = vmatprep.subr.bf16.mxu0 0
        %1230 = vmatpush1.bf16.msra.mxu0 0
        %1231 = vmatprep.mubr.bf16.mxu0 0
        %1232 = vmatmul.mubr.bf16.gmra.mrb[0].mxu0 %v965
        %v1233 = vpop.f32.mrb[0].mxu0
        %v1234 = vadd.f32 %v1170, %v1233
        %v1235 = vpop.f32.mrb[0].mxu0
        %v1236 = vpop.f32.mrb[0].mxu0
        %v1237 = vpop.f32.mrb[0].mxu0
        %1238 = vdwg.mxu0
        %v1243 = vunpack.c.l.b16 %v881
        %v1244 = vunpack.c.l.b16 %v882
        %v1245 = vunpack.c.l.b16 %v883
        %v1246 = vunpack.c.l.b16 %v884
        %v1247 = vpack.c.b16 %v1244, %v1243
        %v1248 = vpack.c.b16 %v1246, %v1245
        %1251 = vmatprep.subr.bf16.mxu0 0
        %1252 = vmatpush1.bf16.msra.mxu0 %v1247
        %1253 = vmatprep.subr.bf16.mxu0 0
        %1254 = vmatpush1.bf16.msra.mxu0 %v1248
        %1255 = vmatprep.subr.bf16.mxu0 0
        %1256 = vmatpush1.bf16.msra.mxu0 0
        %1257 = vmatprep.subr.bf16.mxu0 0
        %1258 = vmatpush1.bf16.msra.mxu0 0
        %1259 = vmatprep.subr.bf16.mxu0 0
        %1260 = vmatpush1.bf16.msra.mxu0 0
        %1261 = vmatprep.subr.bf16.mxu0 0
        %1262 = vmatpush1.bf16.msra.mxu0 0
        %1263 = vmatprep.subr.bf16.mxu0 0
        %1264 = vmatpush1.bf16.msra.mxu0 0
        %1265 = vmatprep.subr.bf16.mxu0 0
        %1266 = vmatpush1.bf16.msra.mxu0 0
        %1267 = vmatprep.subr.bf16.mxu0 0
        %1268 = vmatpush1.bf16.msra.mxu0 0
        %1269 = vmatprep.subr.bf16.mxu0 0
        %1270 = vmatpush1.bf16.msra.mxu0 0
        %1271 = vmatprep.subr.bf16.mxu0 0
        %1272 = vmatpush1.bf16.msra.mxu0 0
        %1273 = vmatprep.subr.bf16.mxu0 0
        %1274 = vmatpush1.bf16.msra.mxu0 0
        %1275 = vmatprep.subr.bf16.mxu0 0
        %1276 = vmatpush1.bf16.msra.mxu0 0
        %1277 = vmatprep.subr.bf16.mxu0 0
        %1278 = vmatpush1.bf16.msra.mxu0 0
        %1279 = vmatprep.subr.bf16.mxu0 0
        %1280 = vmatpush1.bf16.msra.mxu0 0
        %1281 = vmatprep.subr.bf16.mxu0 0
        %1282 = vmatpush1.bf16.msra.mxu0 0
        %1283 = vmatprep.mubr.bf16.mxu0 0
        %1284 = vmatmul.mubr.bf16.gmra.mrb[0].mxu0 %v965
        %v1285 = vpop.f32.mrb[0].mxu0
        %v1286 = vadd.f32 %v1174, %v1285
        %v1287 = vpop.f32.mrb[0].mxu0
        %v1288 = vpop.f32.mrb[0].mxu0
        %v1289 = vpop.f32.mrb[0].mxu0
        %1290 = vdwg.mxu0
        %v1295 = vunpack.c.l.b16 %v885
        %v1296 = vunpack.c.l.b16 %v886
        %v1297 = vunpack.c.l.b16 %v887
        %v1298 = vunpack.c.l.b16 %v888
        %v1299 = vpack.c.b16 %v1296, %v1295
        %v1300 = vpack.c.b16 %v1298, %v1297
        %1303 = vmatprep.subr.bf16.mxu0 0
        %1304 = vmatpush1.bf16.msra.mxu0 %v1299
        %1305 = vmatprep.subr.bf16.mxu0 0
        %1306 = vmatpush1.bf16.msra.mxu0 %v1300
        %1307 = vmatprep.subr.bf16.mxu0 0
        %1308 = vmatpush1.bf16.msra.mxu0 0
        %1309 = vmatprep.subr.bf16.mxu0 0
        %1310 = vmatpush1.bf16.msra.mxu0 0
        %1311 = vmatprep.subr.bf16.mxu0 0
        %1312 = vmatpush1.bf16.msra.mxu0 0
        %1313 = vmatprep.subr.bf16.mxu0 0
        %1314 = vmatpush1.bf16.msra.mxu0 0
        %1315 = vmatprep.subr.bf16.mxu0 0
        %1316 = vmatpush1.bf16.msra.mxu0 0
        %1317 = vmatprep.subr.bf16.mxu0 0
        %1318 = vmatpush1.bf16.msra.mxu0 0
        %1319 = vmatprep.subr.bf16.mxu0 0
        %1320 = vmatpush1.bf16.msra.mxu0 0
        %1321 = vmatprep.subr.bf16.mxu0 0
        %1322 = vmatpush1.bf16.msra.mxu0 0
        %1323 = vmatprep.subr.bf16.mxu0 0
        %1324 = vmatpush1.bf16.msra.mxu0 0
        %1325 = vmatprep.subr.bf16.mxu0 0
        %1326 = vmatpush1.bf16.msra.mxu0 0
        %1327 = vmatprep.subr.bf16.mxu0 0
        %1328 = vmatpush1.bf16.msra.mxu0 0
        %1329 = vmatprep.subr.bf16.mxu0 0
        %1330 = vmatpush1.bf16.msra.mxu0 0
        %1331 = vmatprep.subr.bf16.mxu0 0
        %1332 = vmatpush1.bf16.msra.mxu0 0
        %1333 = vmatprep.subr.bf16.mxu0 0
        %1334 = vmatpush1.bf16.msra.mxu0 0
        %1335 = vmatprep.mubr.bf16.mxu0 0
        %1336 = vmatmul.mubr.bf16.gmra.mrb[0].mxu0 %v965
        %v1337 = vpop.f32.mrb[0].mxu0
        %v1338 = vadd.f32 %v1178, %v1337
        %v1339 = vpop.f32.mrb[0].mxu0
        %v1340 = vpop.f32.mrb[0].mxu0
        %v1341 = vpop.f32.mrb[0].mxu0
        %1342 = vdwg.mxu0
        %v1347 = vunpack.c.l.b16 %v889
        %v1348 = vunpack.c.l.b16 %v890
        %v1349 = vunpack.c.l.b16 %v891
        %v1350 = vunpack.c.l.b16 %v892
        %v1351 = vpack.c.b16 %v1348, %v1347
        %v1352 = vpack.c.b16 %v1350, %v1349
        %1355 = vmatprep.subr.bf16.mxu0 0
        %1356 = vmatpush1.bf16.msra.mxu0 %v1351
        %1357 = vmatprep.subr.bf16.mxu0 0
        %1358 = vmatpush1.bf16.msra.mxu0 %v1352
        %1359 = vmatprep.subr.bf16.mxu0 0
        %1360 = vmatpush1.bf16.msra.mxu0 0
        %1361 = vmatprep.subr.bf16.mxu0 0
        %1362 = vmatpush1.bf16.msra.mxu0 0
        %1363 = vmatprep.subr.bf16.mxu0 0
        %1364 = vmatpush1.bf16.msra.mxu0 0
        %1365 = vmatprep.subr.bf16.mxu0 0
        %1366 = vmatpush1.bf16.msra.mxu0 0
        %1367 = vmatprep.subr.bf16.mxu0 0
        %1368 = vmatpush1.bf16.msra.mxu0 0
        %1369 = vmatprep.subr.bf16.mxu0 0
        %1370 = vmatpush1.bf16.msra.mxu0 0
        %1371 = vmatprep.subr.bf16.mxu0 0
        %1372 = vmatpush1.bf16.msra.mxu0 0
        %1373 = vmatprep.subr.bf16.mxu0 0
        %1374 = vmatpush1.bf16.msra.mxu0 0
        %1375 = vmatprep.subr.bf16.mxu0 0
        %1376 = vmatpush1.bf16.msra.mxu0 0
        %1377 = vmatprep.subr.bf16.mxu0 0
        %1378 = vmatpush1.bf16.msra.mxu0 0
        %1379 = vmatprep.subr.bf16.mxu0 0
        %1380 = vmatpush1.bf16.msra.mxu0 0
        %1381 = vmatprep.subr.bf16.mxu0 0
        %1382 = vmatpush1.bf16.msra.mxu0 0
        %1383 = vmatprep.subr.bf16.mxu0 0
        %1384 = vmatpush1.bf16.msra.mxu0 0
        %1385 = vmatprep.subr.bf16.mxu0 0
        %1386 = vmatpush1.bf16.msra.mxu0 0
        %1387 = vmatprep.mubr.bf16.mxu0 0
        %1388 = vmatmul.mubr.bf16.gmra.mrb[0].mxu0 %v965
        %v1389 = vpop.f32.mrb[0].mxu0
        %v1390 = vadd.f32 %v1182, %v1389
        %v1391 = vpop.f32.mrb[0].mxu0
        %v1392 = vpop.f32.mrb[0].mxu0
        %v1393 = vpop.f32.mrb[0].mxu0
        %1394 = vdwg.mxu0
        %v1399 = vlaneseq
        %v1400 = vshrl.u32 %v1399, 7
        %v1401 = vsub.s32 0, %v1400
        %v1402 = vrot.slane %v917, %v1401
        %v1403 = vlaneseq
        %v1404 = vshrl.u32 %v1403, 7
        %v1405 = vsub.s32 0, %v1404
        %v1406 = vrot.slane %v918, %v1405
        %v1407 = vlaneseq
        %v1408 = vshrl.u32 %v1407, 7
        %v1409 = vsub.s32 0, %v1408
        %v1410 = vrot.slane %v919, %v1409
        %v1411 = vlaneseq
        %v1412 = vshrl.u32 %v1411, 7
        %v1413 = vsub.s32 0, %v1412
        %v1414 = vrot.slane %v920, %v1413
        %v1423 = vunpack.c.l.b16 %v893
        %v1424 = vunpack.c.l.b16 %v894
        %v1425 = vunpack.c.l.b16 %v895
        %v1426 = vunpack.c.l.b16 %v896
        %v1427 = vpack.c.b16 %v1424, %v1423
        %v1428 = vpack.c.b16 %v1426, %v1425
        %1431 = vmatprep.subr.bf16.mxu0 0
        %1432 = vmatpush1.bf16.msra.mxu0 %v1427
        %1433 = vmatprep.subr.bf16.mxu0 0
        %1434 = vmatpush1.bf16.msra.mxu0 %v1428
        %1435 = vmatprep.subr.bf16.mxu0 0
        %1436 = vmatpush1.bf16.msra.mxu0 0
        %1437 = vmatprep.subr.bf16.mxu0 0
        %1438 = vmatpush1.bf16.msra.mxu0 0
        %1439 = vmatprep.subr.bf16.mxu0 0
        %1440 = vmatpush1.bf16.msra.mxu0 0
        %1441 = vmatprep.subr.bf16.mxu0 0
        %1442 = vmatpush1.bf16.msra.mxu0 0
        %1443 = vmatprep.subr.bf16.mxu0 0
        %1444 = vmatpush1.bf16.msra.mxu0 0
        %1445 = vmatprep.subr.bf16.mxu0 0
        %1446 = vmatpush1.bf16.msra.mxu0 0
        %1447 = vmatprep.subr.bf16.mxu0 0
        %1448 = vmatpush1.bf16.msra.mxu0 0
        %1449 = vmatprep.subr.bf16.mxu0 0
        %1450 = vmatpush1.bf16.msra.mxu0 0
        %1451 = vmatprep.subr.bf16.mxu0 0
        %1452 = vmatpush1.bf16.msra.mxu0 0
        %1453 = vmatprep.subr.bf16.mxu0 0
        %1454 = vmatpush1.bf16.msra.mxu0 0
        %1455 = vmatprep.subr.bf16.mxu0 0
        %1456 = vmatpush1.bf16.msra.mxu0 0
        %1457 = vmatprep.subr.bf16.mxu0 0
        %1458 = vmatpush1.bf16.msra.mxu0 0
        %1459 = vmatprep.subr.bf16.mxu0 0
        %1460 = vmatpush1.bf16.msra.mxu0 0
        %1461 = vmatprep.subr.bf16.mxu0 0
        %1462 = vmatpush1.bf16.msra.mxu0 0
        %1463 = vmatprep.mubr.bf16.mxu0 0
        %1464 = vmatmul.mubr.bf16.gmra.mrb[0].mxu0 %v965
        %v1465 = vpop.f32.mrb[0].mxu0
        %v1466 = vadd.f32 %v1402, %v1465
        %v1467 = vpop.f32.mrb[0].mxu0
        %v1468 = vpop.f32.mrb[0].mxu0
        %v1469 = vpop.f32.mrb[0].mxu0
        %1470 = vdwg.mxu0
        %v1475 = vunpack.c.l.b16 %v897
        %v1476 = vunpack.c.l.b16 %v898
        %v1477 = vunpack.c.l.b16 %v899
        %v1478 = vunpack.c.l.b16 %v900
        %v1479 = vpack.c.b16 %v1476, %v1475
        %v1480 = vpack.c.b16 %v1478, %v1477
        %1483 = vmatprep.subr.bf16.mxu0 0
        %1484 = vmatpush1.bf16.msra.mxu0 %v1479
        %1485 = vmatprep.subr.bf16.mxu0 0
        %1486 = vmatpush1.bf16.msra.mxu0 %v1480
        %1487 = vmatprep.subr.bf16.mxu0 0
        %1488 = vmatpush1.bf16.msra.mxu0 0
        %1489 = vmatprep.subr.bf16.mxu0 0
        %1490 = vmatpush1.bf16.msra.mxu0 0
        %1491 = vmatprep.subr.bf16.mxu0 0
        %1492 = vmatpush1.bf16.msra.mxu0 0
        %1493 = vmatprep.subr.bf16.mxu0 0
        %1494 = vmatpush1.bf16.msra.mxu0 0
        %1495 = vmatprep.subr.bf16.mxu0 0
        %1496 = vmatpush1.bf16.msra.mxu0 0
        %1497 = vmatprep.subr.bf16.mxu0 0
        %1498 = vmatpush1.bf16.msra.mxu0 0
        %1499 = vmatprep.subr.bf16.mxu0 0
        %1500 = vmatpush1.bf16.msra.mxu0 0
        %1501 = vmatprep.subr.bf16.mxu0 0
        %1502 = vmatpush1.bf16.msra.mxu0 0
        %1503 = vmatprep.subr.bf16.mxu0 0
        %1504 = vmatpush1.bf16.msra.mxu0 0
        %1505 = vmatprep.subr.bf16.mxu0 0
        %1506 = vmatpush1.bf16.msra.mxu0 0
        %1507 = vmatprep.subr.bf16.mxu0 0
        %1508 = vmatpush1.bf16.msra.mxu0 0
        %1509 = vmatprep.subr.bf16.mxu0 0
        %1510 = vmatpush1.bf16.msra.mxu0 0
        %1511 = vmatprep.subr.bf16.mxu0 0
        %1512 = vmatpush1.bf16.msra.mxu0 0
        %1513 = vmatprep.subr.bf16.mxu0 0
        %1514 = vmatpush1.bf16.msra.mxu0 0
        %1515 = vmatprep.mubr.bf16.mxu0 0
        %1516 = vmatmul.mubr.bf16.gmra.mrb[0].mxu0 %v965
        %v1517 = vpop.f32.mrb[0].mxu0
        %v1518 = vadd.f32 %v1406, %v1517
        %v1519 = vpop.f32.mrb[0].mxu0
        %v1520 = vpop.f32.mrb[0].mxu0
        %v1521 = vpop.f32.mrb[0].mxu0
        %1522 = vdwg.mxu0
        %v1527 = vunpack.c.l.b16 %v901
        %v1528 = vunpack.c.l.b16 %v902
        %v1529 = vunpack.c.l.b16 %v903
        %v1530 = vunpack.c.l.b16 %v904
        %v1531 = vpack.c.b16 %v1528, %v1527
        %v1532 = vpack.c.b16 %v1530, %v1529
        %1535 = vmatprep.subr.bf16.mxu0 0
        %1536 = vmatpush1.bf16.msra.mxu0 %v1531
        %1537 = vmatprep.subr.bf16.mxu0 0
        %1538 = vmatpush1.bf16.msra.mxu0 %v1532
        %1539 = vmatprep.subr.bf16.mxu0 0
        %1540 = vmatpush1.bf16.msra.mxu0 0
        %1541 = vmatprep.subr.bf16.mxu0 0
        %1542 = vmatpush1.bf16.msra.mxu0 0
        %1543 = vmatprep.subr.bf16.mxu0 0
        %1544 = vmatpush1.bf16.msra.mxu0 0
        %1545 = vmatprep.subr.bf16.mxu0 0
        %1546 = vmatpush1.bf16.msra.mxu0 0
        %1547 = vmatprep.subr.bf16.mxu0 0
        %1548 = vmatpush1.bf16.msra.mxu0 0
        %1549 = vmatprep.subr.bf16.mxu0 0
        %1550 = vmatpush1.bf16.msra.mxu0 0
        %1551 = vmatprep.subr.bf16.mxu0 0
        %1552 = vmatpush1.bf16.msra.mxu0 0
        %1553 = vmatprep.subr.bf16.mxu0 0
        %1554 = vmatpush1.bf16.msra.mxu0 0
        %1555 = vmatprep.subr.bf16.mxu0 0
        %1556 = vmatpush1.bf16.msra.mxu0 0
        %1557 = vmatprep.subr.bf16.mxu0 0
        %1558 = vmatpush1.bf16.msra.mxu0 0
        %1559 = vmatprep.subr.bf16.mxu0 0
        %1560 = vmatpush1.bf16.msra.mxu0 0
        %1561 = vmatprep.subr.bf16.mxu0 0
        %1562 = vmatpush1.bf16.msra.mxu0 0
        %1563 = vmatprep.subr.bf16.mxu0 0
        %1564 = vmatpush1.bf16.msra.mxu0 0
        %1565 = vmatprep.subr.bf16.mxu0 0
        %1566 = vmatpush1.bf16.msra.mxu0 0
        %1567 = vmatprep.mubr.bf16.mxu0 0
        %1568 = vmatmul.mubr.bf16.gmra.mrb[0].mxu0 %v965
        %v1569 = vpop.f32.mrb[0].mxu0
        %v1570 = vadd.f32 %v1410, %v1569
        %v1571 = vpop.f32.mrb[0].mxu0
        %v1572 = vpop.f32.mrb[0].mxu0
        %v1573 = vpop.f32.mrb[0].mxu0
        %1574 = vdwg.mxu0
        %v1579 = vunpack.c.l.b16 %v905
        %v1580 = vunpack.c.l.b16 %v906
        %v1581 = vunpack.c.l.b16 %v907
        %v1582 = vunpack.c.l.b16 %v908
        %v1583 = vpack.c.b16 %v1580, %v1579
        %v1584 = vpack.c.b16 %v1582, %v1581
        %1587 = vmatprep.subr.bf16.mxu0 0
        %1588 = vmatpush1.bf16.msra.mxu0 %v1583
        %1589 = vmatprep.subr.bf16.mxu0 0
        %1590 = vmatpush1.bf16.msra.mxu0 %v1584
        %1591 = vmatprep.subr.bf16.mxu0 0
        %1592 = vmatpush1.bf16.msra.mxu0 0
        %1593 = vmatprep.subr.bf16.mxu0 0
        %1594 = vmatpush1.bf16.msra.mxu0 0
        %1595 = vmatprep.subr.bf16.mxu0 0
        %1596 = vmatpush1.bf16.msra.mxu0 0
        %1597 = vmatprep.subr.bf16.mxu0 0
        %1598 = vmatpush1.bf16.msra.mxu0 0
        %1599 = vmatprep.subr.bf16.mxu0 0
        %1600 = vmatpush1.bf16.msra.mxu0 0
        %1601 = vmatprep.subr.bf16.mxu0 0
        %1602 = vmatpush1.bf16.msra.mxu0 0
        %1603 = vmatprep.subr.bf16.mxu0 0
        %1604 = vmatpush1.bf16.msra.mxu0 0
        %1605 = vmatprep.subr.bf16.mxu0 0
        %1606 = vmatpush1.bf16.msra.mxu0 0
        %1607 = vmatprep.subr.bf16.mxu0 0
        %1608 = vmatpush1.bf16.msra.mxu0 0
        %1609 = vmatprep.subr.bf16.mxu0 0
        %1610 = vmatpush1.bf16.msra.mxu0 0
        %1611 = vmatprep.subr.bf16.mxu0 0
        %1612 = vmatpush1.bf16.msra.mxu0 0
        %1613 = vmatprep.subr.bf16.mxu0 0
        %1614 = vmatpush1.bf16.msra.mxu0 0
        %1615 = vmatprep.subr.bf16.mxu0 0
        %1616 = vmatpush1.bf16.msra.mxu0 0
        %1617 = vmatprep.subr.bf16.mxu0 0
        %1618 = vmatpush1.bf16.msra.mxu0 0
        %1619 = vmatprep.mubr.bf16.mxu0 0
        %1620 = vmatmul.mubr.bf16.gmra.mrb[0].mxu0 %v965
        %v1621 = vpop.f32.mrb[0].mxu0
        %v1622 = vadd.f32 %v1414, %v1621
        %v1623 = vpop.f32.mrb[0].mxu0
        %v1624 = vpop.f32.mrb[0].mxu0
        %v1625 = vpop.f32.mrb[0].mxu0
        %1626 = vdwg.mxu0
        %v1627 = vpack.c.bf16 %v1002, %v1002
        %v1628 = vpack.c.bf16 %v1054, %v1054
        %v1629 = vpack.c.bf16 %v1106, %v1106
        %v1630 = vpack.c.bf16 %v1158, %v1158
        %v1631 = vpack.c.bf16 %v1234, %v1234
        %v1632 = vpack.c.bf16 %v1286, %v1286
        %v1633 = vpack.c.bf16 %v1338, %v1338
        %v1634 = vpack.c.bf16 %v1390, %v1390
        %vm1635 = vcmask 64512
        %v1637 = vsel %vm1635, %v1627, 0
        %v1640 = vsel %vm1635, %v1631, 0
        %1642 = vmatprep.subr.bf16.mxu0 0
        %1643 = vmatpush1.bf16.xpose.msra.mxu0 %v1640
        %1644 = vmatprep.subr.bf16.mxu0 0
        %1645 = vmatpush1.bf16.xpose.msra.mxu0 0
        %1646 = vmatprep.subr.bf16.mxu0 0
        %1647 = vmatpush1.bf16.xpose.msra.mxu0 0
        %1648 = vmatprep.subr.bf16.mxu0 0
        %1649 = vmatpush1.bf16.xpose.msra.mxu0 0
        %1650 = vmatprep.subr.bf16.mxu0 0
        %1651 = vmatpush1.bf16.xpose.msra.mxu0 0
        %1652 = vmatprep.subr.bf16.mxu0 0
        %1653 = vmatpush1.bf16.xpose.msra.mxu0 0
        %1654 = vmatprep.subr.bf16.mxu0 0
        %1655 = vmatpush1.bf16.xpose.msra.mxu0 0
        %1656 = vmatprep.subr.bf16.mxu0 0
        %1657 = vmatpush1.bf16.xpose.msra.mxu0 0
        %1658 = vmatprep.subr.bf16.mxu0 0
        %1659 = vmatpush1.bf16.xpose.msra.mxu0 0
        %1660 = vmatprep.subr.bf16.mxu0 0
        %1661 = vmatpush1.bf16.xpose.msra.mxu0 0
        %1662 = vmatprep.subr.bf16.mxu0 0
        %1663 = vmatpush1.bf16.xpose.msra.mxu0 0
        %1664 = vmatprep.subr.bf16.mxu0 0
        %1665 = vmatpush1.bf16.xpose.msra.mxu0 0
        %1666 = vmatprep.subr.bf16.mxu0 0
        %1667 = vmatpush1.bf16.xpose.msra.mxu0 0
        %1668 = vmatprep.subr.bf16.mxu0 0
        %1669 = vmatpush1.bf16.xpose.msra.mxu0 0
        %1670 = vmatprep.subr.bf16.mxu0 0
        %1671 = vmatpush1.bf16.xpose.msra.mxu0 0
        %1672 = vmatprep.subr.bf16.mxu0 0
        %1673 = vmatpush1.bf16.xpose.msra.mxu0 0
        %1674 = vmatprep.mubr.bf16.mxu0 0
        %1675 = vmatmul.mubr.bf16.gmra.mrb[0].mxu0 %v1637
        %v1676 = vpop.f32.mrb[0].mxu0
        %v1677 = vadd.f32 0.0, %v1676
        %v1678 = vpop.f32.mrb[0].mxu0
        %v1679 = vpop.f32.mrb[0].mxu0
        %v1680 = vpop.f32.mrb[0].mxu0
        %1681 = vdwg.mxu0
        %v1683 = vsel %vm1635, %v1628, 0
        %v1686 = vsel %vm1635, %v1632, 0
        %1688 = vmatprep.subr.bf16.mxu0 0
        %1689 = vmatpush1.bf16.xpose.msra.mxu0 %v1686
        %1690 = vmatprep.subr.bf16.mxu0 0
        %1691 = vmatpush1.bf16.xpose.msra.mxu0 0
        %1692 = vmatprep.subr.bf16.mxu0 0
        %1693 = vmatpush1.bf16.xpose.msra.mxu0 0
        %1694 = vmatprep.subr.bf16.mxu0 0
        %1695 = vmatpush1.bf16.xpose.msra.mxu0 0
        %1696 = vmatprep.subr.bf16.mxu0 0
        %1697 = vmatpush1.bf16.xpose.msra.mxu0 0
        %1698 = vmatprep.subr.bf16.mxu0 0
        %1699 = vmatpush1.bf16.xpose.msra.mxu0 0
        %1700 = vmatprep.subr.bf16.mxu0 0
        %1701 = vmatpush1.bf16.xpose.msra.mxu0 0
        %1702 = vmatprep.subr.bf16.mxu0 0
        %1703 = vmatpush1.bf16.xpose.msra.mxu0 0
        %1704 = vmatprep.subr.bf16.mxu0 0
        %1705 = vmatpush1.bf16.xpose.msra.mxu0 0
        %1706 = vmatprep.subr.bf16.mxu0 0
        %1707 = vmatpush1.bf16.xpose.msra.mxu0 0
        %1708 = vmatprep.subr.bf16.mxu0 0
        %1709 = vmatpush1.bf16.xpose.msra.mxu0 0
        %1710 = vmatprep.subr.bf16.mxu0 0
        %1711 = vmatpush1.bf16.xpose.msra.mxu0 0
        %1712 = vmatprep.subr.bf16.mxu0 0
        %1713 = vmatpush1.bf16.xpose.msra.mxu0 0
        %1714 = vmatprep.subr.bf16.mxu0 0
        %1715 = vmatpush1.bf16.xpose.msra.mxu0 0
        %1716 = vmatprep.subr.bf16.mxu0 0
        %1717 = vmatpush1.bf16.xpose.msra.mxu0 0
        %1718 = vmatprep.subr.bf16.mxu0 0
        %1719 = vmatpush1.bf16.xpose.msra.mxu0 0
        %1720 = vmatprep.mubr.bf16.mxu0 0
        %1721 = vmatmul.mubr.bf16.gmra.mrb[0].mxu0 %v1683
        %v1722 = vpop.f32.mrb[0].mxu0
        %v1723 = vadd.f32 0.0, %v1722
        %v1724 = vpop.f32.mrb[0].mxu0
        %v1725 = vpop.f32.mrb[0].mxu0
        %v1726 = vpop.f32.mrb[0].mxu0
        %1727 = vdwg.mxu0
        %v1729 = vsel %vm1635, %v1629, 0
        %v1732 = vsel %vm1635, %v1633, 0
        %1734 = vmatprep.subr.bf16.mxu0 0
        %1735 = vmatpush1.bf16.xpose.msra.mxu0 %v1732
        %1736 = vmatprep.subr.bf16.mxu0 0
        %1737 = vmatpush1.bf16.xpose.msra.mxu0 0
        %1738 = vmatprep.subr.bf16.mxu0 0
        %1739 = vmatpush1.bf16.xpose.msra.mxu0 0
        %1740 = vmatprep.subr.bf16.mxu0 0
        %1741 = vmatpush1.bf16.xpose.msra.mxu0 0
        %1742 = vmatprep.subr.bf16.mxu0 0
        %1743 = vmatpush1.bf16.xpose.msra.mxu0 0
        %1744 = vmatprep.subr.bf16.mxu0 0
        %1745 = vmatpush1.bf16.xpose.msra.mxu0 0
        %1746 = vmatprep.subr.bf16.mxu0 0
        %1747 = vmatpush1.bf16.xpose.msra.mxu0 0
        %1748 = vmatprep.subr.bf16.mxu0 0
        %1749 = vmatpush1.bf16.xpose.msra.mxu0 0
        %1750 = vmatprep.subr.bf16.mxu0 0
        %1751 = vmatpush1.bf16.xpose.msra.mxu0 0
        %1752 = vmatprep.subr.bf16.mxu0 0
        %1753 = vmatpush1.bf16.xpose.msra.mxu0 0
        %1754 = vmatprep.subr.bf16.mxu0 0
        %1755 = vmatpush1.bf16.xpose.msra.mxu0 0
        %1756 = vmatprep.subr.bf16.mxu0 0
        %1757 = vmatpush1.bf16.xpose.msra.mxu0 0
        %1758 = vmatprep.subr.bf16.mxu0 0
        %1759 = vmatpush1.bf16.xpose.msra.mxu0 0
        %1760 = vmatprep.subr.bf16.mxu0 0
        %1761 = vmatpush1.bf16.xpose.msra.mxu0 0
        %1762 = vmatprep.subr.bf16.mxu0 0
        %1763 = vmatpush1.bf16.xpose.msra.mxu0 0
        %1764 = vmatprep.subr.bf16.mxu0 0
        %1765 = vmatpush1.bf16.xpose.msra.mxu0 0
        %1766 = vmatprep.mubr.bf16.mxu0 0
        %1767 = vmatmul.mubr.bf16.gmra.mrb[0].mxu0 %v1729
        %v1768 = vpop.f32.mrb[0].mxu0
        %v1769 = vadd.f32 0.0, %v1768
        %v1770 = vpop.f32.mrb[0].mxu0
        %v1771 = vpop.f32.mrb[0].mxu0
        %v1772 = vpop.f32.mrb[0].mxu0
        %1773 = vdwg.mxu0
        %v1775 = vsel %vm1635, %v1630, 0
        %v1778 = vsel %vm1635, %v1634, 0
        %1780 = vmatprep.subr.bf16.mxu0 0
        %1781 = vmatpush1.bf16.xpose.msra.mxu0 %v1778
        %1782 = vmatprep.subr.bf16.mxu0 0
        %1783 = vmatpush1.bf16.xpose.msra.mxu0 0
        %1784 = vmatprep.subr.bf16.mxu0 0
        %1785 = vmatpush1.bf16.xpose.msra.mxu0 0
        %1786 = vmatprep.subr.bf16.mxu0 0
        %1787 = vmatpush1.bf16.xpose.msra.mxu0 0
        %1788 = vmatprep.subr.bf16.mxu0 0
        %1789 = vmatpush1.bf16.xpose.msra.mxu0 0
        %1790 = vmatprep.subr.bf16.mxu0 0
        %1791 = vmatpush1.bf16.xpose.msra.mxu0 0
        %1792 = vmatprep.subr.bf16.mxu0 0
        %1793 = vmatpush1.bf16.xpose.msra.mxu0 0
        %1794 = vmatprep.subr.bf16.mxu0 0
        %1795 = vmatpush1.bf16.xpose.msra.mxu0 0
        %1796 = vmatprep.subr.bf16.mxu0 0
        %1797 = vmatpush1.bf16.xpose.msra.mxu0 0
        %1798 = vmatprep.subr.bf16.mxu0 0
        %1799 = vmatpush1.bf16.xpose.msra.mxu0 0
        %1800 = vmatprep.subr.bf16.mxu0 0
        %1801 = vmatpush1.bf16.xpose.msra.mxu0 0
        %1802 = vmatprep.subr.bf16.mxu0 0
        %1803 = vmatpush1.bf16.xpose.msra.mxu0 0
        %1804 = vmatprep.subr.bf16.mxu0 0
        %1805 = vmatpush1.bf16.xpose.msra.mxu0 0
        %1806 = vmatprep.subr.bf16.mxu0 0
        %1807 = vmatpush1.bf16.xpose.msra.mxu0 0
        %1808 = vmatprep.subr.bf16.mxu0 0
        %1809 = vmatpush1.bf16.xpose.msra.mxu0 0
        %1810 = vmatprep.subr.bf16.mxu0 0
        %1811 = vmatpush1.bf16.xpose.msra.mxu0 0
        %1812 = vmatprep.mubr.bf16.mxu0 0
        %1813 = vmatmul.mubr.bf16.gmra.mrb[0].mxu0 %v1775
        %v1814 = vpop.f32.mrb[0].mxu0
        %v1815 = vadd.f32 0.0, %v1814
        %v1816 = vpop.f32.mrb[0].mxu0
        %v1817 = vpop.f32.mrb[0].mxu0
        %v1818 = vpop.f32.mrb[0].mxu0
        %1819 = vdwg.mxu0
        %v1820 = vmul.f32 %v1677, 0.35355338
        %v1821 = vmul.f32 %v1723, 0.35355338
        %v1822 = vmul.f32 %v1769, 0.35355338
        %v1823 = vmul.f32 %v1815, 0.35355338
        %v1824 = vsel %vm1635, %v1820, -inf
        %1825 = vmax.xlane.f32.xlu0 %v1824
        %v1826 = vpop.xlane.xlu0 %1825
        %v1827 = vsel %vm1635, %v1821, -inf
        %1828 = vmax.xlane.f32.xlu0 %v1827
        %v1829 = vpop.xlane.xlu0 %1828
        %v1830 = vsel %vm1635, %v1822, -inf
        %1831 = vmax.xlane.f32.xlu0 %v1830
        %v1832 = vpop.xlane.xlu0 %1831
        %v1833 = vsel %vm1635, %v1823, -inf
        %1834 = vmax.xlane.f32.xlu0 %v1833
        %v1835 = vpop.xlane.xlu0 %1834
        %v1836 = vsub.f32 %v1820, %v1826
        %v1837 = vsub.f32 %v1821, %v1829
        %v1838 = vsub.f32 %v1822, %v1832
        %v1839 = vsub.f32 %v1823, %v1835
        %v1840 = vmul.f32 %v1836, 1.442695
        %v1841 = vpow.pop %v1840
        %v1842 = vmul.f32 %v1837, 1.442695
        %v1843 = vpow.pop %v1842
        %v1844 = vmul.f32 %v1838, 1.442695
        %v1845 = vpow.pop %v1844
        %v1846 = vmul.f32 %v1839, 1.442695
        %v1847 = vpow.pop %v1846
        %v1848 = vsel %vm1635, %v1841, 0.0
        %1849 = vadd.xlane.f32.xlu0 %v1848
        %v1850 = vpop.xlane.xlu0 %1849
        %v1851 = vsel %vm1635, %v1843, 0.0
        %1852 = vadd.xlane.f32.xlu0 %v1851
        %v1853 = vpop.xlane.xlu0 %1852
        %v1854 = vsel %vm1635, %v1845, 0.0
        %1855 = vadd.xlane.f32.xlu0 %v1854
        %v1856 = vpop.xlane.xlu0 %1855
        %v1857 = vsel %vm1635, %v1847, 0.0
        %1858 = vadd.xlane.f32.xlu0 %v1857
        %v1859 = vpop.xlane.xlu0 %1858
        %v1860 = vrcp.pop %v1850
        %v1861 = vrcp.pop %v1853
        %v1862 = vrcp.pop %v1856
        %v1863 = vrcp.pop %v1859
        %v1864 = vmul.f32 %v1841, %v1860
        %v1865 = vmul.f32 %v1843, %v1861
        %v1866 = vmul.f32 %v1845, %v1862
        %v1867 = vmul.f32 %v1847, %v1863
        %v1868 = vpack.c.bf16 %v1864, %v1864
        %v1869 = vpack.c.bf16 %v1865, %v1865
        %v1870 = vpack.c.bf16 %v1866, %v1866
        %v1871 = vpack.c.bf16 %v1867, %v1867
        %v1872 = vpack.c.bf16 %v1466, %v1466
        %v1873 = vpack.c.bf16 %v1518, %v1518
        %v1874 = vpack.c.bf16 %v1570, %v1570
        %v1875 = vpack.c.bf16 %v1622, %v1622
        %v1877 = vsel %vm1635, %v1868, 0
        %vm1879 = vcmask 1043456
        %v1881 = vsel %vm1879, %v1872, 0
        %1883 = vmatprep.subr.bf16.mxu0 0
        %1884 = vmatpush1.bf16.msra.mxu0 %v1881
        %1885 = vmatprep.subr.bf16.mxu0 0
        %1886 = vmatpush1.bf16.msra.mxu0 0
        %1887 = vmatprep.subr.bf16.mxu0 0
        %1888 = vmatpush1.bf16.msra.mxu0 0
        %1889 = vmatprep.subr.bf16.mxu0 0
        %1890 = vmatpush1.bf16.msra.mxu0 0
        %1891 = vmatprep.subr.bf16.mxu0 0
        %1892 = vmatpush1.bf16.msra.mxu0 0
        %1893 = vmatprep.subr.bf16.mxu0 0
        %1894 = vmatpush1.bf16.msra.mxu0 0
        %1895 = vmatprep.subr.bf16.mxu0 0
        %1896 = vmatpush1.bf16.msra.mxu0 0
        %1897 = vmatprep.subr.bf16.mxu0 0
        %1898 = vmatpush1.bf16.msra.mxu0 0
        %1899 = vmatprep.subr.bf16.mxu0 0
        %1900 = vmatpush1.bf16.msra.mxu0 0
        %1901 = vmatprep.subr.bf16.mxu0 0
        %1902 = vmatpush1.bf16.msra.mxu0 0
        %1903 = vmatprep.subr.bf16.mxu0 0
        %1904 = vmatpush1.bf16.msra.mxu0 0
        %1905 = vmatprep.subr.bf16.mxu0 0
        %1906 = vmatpush1.bf16.msra.mxu0 0
        %1907 = vmatprep.subr.bf16.mxu0 0
        %1908 = vmatpush1.bf16.msra.mxu0 0
        %1909 = vmatprep.subr.bf16.mxu0 0
        %1910 = vmatpush1.bf16.msra.mxu0 0
        %1911 = vmatprep.subr.bf16.mxu0 0
        %1912 = vmatpush1.bf16.msra.mxu0 0
        %1913 = vmatprep.subr.bf16.mxu0 0
        %1914 = vmatpush1.bf16.msra.mxu0 0
        %1915 = vmatprep.mubr.bf16.mxu0 0
        %1916 = vmatmul.mubr.bf16.gmra.mrb[0].mxu0 %v1877
        %v1917 = vpop.f32.mrb[0].mxu0
        %v1918 = vadd.f32 0.0, %v1917
        %v1919 = vpop.f32.mrb[0].mxu0
        %v1920 = vpop.f32.mrb[0].mxu0
        %v1921 = vpop.f32.mrb[0].mxu0
        %1922 = vdwg.mxu0
        %v1924 = vsel %vm1635, %v1869, 0
        %v1927 = vsel %vm1879, %v1873, 0
        %1929 = vmatprep.subr.bf16.mxu0 0
        %1930 = vmatpush1.bf16.msra.mxu0 %v1927
        %1931 = vmatprep.subr.bf16.mxu0 0
        %1932 = vmatpush1.bf16.msra.mxu0 0
        %1933 = vmatprep.subr.bf16.mxu0 0
        %1934 = vmatpush1.bf16.msra.mxu0 0
        %1935 = vmatprep.subr.bf16.mxu0 0
        %1936 = vmatpush1.bf16.msra.mxu0 0
        %1937 = vmatprep.subr.bf16.mxu0 0
        %1938 = vmatpush1.bf16.msra.mxu0 0
        %1939 = vmatprep.subr.bf16.mxu0 0
        %1940 = vmatpush1.bf16.msra.mxu0 0
        %1941 = vmatprep.subr.bf16.mxu0 0
        %1942 = vmatpush1.bf16.msra.mxu0 0
        %1943 = vmatprep.subr.bf16.mxu0 0
        %1944 = vmatpush1.bf16.msra.mxu0 0
        %1945 = vmatprep.subr.bf16.mxu0 0
        %1946 = vmatpush1.bf16.msra.mxu0 0
        %1947 = vmatprep.subr.bf16.mxu0 0
        %1948 = vmatpush1.bf16.msra.mxu0 0
        %1949 = vmatprep.subr.bf16.mxu0 0
        %1950 = vmatpush1.bf16.msra.mxu0 0
        %1951 = vmatprep.subr.bf16.mxu0 0
        %1952 = vmatpush1.bf16.msra.mxu0 0
        %1953 = vmatprep.subr.bf16.mxu0 0
        %1954 = vmatpush1.bf16.msra.mxu0 0
        %1955 = vmatprep.subr.bf16.mxu0 0
        %1956 = vmatpush1.bf16.msra.mxu0 0
        %1957 = vmatprep.subr.bf16.mxu0 0
        %1958 = vmatpush1.bf16.msra.mxu0 0
        %1959 = vmatprep.subr.bf16.mxu0 0
        %1960 = vmatpush1.bf16.msra.mxu0 0
        %1961 = vmatprep.mubr.bf16.mxu0 0
        %1962 = vmatmul.mubr.bf16.gmra.mrb[0].mxu0 %v1924
        %v1963 = vpop.f32.mrb[0].mxu0
        %v1964 = vadd.f32 0.0, %v1963
        %v1965 = vpop.f32.mrb[0].mxu0
        %v1966 = vpop.f32.mrb[0].mxu0
        %v1967 = vpop.f32.mrb[0].mxu0
        %1968 = vdwg.mxu0
        %v1970 = vsel %vm1635, %v1870, 0
        %v1973 = vsel %vm1879, %v1874, 0
        %1975 = vmatprep.subr.bf16.mxu0 0
        %1976 = vmatpush1.bf16.msra.mxu0 %v1973
        %1977 = vmatprep.subr.bf16.mxu0 0
        %1978 = vmatpush1.bf16.msra.mxu0 0
        %1979 = vmatprep.subr.bf16.mxu0 0
        %1980 = vmatpush1.bf16.msra.mxu0 0
        %1981 = vmatprep.subr.bf16.mxu0 0
        %1982 = vmatpush1.bf16.msra.mxu0 0
        %1983 = vmatprep.subr.bf16.mxu0 0
        %1984 = vmatpush1.bf16.msra.mxu0 0
        %1985 = vmatprep.subr.bf16.mxu0 0
        %1986 = vmatpush1.bf16.msra.mxu0 0
        %1987 = vmatprep.subr.bf16.mxu0 0
        %1988 = vmatpush1.bf16.msra.mxu0 0
        %1989 = vmatprep.subr.bf16.mxu0 0
        %1990 = vmatpush1.bf16.msra.mxu0 0
        %1991 = vmatprep.subr.bf16.mxu0 0
        %1992 = vmatpush1.bf16.msra.mxu0 0
        %1993 = vmatprep.subr.bf16.mxu0 0
        %1994 = vmatpush1.bf16.msra.mxu0 0
        %1995 = vmatprep.subr.bf16.mxu0 0
        %1996 = vmatpush1.bf16.msra.mxu0 0
        %1997 = vmatprep.subr.bf16.mxu0 0
        %1998 = vmatpush1.bf16.msra.mxu0 0
        %1999 = vmatprep.subr.bf16.mxu0 0
        %2000 = vmatpush1.bf16.msra.mxu0 0
        %2001 = vmatprep.subr.bf16.mxu0 0
        %2002 = vmatpush1.bf16.msra.mxu0 0
        %2003 = vmatprep.subr.bf16.mxu0 0
        %2004 = vmatpush1.bf16.msra.mxu0 0
        %2005 = vmatprep.subr.bf16.mxu0 0
        %2006 = vmatpush1.bf16.msra.mxu0 0
        %2007 = vmatprep.mubr.bf16.mxu0 0
        %2008 = vmatmul.mubr.bf16.gmra.mrb[0].mxu0 %v1970
        %v2009 = vpop.f32.mrb[0].mxu0
        %v2010 = vadd.f32 0.0, %v2009
        %v2011 = vpop.f32.mrb[0].mxu0
        %v2012 = vpop.f32.mrb[0].mxu0
        %v2013 = vpop.f32.mrb[0].mxu0
        %2014 = vdwg.mxu0
        %v2016 = vsel %vm1635, %v1871, 0
        %v2019 = vsel %vm1879, %v1875, 0
        %2021 = vmatprep.subr.bf16.mxu0 0
        %2022 = vmatpush1.bf16.msra.mxu0 %v2019
        %2023 = vmatprep.subr.bf16.mxu0 0
        %2024 = vmatpush1.bf16.msra.mxu0 0
        %2025 = vmatprep.subr.bf16.mxu0 0
        %2026 = vmatpush1.bf16.msra.mxu0 0
        %2027 = vmatprep.subr.bf16.mxu0 0
        %2028 = vmatpush1.bf16.msra.mxu0 0
        %2029 = vmatprep.subr.bf16.mxu0 0
        %2030 = vmatpush1.bf16.msra.mxu0 0
        %2031 = vmatprep.subr.bf16.mxu0 0
        %2032 = vmatpush1.bf16.msra.mxu0 0
        %2033 = vmatprep.subr.bf16.mxu0 0
        %2034 = vmatpush1.bf16.msra.mxu0 0
        %2035 = vmatprep.subr.bf16.mxu0 0
        %2036 = vmatpush1.bf16.msra.mxu0 0
        %2037 = vmatprep.subr.bf16.mxu0 0
        %2038 = vmatpush1.bf16.msra.mxu0 0
        %2039 = vmatprep.subr.bf16.mxu0 0
        %2040 = vmatpush1.bf16.msra.mxu0 0
        %2041 = vmatprep.subr.bf16.mxu0 0
        %2042 = vmatpush1.bf16.msra.mxu0 0
        %2043 = vmatprep.subr.bf16.mxu0 0
        %2044 = vmatpush1.bf16.msra.mxu0 0
        %2045 = vmatprep.subr.bf16.mxu0 0
        %2046 = vmatpush1.bf16.msra.mxu0 0
        %2047 = vmatprep.subr.bf16.mxu0 0
        %2048 = vmatpush1.bf16.msra.mxu0 0
        %2049 = vmatprep.subr.bf16.mxu0 0
        %2050 = vmatpush1.bf16.msra.mxu0 0
        %2051 = vmatprep.subr.bf16.mxu0 0
        %2052 = vmatpush1.bf16.msra.mxu0 0
        %2053 = vmatprep.mubr.bf16.mxu0 0
        %2054 = vmatmul.mubr.bf16.gmra.mrb[0].mxu0 %v2016
        %v2055 = vpop.f32.mrb[0].mxu0
        %v2056 = vadd.f32 0.0, %v2055
        %v2057 = vpop.f32.mrb[0].mxu0
        %v2058 = vpop.f32.mrb[0].mxu0
        %v2059 = vpop.f32.mrb[0].mxu0
        %2060 = vdwg.mxu0
        %v2061 = vpack.c.bf16 %v1918, %v1918
        %v2062 = vpack.c.bf16 %v1964, %v1964
        %v2063 = vpack.c.bf16 %v2010, %v2010
        %v2064 = vpack.c.bf16 %v2056, %v2056
        %v2066 = vsel %vm1635, %v2061, 0
        %v2069 = vsel %vm1879, %v921, 0
        %2071 = vmatprep.subr.bf16.mxu0 0
        %2072 = vmatpush1.bf16.msra.mxu0 %v2069
        %2073 = vmatprep.subr.bf16.mxu0 0
        %2074 = vmatpush1.bf16.msra.mxu0 0
        %2075 = vmatprep.subr.bf16.mxu0 0
        %2076 = vmatpush1.bf16.msra.mxu0 0
        %2077 = vmatprep.subr.bf16.mxu0 0
        %2078 = vmatpush1.bf16.msra.mxu0 0
        %2079 = vmatprep.subr.bf16.mxu0 0
        %2080 = vmatpush1.bf16.msra.mxu0 0
        %2081 = vmatprep.subr.bf16.mxu0 0
        %2082 = vmatpush1.bf16.msra.mxu0 0
        %2083 = vmatprep.subr.bf16.mxu0 0
        %2084 = vmatpush1.bf16.msra.mxu0 0
        %2085 = vmatprep.subr.bf16.mxu0 0
        %2086 = vmatpush1.bf16.msra.mxu0 0
        %2087 = vmatprep.subr.bf16.mxu0 0
        %2088 = vmatpush1.bf16.msra.mxu0 0
        %2089 = vmatprep.subr.bf16.mxu0 0
        %2090 = vmatpush1.bf16.msra.mxu0 0
        %2091 = vmatprep.subr.bf16.mxu0 0
        %2092 = vmatpush1.bf16.msra.mxu0 0
        %2093 = vmatprep.subr.bf16.mxu0 0
        %2094 = vmatpush1.bf16.msra.mxu0 0
        %2095 = vmatprep.subr.bf16.mxu0 0
        %2096 = vmatpush1.bf16.msra.mxu0 0
        %2097 = vmatprep.subr.bf16.mxu0 0
        %2098 = vmatpush1.bf16.msra.mxu0 0
        %2099 = vmatprep.subr.bf16.mxu0 0
        %2100 = vmatpush1.bf16.msra.mxu0 0
        %2101 = vmatprep.subr.bf16.mxu0 0
        %2102 = vmatpush1.bf16.msra.mxu0 0
        %2103 = vmatprep.mubr.bf16.mxu0 0
        %2104 = vmatmul.mubr.bf16.gmra.mrb[0].mxu0 %v2066
        %v2105 = vpop.f32.mrb[0].mxu0
        %v2106 = vadd.f32 0.0, %v2105
        %v2107 = vpop.f32.mrb[0].mxu0
        %v2108 = vpop.f32.mrb[0].mxu0
        %v2109 = vpop.f32.mrb[0].mxu0
        %2110 = vdwg.mxu0
        %v2112 = vsel %vm1635, %v2062, 0
        %v2115 = vsel %vm1879, %v922, 0
        %2117 = vmatprep.subr.bf16.mxu0 0
        %2118 = vmatpush1.bf16.msra.mxu0 %v2115
        %2119 = vmatprep.subr.bf16.mxu0 0
        %2120 = vmatpush1.bf16.msra.mxu0 0
        %2121 = vmatprep.subr.bf16.mxu0 0
        %2122 = vmatpush1.bf16.msra.mxu0 0
        %2123 = vmatprep.subr.bf16.mxu0 0
        %2124 = vmatpush1.bf16.msra.mxu0 0
        %2125 = vmatprep.subr.bf16.mxu0 0
        %2126 = vmatpush1.bf16.msra.mxu0 0
        %2127 = vmatprep.subr.bf16.mxu0 0
        %2128 = vmatpush1.bf16.msra.mxu0 0
        %2129 = vmatprep.subr.bf16.mxu0 0
        %2130 = vmatpush1.bf16.msra.mxu0 0
        %2131 = vmatprep.subr.bf16.mxu0 0
        %2132 = vmatpush1.bf16.msra.mxu0 0
        %2133 = vmatprep.subr.bf16.mxu0 0
        %2134 = vmatpush1.bf16.msra.mxu0 0
        %2135 = vmatprep.subr.bf16.mxu0 0
        %2136 = vmatpush1.bf16.msra.mxu0 0
        %2137 = vmatprep.subr.bf16.mxu0 0
        %2138 = vmatpush1.bf16.msra.mxu0 0
        %2139 = vmatprep.subr.bf16.mxu0 0
        %2140 = vmatpush1.bf16.msra.mxu0 0
        %2141 = vmatprep.subr.bf16.mxu0 0
        %2142 = vmatpush1.bf16.msra.mxu0 0
        %2143 = vmatprep.subr.bf16.mxu0 0
        %2144 = vmatpush1.bf16.msra.mxu0 0
        %2145 = vmatprep.subr.bf16.mxu0 0
        %2146 = vmatpush1.bf16.msra.mxu0 0
        %2147 = vmatprep.subr.bf16.mxu0 0
        %2148 = vmatpush1.bf16.msra.mxu0 0
        %2149 = vmatprep.mubr.bf16.mxu0 0
        %2150 = vmatmul.mubr.bf16.gmra.mrb[0].mxu0 %v2112
        %v2151 = vpop.f32.mrb[0].mxu0
        %v2152 = vadd.f32 0.0, %v2151
        %v2153 = vpop.f32.mrb[0].mxu0
        %v2154 = vpop.f32.mrb[0].mxu0
        %v2155 = vpop.f32.mrb[0].mxu0
        %2156 = vdwg.mxu0
        %v2158 = vsel %vm1635, %v2063, 0
        %v2161 = vsel %vm1879, %v923, 0
        %2163 = vmatprep.subr.bf16.mxu0 0
        %2164 = vmatpush1.bf16.msra.mxu0 %v2161
        %2165 = vmatprep.subr.bf16.mxu0 0
        %2166 = vmatpush1.bf16.msra.mxu0 0
        %2167 = vmatprep.subr.bf16.mxu0 0
        %2168 = vmatpush1.bf16.msra.mxu0 0
        %2169 = vmatprep.subr.bf16.mxu0 0
        %2170 = vmatpush1.bf16.msra.mxu0 0
        %2171 = vmatprep.subr.bf16.mxu0 0
        %2172 = vmatpush1.bf16.msra.mxu0 0
        %2173 = vmatprep.subr.bf16.mxu0 0
        %2174 = vmatpush1.bf16.msra.mxu0 0
        %2175 = vmatprep.subr.bf16.mxu0 0
        %2176 = vmatpush1.bf16.msra.mxu0 0
        %2177 = vmatprep.subr.bf16.mxu0 0
        %2178 = vmatpush1.bf16.msra.mxu0 0
        %2179 = vmatprep.subr.bf16.mxu0 0
        %2180 = vmatpush1.bf16.msra.mxu0 0
        %2181 = vmatprep.subr.bf16.mxu0 0
        %2182 = vmatpush1.bf16.msra.mxu0 0
        %2183 = vmatprep.subr.bf16.mxu0 0
        %2184 = vmatpush1.bf16.msra.mxu0 0
        %2185 = vmatprep.subr.bf16.mxu0 0
        %2186 = vmatpush1.bf16.msra.mxu0 0
        %2187 = vmatprep.subr.bf16.mxu0 0
        %2188 = vmatpush1.bf16.msra.mxu0 0
        %2189 = vmatprep.subr.bf16.mxu0 0
        %2190 = vmatpush1.bf16.msra.mxu0 0
        %2191 = vmatprep.subr.bf16.mxu0 0
        %2192 = vmatpush1.bf16.msra.mxu0 0
        %2193 = vmatprep.subr.bf16.mxu0 0
        %2194 = vmatpush1.bf16.msra.mxu0 0
        %2195 = vmatprep.mubr.bf16.mxu0 0
        %2196 = vmatmul.mubr.bf16.gmra.mrb[0].mxu0 %v2158
        %v2197 = vpop.f32.mrb[0].mxu0
        %v2198 = vadd.f32 0.0, %v2197
        %v2199 = vpop.f32.mrb[0].mxu0
        %v2200 = vpop.f32.mrb[0].mxu0
        %v2201 = vpop.f32.mrb[0].mxu0
        %2202 = vdwg.mxu0
        %v2204 = vsel %vm1635, %v2064, 0
        %v2207 = vsel %vm1879, %v924, 0
        %2209 = vmatprep.subr.bf16.mxu0 0
        %2210 = vmatpush1.bf16.msra.mxu0 %v2207
        %2211 = vmatprep.subr.bf16.mxu0 0
        %2212 = vmatpush1.bf16.msra.mxu0 0
        %2213 = vmatprep.subr.bf16.mxu0 0
        %2214 = vmatpush1.bf16.msra.mxu0 0
        %2215 = vmatprep.subr.bf16.mxu0 0
        %2216 = vmatpush1.bf16.msra.mxu0 0
        %2217 = vmatprep.subr.bf16.mxu0 0
        %2218 = vmatpush1.bf16.msra.mxu0 0
        %2219 = vmatprep.subr.bf16.mxu0 0
        %2220 = vmatpush1.bf16.msra.mxu0 0
        %2221 = vmatprep.subr.bf16.mxu0 0
        %2222 = vmatpush1.bf16.msra.mxu0 0
        %2223 = vmatprep.subr.bf16.mxu0 0
        %2224 = vmatpush1.bf16.msra.mxu0 0
        %2225 = vmatprep.subr.bf16.mxu0 0
        %2226 = vmatpush1.bf16.msra.mxu0 0
        %2227 = vmatprep.subr.bf16.mxu0 0
        %2228 = vmatpush1.bf16.msra.mxu0 0
        %2229 = vmatprep.subr.bf16.mxu0 0
        %2230 = vmatpush1.bf16.msra.mxu0 0
        %2231 = vmatprep.subr.bf16.mxu0 0
        %2232 = vmatpush1.bf16.msra.mxu0 0
        %2233 = vmatprep.subr.bf16.mxu0 0
        %2234 = vmatpush1.bf16.msra.mxu0 0
        %2235 = vmatprep.subr.bf16.mxu0 0
        %2236 = vmatpush1.bf16.msra.mxu0 0
        %2237 = vmatprep.subr.bf16.mxu0 0
        %2238 = vmatpush1.bf16.msra.mxu0 0
        %2239 = vmatprep.subr.bf16.mxu0 0
        %2240 = vmatpush1.bf16.msra.mxu0 0
        %2241 = vmatprep.mubr.bf16.mxu0 0
        %2242 = vmatmul.mubr.bf16.gmra.mrb[0].mxu0 %v2204
        %v2243 = vpop.f32.mrb[0].mxu0
        %v2244 = vadd.f32 0.0, %v2243
        %v2245 = vpop.f32.mrb[0].mxu0
        %v2246 = vpop.f32.mrb[0].mxu0
        %v2247 = vpop.f32.mrb[0].mxu0
        %2248 = vdwg.mxu0
        %v2249 = vsel %vm963, %v2106, 0.0
        %v2250 = vsel %vm963, %v2152, 0.0
        %v2251 = vadd.f32 %v2249, %v2250
        %v2252 = vsel %vm963, %v2198, 0.0
        %v2253 = vadd.f32 %v2251, %v2252
        %v2254 = vsel %vm963, %v2244, 0.0
        %v2255 = vadd.f32 %v2253, %v2254
        %v2257 = vlaneseq
        %v2258 = vshrl.u32 %v2257, 7
        %v2259 = vsub.s32 0, %v2258
        %v2260 = vrot.slane %v925, %v2259
        %v2262 = vadd.f32 %v2255, %v2260
        %v2263 = vadd.f32 %v859, %v2262
        %v2264 = vld [vmem:[%s22] sm:$0x1]
        %v2265 = vld [vmem:[%s23] sm:$0x1]
        %v2266 = vsel %vm963, %v2263, 0.0
        %2267 = vadd.xlane.f32.xlu0 %v2266
        %v2268 = vpop.xlane.xlu0 %2267
        %v2269 = vrcp.pop 32.0
        %v2270 = vmul.f32 %v2268, %v2269
        %v2271 = vsub.f32 %v2263, %v2270
        %v2272 = vmul.f32 %v2271, %v2271
        %v2273 = vsel %vm963, %v2272, 0.0
        %2274 = vadd.xlane.f32.xlu0 %v2273
        %v2275 = vpop.xlane.xlu0 %2274
        %v2276 = vmul.f32 %v2275, %v2269
        %v2277 = vadd.f32 %v2276, 1e-05
        %v2278 = vrsqrt.pop %v2277
        %v2279 = vmul.f32 %v2271, %v2278
        %v2281 = vlaneseq
        %v2282 = vshrl.u32 %v2281, 7
        %v2283 = vsub.s32 0, %v2282
        %v2284 = vrot.slane %v2264, %v2283
        %v2286 = vmul.f32 %v2279, %v2284
        %v2288 = vlaneseq
        %v2289 = vshrl.u32 %v2288, 7
        %v2290 = vsub.s32 0, %v2289
        %v2291 = vrot.slane %v2265, %v2290
        %v2293 = vadd.f32 %v2286, %v2291
        %v2294 = vld [vmem:[%s10] sm:$0xf]
        %v2295 = vld [vmem:[%s10 + $0x4] sm:$0xf]
        %v2296 = vld [vmem:[%s10 + $0x8] sm:$0xf]
        %v2297 = vld [vmem:[%s10 + $0xc] sm:$0xf]
        %v2298 = vld [vmem:[%s10 + $0x10] sm:$0xf]
        %v2299 = vld [vmem:[%s10 + $0x14] sm:$0xf]
        %v2300 = vld [vmem:[%s10 + $0x18] sm:$0xf]
        %v2301 = vld [vmem:[%s10 + $0x1c] sm:$0xf]
        %v2302 = vld [vmem:[%s10 + $0x20] sm:$0xf]
        %v2303 = vld [vmem:[%s10 + $0x24] sm:$0xf]
        %v2304 = vld [vmem:[%s10 + $0x28] sm:$0xf]
        %v2305 = vld [vmem:[%s10 + $0x2c] sm:$0xf]
        %v2306 = vld [vmem:[%s10 + $0x30] sm:$0xf]
        %v2307 = vld [vmem:[%s10 + $0x34] sm:$0xf]
        %v2308 = vld [vmem:[%s10 + $0x38] sm:$0xf]
        %v2309 = vld [vmem:[%s10 + $0x3c] sm:$0xf]
        %v2310 = vld [vmem:[%s11] sm:$0xf]
        %v2311 = vld [vmem:[%s11 + $0x4] sm:$0xf]
        %v2312 = vld [vmem:[%s11 + $0x8] sm:$0xf]
        %v2313 = vld [vmem:[%s11 + $0xc] sm:$0xf]
        %v2314 = vld [vmem:[%s11 + $0x10] sm:$0xf]
        %v2315 = vld [vmem:[%s11 + $0x14] sm:$0xf]
        %v2316 = vld [vmem:[%s11 + $0x18] sm:$0xf]
        %v2317 = vld [vmem:[%s11 + $0x1c] sm:$0xf]
        %v2318 = vld [vmem:[%s11 + $0x20] sm:$0xf]
        %v2319 = vld [vmem:[%s11 + $0x24] sm:$0xf]
        %v2320 = vld [vmem:[%s11 + $0x28] sm:$0xf]
        %v2321 = vld [vmem:[%s11 + $0x2c] sm:$0xf]
        %v2322 = vld [vmem:[%s11 + $0x30] sm:$0xf]
        %v2323 = vld [vmem:[%s11 + $0x34] sm:$0xf]
        %v2324 = vld [vmem:[%s11 + $0x38] sm:$0xf]
        %v2325 = vld [vmem:[%s11 + $0x3c] sm:$0xf]
        %v2326 = vld [vmem:[%s12] sm:$0xf]
        %v2327 = vld [vmem:[%s12 + $0x4] sm:$0xf]
        %v2328 = vld [vmem:[%s12 + $0x8] sm:$0xf]
        %v2329 = vld [vmem:[%s12 + $0xc] sm:$0xf]
        %v2330 = vld [vmem:[%s12 + $0x10] sm:$0xf]
        %v2331 = vld [vmem:[%s12 + $0x14] sm:$0xf]
        %v2332 = vld [vmem:[%s12 + $0x18] sm:$0xf]
        %v2333 = vld [vmem:[%s12 + $0x1c] sm:$0xf]
        %v2334 = vld [vmem:[%s12 + $0x20] sm:$0xf]
        %v2335 = vld [vmem:[%s12 + $0x24] sm:$0xf]
        %v2336 = vld [vmem:[%s12 + $0x28] sm:$0xf]
        %v2337 = vld [vmem:[%s12 + $0x2c] sm:$0xf]
        %v2338 = vld [vmem:[%s12 + $0x30] sm:$0xf]
        %v2339 = vld [vmem:[%s12 + $0x34] sm:$0xf]
        %v2340 = vld [vmem:[%s12 + $0x38] sm:$0xf]
        %v2341 = vld [vmem:[%s12 + $0x3c] sm:$0xf]
        %v2342 = vld [vmem:[%s13] sm:$0x1]
        %v2343 = vld [vmem:[%s13 + $0x1] sm:$0x1]
        %v2344 = vld [vmem:[%s13 + $0x2] sm:$0x1]
        %v2345 = vld [vmem:[%s13 + $0x3] sm:$0x1]
        %v2346 = vld [vmem:[%s14] sm:$0x1]
        %v2347 = vld [vmem:[%s14 + $0x1] sm:$0x1]
        %v2348 = vld [vmem:[%s14 + $0x2] sm:$0x1]
        %v2349 = vld [vmem:[%s14 + $0x3] sm:$0x1]
        %v2350 = vld [vmem:[%s15] sm:$0x1]
        %v2351 = vld [vmem:[%s15 + $0x1] sm:$0x1]
        %v2352 = vld [vmem:[%s15 + $0x2] sm:$0x1]
        %v2353 = vld [vmem:[%s15 + $0x3] sm:$0x1]
        %v2354 = vld [vmem:[%s16] sm:$0xf]
        %v2355 = vld [vmem:[%s16 + $0x4] sm:$0xf]
        %v2356 = vld [vmem:[%s16 + $0x8] sm:$0xf]
        %v2357 = vld [vmem:[%s16 + $0xc] sm:$0xf]
        %v2358 = vld [vmem:[%s17] sm:$0x1]
        %v2359 = vpack.c.bf16 %v2293, %v2293
        %v2360 = vpack.c.bf16 %v860, %v860
        %v2365 = vlaneseq
        %v2366 = vshrl.u32 %v2365, 7
        %v2367 = vsub.s32 0, %v2366
        %v2368 = vrot.slane %v2342, %v2367
        %v2369 = vlaneseq
        %v2370 = vshrl.u32 %v2369, 7
        %v2371 = vsub.s32 0, %v2370
        %v2372 = vrot.slane %v2343, %v2371
        %v2373 = vlaneseq
        %v2374 = vshrl.u32 %v2373, 7
        %v2375 = vsub.s32 0, %v2374
        %v2376 = vrot.slane %v2344, %v2375
        %v2377 = vlaneseq
        %v2378 = vshrl.u32 %v2377, 7
        %v2379 = vsub.s32 0, %v2378
        %v2380 = vrot.slane %v2345, %v2379
        %v2389 = vunpack.c.l.b16 %v2294
        %v2390 = vunpack.c.l.b16 %v2295
        %v2391 = vunpack.c.l.b16 %v2296
        %v2392 = vunpack.c.l.b16 %v2297
        %v2393 = vpack.c.b16 %v2390, %v2389
        %v2394 = vpack.c.b16 %v2392, %v2391
        %v2398 = vsel %vm963, %v2359, 0
        %2400 = vmatprep.subr.bf16.mxu0 0
        %2401 = vmatpush1.bf16.msra.mxu0 %v2393
        %2402 = vmatprep.subr.bf16.mxu0 0
        %2403 = vmatpush1.bf16.msra.mxu0 %v2394
        %2404 = vmatprep.subr.bf16.mxu0 0
        %2405 = vmatpush1.bf16.msra.mxu0 0
        %2406 = vmatprep.subr.bf16.mxu0 0
        %2407 = vmatpush1.bf16.msra.mxu0 0
        %2408 = vmatprep.subr.bf16.mxu0 0
        %2409 = vmatpush1.bf16.msra.mxu0 0
        %2410 = vmatprep.subr.bf16.mxu0 0
        %2411 = vmatpush1.bf16.msra.mxu0 0
        %2412 = vmatprep.subr.bf16.mxu0 0
        %2413 = vmatpush1.bf16.msra.mxu0 0
        %2414 = vmatprep.subr.bf16.mxu0 0
        %2415 = vmatpush1.bf16.msra.mxu0 0
        %2416 = vmatprep.subr.bf16.mxu0 0
        %2417 = vmatpush1.bf16.msra.mxu0 0
        %2418 = vmatprep.subr.bf16.mxu0 0
        %2419 = vmatpush1.bf16.msra.mxu0 0
        %2420 = vmatprep.subr.bf16.mxu0 0
        %2421 = vmatpush1.bf16.msra.mxu0 0
        %2422 = vmatprep.subr.bf16.mxu0 0
        %2423 = vmatpush1.bf16.msra.mxu0 0
        %2424 = vmatprep.subr.bf16.mxu0 0
        %2425 = vmatpush1.bf16.msra.mxu0 0
        %2426 = vmatprep.subr.bf16.mxu0 0
        %2427 = vmatpush1.bf16.msra.mxu0 0
        %2428 = vmatprep.subr.bf16.mxu0 0
        %2429 = vmatpush1.bf16.msra.mxu0 0
        %2430 = vmatprep.subr.bf16.mxu0 0
        %2431 = vmatpush1.bf16.msra.mxu0 0
        %2432 = vmatprep.mubr.bf16.mxu0 0
        %2433 = vmatmul.mubr.bf16.gmra.mrb[0].mxu0 %v2398
        %v2434 = vpop.f32.mrb[0].mxu0
        %v2435 = vadd.f32 %v2368, %v2434
        %v2436 = vpop.f32.mrb[0].mxu0
        %v2437 = vpop.f32.mrb[0].mxu0
        %v2438 = vpop.f32.mrb[0].mxu0
        %2439 = vdwg.mxu0
        %v2444 = vunpack.c.l.b16 %v2298
        %v2445 = vunpack.c.l.b16 %v2299
        %v2446 = vunpack.c.l.b16 %v2300
        %v2447 = vunpack.c.l.b16 %v2301
        %v2448 = vpack.c.b16 %v2445, %v2444
        %v2449 = vpack.c.b16 %v2447, %v2446
        %2452 = vmatprep.subr.bf16.mxu0 0
        %2453 = vmatpush1.bf16.msra.mxu0 %v2448
        %2454 = vmatprep.subr.bf16.mxu0 0
        %2455 = vmatpush1.bf16.msra.mxu0 %v2449
        %2456 = vmatprep.subr.bf16.mxu0 0
        %2457 = vmatpush1.bf16.msra.mxu0 0
        %2458 = vmatprep.subr.bf16.mxu0 0
        %2459 = vmatpush1.bf16.msra.mxu0 0
        %2460 = vmatprep.subr.bf16.mxu0 0
        %2461 = vmatpush1.bf16.msra.mxu0 0
        %2462 = vmatprep.subr.bf16.mxu0 0
        %2463 = vmatpush1.bf16.msra.mxu0 0
        %2464 = vmatprep.subr.bf16.mxu0 0
        %2465 = vmatpush1.bf16.msra.mxu0 0
        %2466 = vmatprep.subr.bf16.mxu0 0
        %2467 = vmatpush1.bf16.msra.mxu0 0
        %2468 = vmatprep.subr.bf16.mxu0 0
        %2469 = vmatpush1.bf16.msra.mxu0 0
        %2470 = vmatprep.subr.bf16.mxu0 0
        %2471 = vmatpush1.bf16.msra.mxu0 0
        %2472 = vmatprep.subr.bf16.mxu0 0
        %2473 = vmatpush1.bf16.msra.mxu0 0
        %2474 = vmatprep.subr.bf16.mxu0 0
        %2475 = vmatpush1.bf16.msra.mxu0 0
        %2476 = vmatprep.subr.bf16.mxu0 0
        %2477 = vmatpush1.bf16.msra.mxu0 0
        %2478 = vmatprep.subr.bf16.mxu0 0
        %2479 = vmatpush1.bf16.msra.mxu0 0
        %2480 = vmatprep.subr.bf16.mxu0 0
        %2481 = vmatpush1.bf16.msra.mxu0 0
        %2482 = vmatprep.subr.bf16.mxu0 0
        %2483 = vmatpush1.bf16.msra.mxu0 0
        %2484 = vmatprep.mubr.bf16.mxu0 0
        %2485 = vmatmul.mubr.bf16.gmra.mrb[0].mxu0 %v2398
        %v2486 = vpop.f32.mrb[0].mxu0
        %v2487 = vadd.f32 %v2372, %v2486
        %v2488 = vpop.f32.mrb[0].mxu0
        %v2489 = vpop.f32.mrb[0].mxu0
        %v2490 = vpop.f32.mrb[0].mxu0
        %2491 = vdwg.mxu0
        %v2496 = vunpack.c.l.b16 %v2302
        %v2497 = vunpack.c.l.b16 %v2303
        %v2498 = vunpack.c.l.b16 %v2304
        %v2499 = vunpack.c.l.b16 %v2305
        %v2500 = vpack.c.b16 %v2497, %v2496
        %v2501 = vpack.c.b16 %v2499, %v2498
        %2504 = vmatprep.subr.bf16.mxu0 0
        %2505 = vmatpush1.bf16.msra.mxu0 %v2500
        %2506 = vmatprep.subr.bf16.mxu0 0
        %2507 = vmatpush1.bf16.msra.mxu0 %v2501
        %2508 = vmatprep.subr.bf16.mxu0 0
        %2509 = vmatpush1.bf16.msra.mxu0 0
        %2510 = vmatprep.subr.bf16.mxu0 0
        %2511 = vmatpush1.bf16.msra.mxu0 0
        %2512 = vmatprep.subr.bf16.mxu0 0
        %2513 = vmatpush1.bf16.msra.mxu0 0
        %2514 = vmatprep.subr.bf16.mxu0 0
        %2515 = vmatpush1.bf16.msra.mxu0 0
        %2516 = vmatprep.subr.bf16.mxu0 0
        %2517 = vmatpush1.bf16.msra.mxu0 0
        %2518 = vmatprep.subr.bf16.mxu0 0
        %2519 = vmatpush1.bf16.msra.mxu0 0
        %2520 = vmatprep.subr.bf16.mxu0 0
        %2521 = vmatpush1.bf16.msra.mxu0 0
        %2522 = vmatprep.subr.bf16.mxu0 0
        %2523 = vmatpush1.bf16.msra.mxu0 0
        %2524 = vmatprep.subr.bf16.mxu0 0
        %2525 = vmatpush1.bf16.msra.mxu0 0
        %2526 = vmatprep.subr.bf16.mxu0 0
        %2527 = vmatpush1.bf16.msra.mxu0 0
        %2528 = vmatprep.subr.bf16.mxu0 0
        %2529 = vmatpush1.bf16.msra.mxu0 0
        %2530 = vmatprep.subr.bf16.mxu0 0
        %2531 = vmatpush1.bf16.msra.mxu0 0
        %2532 = vmatprep.subr.bf16.mxu0 0
        %2533 = vmatpush1.bf16.msra.mxu0 0
        %2534 = vmatprep.subr.bf16.mxu0 0
        %2535 = vmatpush1.bf16.msra.mxu0 0
        %2536 = vmatprep.mubr.bf16.mxu0 0
        %2537 = vmatmul.mubr.bf16.gmra.mrb[0].mxu0 %v2398
        %v2538 = vpop.f32.mrb[0].mxu0
        %v2539 = vadd.f32 %v2376, %v2538
        %v2540 = vpop.f32.mrb[0].mxu0
        %v2541 = vpop.f32.mrb[0].mxu0
        %v2542 = vpop.f32.mrb[0].mxu0
        %2543 = vdwg.mxu0
        %v2548 = vunpack.c.l.b16 %v2306
        %v2549 = vunpack.c.l.b16 %v2307
        %v2550 = vunpack.c.l.b16 %v2308
        %v2551 = vunpack.c.l.b16 %v2309
        %v2552 = vpack.c.b16 %v2549, %v2548
        %v2553 = vpack.c.b16 %v2551, %v2550
        %2556 = vmatprep.subr.bf16.mxu0 0
        %2557 = vmatpush1.bf16.msra.mxu0 %v2552
        %2558 = vmatprep.subr.bf16.mxu0 0
        %2559 = vmatpush1.bf16.msra.mxu0 %v2553
        %2560 = vmatprep.subr.bf16.mxu0 0
        %2561 = vmatpush1.bf16.msra.mxu0 0
        %2562 = vmatprep.subr.bf16.mxu0 0
        %2563 = vmatpush1.bf16.msra.mxu0 0
        %2564 = vmatprep.subr.bf16.mxu0 0
        %2565 = vmatpush1.bf16.msra.mxu0 0
        %2566 = vmatprep.subr.bf16.mxu0 0
        %2567 = vmatpush1.bf16.msra.mxu0 0
        %2568 = vmatprep.subr.bf16.mxu0 0
        %2569 = vmatpush1.bf16.msra.mxu0 0
        %2570 = vmatprep.subr.bf16.mxu0 0
        %2571 = vmatpush1.bf16.msra.mxu0 0
        %2572 = vmatprep.subr.bf16.mxu0 0
        %2573 = vmatpush1.bf16.msra.mxu0 0
        %2574 = vmatprep.subr.bf16.mxu0 0
        %2575 = vmatpush1.bf16.msra.mxu0 0
        %2576 = vmatprep.subr.bf16.mxu0 0
        %2577 = vmatpush1.bf16.msra.mxu0 0
        %2578 = vmatprep.subr.bf16.mxu0 0
        %2579 = vmatpush1.bf16.msra.mxu0 0
        %2580 = vmatprep.subr.bf16.mxu0 0
        %2581 = vmatpush1.bf16.msra.mxu0 0
        %2582 = vmatprep.subr.bf16.mxu0 0
        %2583 = vmatpush1.bf16.msra.mxu0 0
        %2584 = vmatprep.subr.bf16.mxu0 0
        %2585 = vmatpush1.bf16.msra.mxu0 0
        %2586 = vmatprep.subr.bf16.mxu0 0
        %2587 = vmatpush1.bf16.msra.mxu0 0
        %2588 = vmatprep.mubr.bf16.mxu0 0
        %2589 = vmatmul.mubr.bf16.gmra.mrb[0].mxu0 %v2398
        %v2590 = vpop.f32.mrb[0].mxu0
        %v2591 = vadd.f32 %v2380, %v2590
        %v2592 = vpop.f32.mrb[0].mxu0
        %v2593 = vpop.f32.mrb[0].mxu0
        %v2594 = vpop.f32.mrb[0].mxu0
        %2595 = vdwg.mxu0
        %v2600 = vlaneseq
        %v2601 = vshrl.u32 %v2600, 7
        %v2602 = vsub.s32 0, %v2601
        %v2603 = vrot.slane %v2346, %v2602
        %v2604 = vlaneseq
        %v2605 = vshrl.u32 %v2604, 7
        %v2606 = vsub.s32 0, %v2605
        %v2607 = vrot.slane %v2347, %v2606
        %v2608 = vlaneseq
        %v2609 = vshrl.u32 %v2608, 7
        %v2610 = vsub.s32 0, %v2609
        %v2611 = vrot.slane %v2348, %v2610
        %v2612 = vlaneseq
        %v2613 = vshrl.u32 %v2612, 7
        %v2614 = vsub.s32 0, %v2613
        %v2615 = vrot.slane %v2349, %v2614
        %v2624 = vunpack.c.l.b16 %v2310
        %v2625 = vunpack.c.l.b16 %v2311
        %v2626 = vunpack.c.l.b16 %v2312
        %v2627 = vunpack.c.l.b16 %v2313
        %v2628 = vpack.c.b16 %v2625, %v2624
        %v2629 = vpack.c.b16 %v2627, %v2626
        %v2633 = vsel %vm963, %v2360, 0
        %2635 = vmatprep.subr.bf16.mxu0 0
        %2636 = vmatpush1.bf16.msra.mxu0 %v2628
        %2637 = vmatprep.subr.bf16.mxu0 0
        %2638 = vmatpush1.bf16.msra.mxu0 %v2629
        %2639 = vmatprep.subr.bf16.mxu0 0
        %2640 = vmatpush1.bf16.msra.mxu0 0
        %2641 = vmatprep.subr.bf16.mxu0 0
        %2642 = vmatpush1.bf16.msra.mxu0 0
        %2643 = vmatprep.subr.bf16.mxu0 0
        %2644 = vmatpush1.bf16.msra.mxu0 0
        %2645 = vmatprep.subr.bf16.mxu0 0
        %2646 = vmatpush1.bf16.msra.mxu0 0
        %2647 = vmatprep.subr.bf16.mxu0 0
        %2648 = vmatpush1.bf16.msra.mxu0 0
        %2649 = vmatprep.subr.bf16.mxu0 0
        %2650 = vmatpush1.bf16.msra.mxu0 0
        %2651 = vmatprep.subr.bf16.mxu0 0
        %2652 = vmatpush1.bf16.msra.mxu0 0
        %2653 = vmatprep.subr.bf16.mxu0 0
        %2654 = vmatpush1.bf16.msra.mxu0 0
        %2655 = vmatprep.subr.bf16.mxu0 0
        %2656 = vmatpush1.bf16.msra.mxu0 0
        %2657 = vmatprep.subr.bf16.mxu0 0
        %2658 = vmatpush1.bf16.msra.mxu0 0
        %2659 = vmatprep.subr.bf16.mxu0 0
        %2660 = vmatpush1.bf16.msra.mxu0 0
        %2661 = vmatprep.subr.bf16.mxu0 0
        %2662 = vmatpush1.bf16.msra.mxu0 0
        %2663 = vmatprep.subr.bf16.mxu0 0
        %2664 = vmatpush1.bf16.msra.mxu0 0
        %2665 = vmatprep.subr.bf16.mxu0 0
        %2666 = vmatpush1.bf16.msra.mxu0 0
        %2667 = vmatprep.mubr.bf16.mxu0 0
        %2668 = vmatmul.mubr.bf16.gmra.mrb[0].mxu0 %v2633
        %v2669 = vpop.f32.mrb[0].mxu0
        %v2670 = vadd.f32 %v2603, %v2669
        %v2671 = vpop.f32.mrb[0].mxu0
        %v2672 = vpop.f32.mrb[0].mxu0
        %v2673 = vpop.f32.mrb[0].mxu0
        %2674 = vdwg.mxu0
        %v2679 = vunpack.c.l.b16 %v2314
        %v2680 = vunpack.c.l.b16 %v2315
        %v2681 = vunpack.c.l.b16 %v2316
        %v2682 = vunpack.c.l.b16 %v2317
        %v2683 = vpack.c.b16 %v2680, %v2679
        %v2684 = vpack.c.b16 %v2682, %v2681
        %2687 = vmatprep.subr.bf16.mxu0 0
        %2688 = vmatpush1.bf16.msra.mxu0 %v2683
        %2689 = vmatprep.subr.bf16.mxu0 0
        %2690 = vmatpush1.bf16.msra.mxu0 %v2684
        %2691 = vmatprep.subr.bf16.mxu0 0
        %2692 = vmatpush1.bf16.msra.mxu0 0
        %2693 = vmatprep.subr.bf16.mxu0 0
        %2694 = vmatpush1.bf16.msra.mxu0 0
        %2695 = vmatprep.subr.bf16.mxu0 0
        %2696 = vmatpush1.bf16.msra.mxu0 0
        %2697 = vmatprep.subr.bf16.mxu0 0
        %2698 = vmatpush1.bf16.msra.mxu0 0
        %2699 = vmatprep.subr.bf16.mxu0 0
        %2700 = vmatpush1.bf16.msra.mxu0 0
        %2701 = vmatprep.subr.bf16.mxu0 0
        %2702 = vmatpush1.bf16.msra.mxu0 0
        %2703 = vmatprep.subr.bf16.mxu0 0
        %2704 = vmatpush1.bf16.msra.mxu0 0
        %2705 = vmatprep.subr.bf16.mxu0 0
        %2706 = vmatpush1.bf16.msra.mxu0 0
        %2707 = vmatprep.subr.bf16.mxu0 0
        %2708 = vmatpush1.bf16.msra.mxu0 0
        %2709 = vmatprep.subr.bf16.mxu0 0
        %2710 = vmatpush1.bf16.msra.mxu0 0
        %2711 = vmatprep.subr.bf16.mxu0 0
        %2712 = vmatpush1.bf16.msra.mxu0 0
        %2713 = vmatprep.subr.bf16.mxu0 0
        %2714 = vmatpush1.bf16.msra.mxu0 0
        %2715 = vmatprep.subr.bf16.mxu0 0
        %2716 = vmatpush1.bf16.msra.mxu0 0
        %2717 = vmatprep.subr.bf16.mxu0 0
        %2718 = vmatpush1.bf16.msra.mxu0 0
        %2719 = vmatprep.mubr.bf16.mxu0 0
        %2720 = vmatmul.mubr.bf16.gmra.mrb[0].mxu0 %v2633
        %v2721 = vpop.f32.mrb[0].mxu0
        %v2722 = vadd.f32 %v2607, %v2721
        %v2723 = vpop.f32.mrb[0].mxu0
        %v2724 = vpop.f32.mrb[0].mxu0
        %v2725 = vpop.f32.mrb[0].mxu0
        %2726 = vdwg.mxu0
        %v2731 = vunpack.c.l.b16 %v2318
        %v2732 = vunpack.c.l.b16 %v2319
        %v2733 = vunpack.c.l.b16 %v2320
        %v2734 = vunpack.c.l.b16 %v2321
        %v2735 = vpack.c.b16 %v2732, %v2731
        %v2736 = vpack.c.b16 %v2734, %v2733
        %2739 = vmatprep.subr.bf16.mxu0 0
        %2740 = vmatpush1.bf16.msra.mxu0 %v2735
        %2741 = vmatprep.subr.bf16.mxu0 0
        %2742 = vmatpush1.bf16.msra.mxu0 %v2736
        %2743 = vmatprep.subr.bf16.mxu0 0
        %2744 = vmatpush1.bf16.msra.mxu0 0
        %2745 = vmatprep.subr.bf16.mxu0 0
        %2746 = vmatpush1.bf16.msra.mxu0 0
        %2747 = vmatprep.subr.bf16.mxu0 0
        %2748 = vmatpush1.bf16.msra.mxu0 0
        %2749 = vmatprep.subr.bf16.mxu0 0
        %2750 = vmatpush1.bf16.msra.mxu0 0
        %2751 = vmatprep.subr.bf16.mxu0 0
        %2752 = vmatpush1.bf16.msra.mxu0 0
        %2753 = vmatprep.subr.bf16.mxu0 0
        %2754 = vmatpush1.bf16.msra.mxu0 0
        %2755 = vmatprep.subr.bf16.mxu0 0
        %2756 = vmatpush1.bf16.msra.mxu0 0
        %2757 = vmatprep.subr.bf16.mxu0 0
        %2758 = vmatpush1.bf16.msra.mxu0 0
        %2759 = vmatprep.subr.bf16.mxu0 0
        %2760 = vmatpush1.bf16.msra.mxu0 0
        %2761 = vmatprep.subr.bf16.mxu0 0
        %2762 = vmatpush1.bf16.msra.mxu0 0
        %2763 = vmatprep.subr.bf16.mxu0 0
        %2764 = vmatpush1.bf16.msra.mxu0 0
        %2765 = vmatprep.subr.bf16.mxu0 0
        %2766 = vmatpush1.bf16.msra.mxu0 0
        %2767 = vmatprep.subr.bf16.mxu0 0
        %2768 = vmatpush1.bf16.msra.mxu0 0
        %2769 = vmatprep.subr.bf16.mxu0 0
        %2770 = vmatpush1.bf16.msra.mxu0 0
        %2771 = vmatprep.mubr.bf16.mxu0 0
        %2772 = vmatmul.mubr.bf16.gmra.mrb[0].mxu0 %v2633
        %v2773 = vpop.f32.mrb[0].mxu0
        %v2774 = vadd.f32 %v2611, %v2773
        %v2775 = vpop.f32.mrb[0].mxu0
        %v2776 = vpop.f32.mrb[0].mxu0
        %v2777 = vpop.f32.mrb[0].mxu0
        %2778 = vdwg.mxu0
        %v2783 = vunpack.c.l.b16 %v2322
        %v2784 = vunpack.c.l.b16 %v2323
        %v2785 = vunpack.c.l.b16 %v2324
        %v2786 = vunpack.c.l.b16 %v2325
        %v2787 = vpack.c.b16 %v2784, %v2783
        %v2788 = vpack.c.b16 %v2786, %v2785
        %2791 = vmatprep.subr.bf16.mxu0 0
        %2792 = vmatpush1.bf16.msra.mxu0 %v2787
        %2793 = vmatprep.subr.bf16.mxu0 0
        %2794 = vmatpush1.bf16.msra.mxu0 %v2788
        %2795 = vmatprep.subr.bf16.mxu0 0
        %2796 = vmatpush1.bf16.msra.mxu0 0
        %2797 = vmatprep.subr.bf16.mxu0 0
        %2798 = vmatpush1.bf16.msra.mxu0 0
        %2799 = vmatprep.subr.bf16.mxu0 0
        %2800 = vmatpush1.bf16.msra.mxu0 0
        %2801 = vmatprep.subr.bf16.mxu0 0
        %2802 = vmatpush1.bf16.msra.mxu0 0
        %2803 = vmatprep.subr.bf16.mxu0 0
        %2804 = vmatpush1.bf16.msra.mxu0 0
        %2805 = vmatprep.subr.bf16.mxu0 0
        %2806 = vmatpush1.bf16.msra.mxu0 0
        %2807 = vmatprep.subr.bf16.mxu0 0
        %2808 = vmatpush1.bf16.msra.mxu0 0
        %2809 = vmatprep.subr.bf16.mxu0 0
        %2810 = vmatpush1.bf16.msra.mxu0 0
        %2811 = vmatprep.subr.bf16.mxu0 0
        %2812 = vmatpush1.bf16.msra.mxu0 0
        %2813 = vmatprep.subr.bf16.mxu0 0
        %2814 = vmatpush1.bf16.msra.mxu0 0
        %2815 = vmatprep.subr.bf16.mxu0 0
        %2816 = vmatpush1.bf16.msra.mxu0 0
        %2817 = vmatprep.subr.bf16.mxu0 0
        %2818 = vmatpush1.bf16.msra.mxu0 0
        %2819 = vmatprep.subr.bf16.mxu0 0
        %2820 = vmatpush1.bf16.msra.mxu0 0
        %2821 = vmatprep.subr.bf16.mxu0 0
        %2822 = vmatpush1.bf16.msra.mxu0 0
        %2823 = vmatprep.mubr.bf16.mxu0 0
        %2824 = vmatmul.mubr.bf16.gmra.mrb[0].mxu0 %v2633
        %v2825 = vpop.f32.mrb[0].mxu0
        %v2826 = vadd.f32 %v2615, %v2825
        %v2827 = vpop.f32.mrb[0].mxu0
        %v2828 = vpop.f32.mrb[0].mxu0
        %v2829 = vpop.f32.mrb[0].mxu0
        %2830 = vdwg.mxu0
        %v2835 = vlaneseq
        %v2836 = vshrl.u32 %v2835, 7
        %v2837 = vsub.s32 0, %v2836
        %v2838 = vrot.slane %v2350, %v2837
        %v2839 = vlaneseq
        %v2840 = vshrl.u32 %v2839, 7
        %v2841 = vsub.s32 0, %v2840
        %v2842 = vrot.slane %v2351, %v2841
        %v2843 = vlaneseq
        %v2844 = vshrl.u32 %v2843, 7
        %v2845 = vsub.s32 0, %v2844
        %v2846 = vrot.slane %v2352, %v2845
        %v2847 = vlaneseq
        %v2848 = vshrl.u32 %v2847, 7
        %v2849 = vsub.s32 0, %v2848
        %v2850 = vrot.slane %v2353, %v2849
        %v2859 = vunpack.c.l.b16 %v2326
        %v2860 = vunpack.c.l.b16 %v2327
        %v2861 = vunpack.c.l.b16 %v2328
        %v2862 = vunpack.c.l.b16 %v2329
        %v2863 = vpack.c.b16 %v2860, %v2859
        %v2864 = vpack.c.b16 %v2862, %v2861
        %2867 = vmatprep.subr.bf16.mxu0 0
        %2868 = vmatpush1.bf16.msra.mxu0 %v2863
        %2869 = vmatprep.subr.bf16.mxu0 0
        %2870 = vmatpush1.bf16.msra.mxu0 %v2864
        %2871 = vmatprep.subr.bf16.mxu0 0
        %2872 = vmatpush1.bf16.msra.mxu0 0
        %2873 = vmatprep.subr.bf16.mxu0 0
        %2874 = vmatpush1.bf16.msra.mxu0 0
        %2875 = vmatprep.subr.bf16.mxu0 0
        %2876 = vmatpush1.bf16.msra.mxu0 0
        %2877 = vmatprep.subr.bf16.mxu0 0
        %2878 = vmatpush1.bf16.msra.mxu0 0
        %2879 = vmatprep.subr.bf16.mxu0 0
        %2880 = vmatpush1.bf16.msra.mxu0 0
        %2881 = vmatprep.subr.bf16.mxu0 0
        %2882 = vmatpush1.bf16.msra.mxu0 0
        %2883 = vmatprep.subr.bf16.mxu0 0
        %2884 = vmatpush1.bf16.msra.mxu0 0
        %2885 = vmatprep.subr.bf16.mxu0 0
        %2886 = vmatpush1.bf16.msra.mxu0 0
        %2887 = vmatprep.subr.bf16.mxu0 0
        %2888 = vmatpush1.bf16.msra.mxu0 0
        %2889 = vmatprep.subr.bf16.mxu0 0
        %2890 = vmatpush1.bf16.msra.mxu0 0
        %2891 = vmatprep.subr.bf16.mxu0 0
        %2892 = vmatpush1.bf16.msra.mxu0 0
        %2893 = vmatprep.subr.bf16.mxu0 0
        %2894 = vmatpush1.bf16.msra.mxu0 0
        %2895 = vmatprep.subr.bf16.mxu0 0
        %2896 = vmatpush1.bf16.msra.mxu0 0
        %2897 = vmatprep.subr.bf16.mxu0 0
        %2898 = vmatpush1.bf16.msra.mxu0 0
        %2899 = vmatprep.mubr.bf16.mxu0 0
        %2900 = vmatmul.mubr.bf16.gmra.mrb[0].mxu0 %v2633
        %v2901 = vpop.f32.mrb[0].mxu0
        %v2902 = vadd.f32 %v2838, %v2901
        %v2903 = vpop.f32.mrb[0].mxu0
        %v2904 = vpop.f32.mrb[0].mxu0
        %v2905 = vpop.f32.mrb[0].mxu0
        %2906 = vdwg.mxu0
        %v2911 = vunpack.c.l.b16 %v2330
        %v2912 = vunpack.c.l.b16 %v2331
        %v2913 = vunpack.c.l.b16 %v2332
        %v2914 = vunpack.c.l.b16 %v2333
        %v2915 = vpack.c.b16 %v2912, %v2911
        %v2916 = vpack.c.b16 %v2914, %v2913
        %2919 = vmatprep.subr.bf16.mxu0 0
        %2920 = vmatpush1.bf16.msra.mxu0 %v2915
        %2921 = vmatprep.subr.bf16.mxu0 0
        %2922 = vmatpush1.bf16.msra.mxu0 %v2916
        %2923 = vmatprep.subr.bf16.mxu0 0
        %2924 = vmatpush1.bf16.msra.mxu0 0
        %2925 = vmatprep.subr.bf16.mxu0 0
        %2926 = vmatpush1.bf16.msra.mxu0 0
        %2927 = vmatprep.subr.bf16.mxu0 0
        %2928 = vmatpush1.bf16.msra.mxu0 0
        %2929 = vmatprep.subr.bf16.mxu0 0
        %2930 = vmatpush1.bf16.msra.mxu0 0
        %2931 = vmatprep.subr.bf16.mxu0 0
        %2932 = vmatpush1.bf16.msra.mxu0 0
        %2933 = vmatprep.subr.bf16.mxu0 0
        %2934 = vmatpush1.bf16.msra.mxu0 0
        %2935 = vmatprep.subr.bf16.mxu0 0
        %2936 = vmatpush1.bf16.msra.mxu0 0
        %2937 = vmatprep.subr.bf16.mxu0 0
        %2938 = vmatpush1.bf16.msra.mxu0 0
        %2939 = vmatprep.subr.bf16.mxu0 0
        %2940 = vmatpush1.bf16.msra.mxu0 0
        %2941 = vmatprep.subr.bf16.mxu0 0
        %2942 = vmatpush1.bf16.msra.mxu0 0
        %2943 = vmatprep.subr.bf16.mxu0 0
        %2944 = vmatpush1.bf16.msra.mxu0 0
        %2945 = vmatprep.subr.bf16.mxu0 0
        %2946 = vmatpush1.bf16.msra.mxu0 0
        %2947 = vmatprep.subr.bf16.mxu0 0
        %2948 = vmatpush1.bf16.msra.mxu0 0
        %2949 = vmatprep.subr.bf16.mxu0 0
        %2950 = vmatpush1.bf16.msra.mxu0 0
        %2951 = vmatprep.mubr.bf16.mxu0 0
        %2952 = vmatmul.mubr.bf16.gmra.mrb[0].mxu0 %v2633
        %v2953 = vpop.f32.mrb[0].mxu0
        %v2954 = vadd.f32 %v2842, %v2953
        %v2955 = vpop.f32.mrb[0].mxu0
        %v2956 = vpop.f32.mrb[0].mxu0
        %v2957 = vpop.f32.mrb[0].mxu0
        %2958 = vdwg.mxu0
        %v2963 = vunpack.c.l.b16 %v2334
        %v2964 = vunpack.c.l.b16 %v2335
        %v2965 = vunpack.c.l.b16 %v2336
        %v2966 = vunpack.c.l.b16 %v2337
        %v2967 = vpack.c.b16 %v2964, %v2963
        %v2968 = vpack.c.b16 %v2966, %v2965
        %2971 = vmatprep.subr.bf16.mxu0 0
        %2972 = vmatpush1.bf16.msra.mxu0 %v2967
        %2973 = vmatprep.subr.bf16.mxu0 0
        %2974 = vmatpush1.bf16.msra.mxu0 %v2968
        %2975 = vmatprep.subr.bf16.mxu0 0
        %2976 = vmatpush1.bf16.msra.mxu0 0
        %2977 = vmatprep.subr.bf16.mxu0 0
        %2978 = vmatpush1.bf16.msra.mxu0 0
        %2979 = vmatprep.subr.bf16.mxu0 0
        %2980 = vmatpush1.bf16.msra.mxu0 0
        %2981 = vmatprep.subr.bf16.mxu0 0
        %2982 = vmatpush1.bf16.msra.mxu0 0
        %2983 = vmatprep.subr.bf16.mxu0 0
        %2984 = vmatpush1.bf16.msra.mxu0 0
        %2985 = vmatprep.subr.bf16.mxu0 0
        %2986 = vmatpush1.bf16.msra.mxu0 0
        %2987 = vmatprep.subr.bf16.mxu0 0
        %2988 = vmatpush1.bf16.msra.mxu0 0
        %2989 = vmatprep.subr.bf16.mxu0 0
        %2990 = vmatpush1.bf16.msra.mxu0 0
        %2991 = vmatprep.subr.bf16.mxu0 0
        %2992 = vmatpush1.bf16.msra.mxu0 0
        %2993 = vmatprep.subr.bf16.mxu0 0
        %2994 = vmatpush1.bf16.msra.mxu0 0
        %2995 = vmatprep.subr.bf16.mxu0 0
        %2996 = vmatpush1.bf16.msra.mxu0 0
        %2997 = vmatprep.subr.bf16.mxu0 0
        %2998 = vmatpush1.bf16.msra.mxu0 0
        %2999 = vmatprep.subr.bf16.mxu0 0
        %3000 = vmatpush1.bf16.msra.mxu0 0
        %3001 = vmatprep.subr.bf16.mxu0 0
        %3002 = vmatpush1.bf16.msra.mxu0 0
        %3003 = vmatprep.mubr.bf16.mxu0 0
        %3004 = vmatmul.mubr.bf16.gmra.mrb[0].mxu0 %v2633
        %v3005 = vpop.f32.mrb[0].mxu0
        %v3006 = vadd.f32 %v2846, %v3005
        %v3007 = vpop.f32.mrb[0].mxu0
        %v3008 = vpop.f32.mrb[0].mxu0
        %v3009 = vpop.f32.mrb[0].mxu0
        %3010 = vdwg.mxu0
        %v3015 = vunpack.c.l.b16 %v2338
        %v3016 = vunpack.c.l.b16 %v2339
        %v3017 = vunpack.c.l.b16 %v2340
        %v3018 = vunpack.c.l.b16 %v2341
        %v3019 = vpack.c.b16 %v3016, %v3015
        %v3020 = vpack.c.b16 %v3018, %v3017
        %3023 = vmatprep.subr.bf16.mxu0 0
        %3024 = vmatpush1.bf16.msra.mxu0 %v3019
        %3025 = vmatprep.subr.bf16.mxu0 0
        %3026 = vmatpush1.bf16.msra.mxu0 %v3020
        %3027 = vmatprep.subr.bf16.mxu0 0
        %3028 = vmatpush1.bf16.msra.mxu0 0
        %3029 = vmatprep.subr.bf16.mxu0 0
        %3030 = vmatpush1.bf16.msra.mxu0 0
        %3031 = vmatprep.subr.bf16.mxu0 0
        %3032 = vmatpush1.bf16.msra.mxu0 0
        %3033 = vmatprep.subr.bf16.mxu0 0
        %3034 = vmatpush1.bf16.msra.mxu0 0
        %3035 = vmatprep.subr.bf16.mxu0 0
        %3036 = vmatpush1.bf16.msra.mxu0 0
        %3037 = vmatprep.subr.bf16.mxu0 0
        %3038 = vmatpush1.bf16.msra.mxu0 0
        %3039 = vmatprep.subr.bf16.mxu0 0
        %3040 = vmatpush1.bf16.msra.mxu0 0
        %3041 = vmatprep.subr.bf16.mxu0 0
        %3042 = vmatpush1.bf16.msra.mxu0 0
        %3043 = vmatprep.subr.bf16.mxu0 0
        %3044 = vmatpush1.bf16.msra.mxu0 0
        %3045 = vmatprep.subr.bf16.mxu0 0
        %3046 = vmatpush1.bf16.msra.mxu0 0
        %3047 = vmatprep.subr.bf16.mxu0 0
        %3048 = vmatpush1.bf16.msra.mxu0 0
        %3049 = vmatprep.subr.bf16.mxu0 0
        %3050 = vmatpush1.bf16.msra.mxu0 0
        %3051 = vmatprep.subr.bf16.mxu0 0
        %3052 = vmatpush1.bf16.msra.mxu0 0
        %3053 = vmatprep.subr.bf16.mxu0 0
        %3054 = vmatpush1.bf16.msra.mxu0 0
        %3055 = vmatprep.mubr.bf16.mxu0 0
        %3056 = vmatmul.mubr.bf16.gmra.mrb[0].mxu0 %v2633
        %v3057 = vpop.f32.mrb[0].mxu0
        %v3058 = vadd.f32 %v2850, %v3057
        %v3059 = vpop.f32.mrb[0].mxu0
        %v3060 = vpop.f32.mrb[0].mxu0
        %v3061 = vpop.f32.mrb[0].mxu0
        %3062 = vdwg.mxu0
        %v3063 = vpack.c.bf16 %v2435, %v2435
        %v3064 = vpack.c.bf16 %v2487, %v2487
        %v3065 = vpack.c.bf16 %v2539, %v2539
        %v3066 = vpack.c.bf16 %v2591, %v2591
        %v3067 = vpack.c.bf16 %v2670, %v2670
        %v3068 = vpack.c.bf16 %v2722, %v2722
        %v3069 = vpack.c.bf16 %v2774, %v2774
        %v3070 = vpack.c.bf16 %v2826, %v2826
        %v3072 = vsel %vm1635, %v3063, 0
        %v3075 = vsel %vm1635, %v3067, 0
        %3077 = vmatprep.subr.bf16.mxu0 0
        %3078 = vmatpush1.bf16.xpose.msra.mxu0 %v3075
        %3079 = vmatprep.subr.bf16.mxu0 0
        %3080 = vmatpush1.bf16.xpose.msra.mxu0 0
        %3081 = vmatprep.subr.bf16.mxu0 0
        %3082 = vmatpush1.bf16.xpose.msra.mxu0 0
        %3083 = vmatprep.subr.bf16.mxu0 0
        %3084 = vmatpush1.bf16.xpose.msra.mxu0 0
        %3085 = vmatprep.subr.bf16.mxu0 0
        %3086 = vmatpush1.bf16.xpose.msra.mxu0 0
        %3087 = vmatprep.subr.bf16.mxu0 0
        %3088 = vmatpush1.bf16.xpose.msra.mxu0 0
        %3089 = vmatprep.subr.bf16.mxu0 0
        %3090 = vmatpush1.bf16.xpose.msra.mxu0 0
        %3091 = vmatprep.subr.bf16.mxu0 0
        %3092 = vmatpush1.bf16.xpose.msra.mxu0 0
        %3093 = vmatprep.subr.bf16.mxu0 0
        %3094 = vmatpush1.bf16.xpose.msra.mxu0 0
        %3095 = vmatprep.subr.bf16.mxu0 0
        %3096 = vmatpush1.bf16.xpose.msra.mxu0 0
        %3097 = vmatprep.subr.bf16.mxu0 0
        %3098 = vmatpush1.bf16.xpose.msra.mxu0 0
        %3099 = vmatprep.subr.bf16.mxu0 0
        %3100 = vmatpush1.bf16.xpose.msra.mxu0 0
        %3101 = vmatprep.subr.bf16.mxu0 0
        %3102 = vmatpush1.bf16.xpose.msra.mxu0 0
        %3103 = vmatprep.subr.bf16.mxu0 0
        %3104 = vmatpush1.bf16.xpose.msra.mxu0 0
        %3105 = vmatprep.subr.bf16.mxu0 0
        %3106 = vmatpush1.bf16.xpose.msra.mxu0 0
        %3107 = vmatprep.subr.bf16.mxu0 0
        %3108 = vmatpush1.bf16.xpose.msra.mxu0 0
        %3109 = vmatprep.mubr.bf16.mxu0 0
        %3110 = vmatmul.mubr.bf16.gmra.mrb[0].mxu0 %v3072
        %v3111 = vpop.f32.mrb[0].mxu0
        %v3112 = vadd.f32 0.0, %v3111
        %v3113 = vpop.f32.mrb[0].mxu0
        %v3114 = vpop.f32.mrb[0].mxu0
        %v3115 = vpop.f32.mrb[0].mxu0
        %3116 = vdwg.mxu0
        %v3118 = vsel %vm1635, %v3064, 0
        %v3121 = vsel %vm1635, %v3068, 0
        %3123 = vmatprep.subr.bf16.mxu0 0
        %3124 = vmatpush1.bf16.xpose.msra.mxu0 %v3121
        %3125 = vmatprep.subr.bf16.mxu0 0
        %3126 = vmatpush1.bf16.xpose.msra.mxu0 0
        %3127 = vmatprep.subr.bf16.mxu0 0
        %3128 = vmatpush1.bf16.xpose.msra.mxu0 0
        %3129 = vmatprep.subr.bf16.mxu0 0
        %3130 = vmatpush1.bf16.xpose.msra.mxu0 0
        %3131 = vmatprep.subr.bf16.mxu0 0
        %3132 = vmatpush1.bf16.xpose.msra.mxu0 0
        %3133 = vmatprep.subr.bf16.mxu0 0
        %3134 = vmatpush1.bf16.xpose.msra.mxu0 0
        %3135 = vmatprep.subr.bf16.mxu0 0
        %3136 = vmatpush1.bf16.xpose.msra.mxu0 0
        %3137 = vmatprep.subr.bf16.mxu0 0
        %3138 = vmatpush1.bf16.xpose.msra.mxu0 0
        %3139 = vmatprep.subr.bf16.mxu0 0
        %3140 = vmatpush1.bf16.xpose.msra.mxu0 0
        %3141 = vmatprep.subr.bf16.mxu0 0
        %3142 = vmatpush1.bf16.xpose.msra.mxu0 0
        %3143 = vmatprep.subr.bf16.mxu0 0
        %3144 = vmatpush1.bf16.xpose.msra.mxu0 0
        %3145 = vmatprep.subr.bf16.mxu0 0
        %3146 = vmatpush1.bf16.xpose.msra.mxu0 0
        %3147 = vmatprep.subr.bf16.mxu0 0
        %3148 = vmatpush1.bf16.xpose.msra.mxu0 0
        %3149 = vmatprep.subr.bf16.mxu0 0
        %3150 = vmatpush1.bf16.xpose.msra.mxu0 0
        %3151 = vmatprep.subr.bf16.mxu0 0
        %3152 = vmatpush1.bf16.xpose.msra.mxu0 0
        %3153 = vmatprep.subr.bf16.mxu0 0
        %3154 = vmatpush1.bf16.xpose.msra.mxu0 0
        %3155 = vmatprep.mubr.bf16.mxu0 0
        %3156 = vmatmul.mubr.bf16.gmra.mrb[0].mxu0 %v3118
        %v3157 = vpop.f32.mrb[0].mxu0
        %v3158 = vadd.f32 0.0, %v3157
        %v3159 = vpop.f32.mrb[0].mxu0
        %v3160 = vpop.f32.mrb[0].mxu0
        %v3161 = vpop.f32.mrb[0].mxu0
        %3162 = vdwg.mxu0
        %v3164 = vsel %vm1635, %v3065, 0
        %v3167 = vsel %vm1635, %v3069, 0
        %3169 = vmatprep.subr.bf16.mxu0 0
        %3170 = vmatpush1.bf16.xpose.msra.mxu0 %v3167
        %3171 = vmatprep.subr.bf16.mxu0 0
        %3172 = vmatpush1.bf16.xpose.msra.mxu0 0
        %3173 = vmatprep.subr.bf16.mxu0 0
        %3174 = vmatpush1.bf16.xpose.msra.mxu0 0
        %3175 = vmatprep.subr.bf16.mxu0 0
        %3176 = vmatpush1.bf16.xpose.msra.mxu0 0
        %3177 = vmatprep.subr.bf16.mxu0 0
        %3178 = vmatpush1.bf16.xpose.msra.mxu0 0
        %3179 = vmatprep.subr.bf16.mxu0 0
        %3180 = vmatpush1.bf16.xpose.msra.mxu0 0
        %3181 = vmatprep.subr.bf16.mxu0 0
        %3182 = vmatpush1.bf16.xpose.msra.mxu0 0
        %3183 = vmatprep.subr.bf16.mxu0 0
        %3184 = vmatpush1.bf16.xpose.msra.mxu0 0
        %3185 = vmatprep.subr.bf16.mxu0 0
        %3186 = vmatpush1.bf16.xpose.msra.mxu0 0
        %3187 = vmatprep.subr.bf16.mxu0 0
        %3188 = vmatpush1.bf16.xpose.msra.mxu0 0
        %3189 = vmatprep.subr.bf16.mxu0 0
        %3190 = vmatpush1.bf16.xpose.msra.mxu0 0
        %3191 = vmatprep.subr.bf16.mxu0 0
        %3192 = vmatpush1.bf16.xpose.msra.mxu0 0
        %3193 = vmatprep.subr.bf16.mxu0 0
        %3194 = vmatpush1.bf16.xpose.msra.mxu0 0
        %3195 = vmatprep.subr.bf16.mxu0 0
        %3196 = vmatpush1.bf16.xpose.msra.mxu0 0
        %3197 = vmatprep.subr.bf16.mxu0 0
        %3198 = vmatpush1.bf16.xpose.msra.mxu0 0
        %3199 = vmatprep.subr.bf16.mxu0 0
        %3200 = vmatpush1.bf16.xpose.msra.mxu0 0
        %3201 = vmatprep.mubr.bf16.mxu0 0
        %3202 = vmatmul.mubr.bf16.gmra.mrb[0].mxu0 %v3164
        %v3203 = vpop.f32.mrb[0].mxu0
        %v3204 = vadd.f32 0.0, %v3203
        %v3205 = vpop.f32.mrb[0].mxu0
        %v3206 = vpop.f32.mrb[0].mxu0
        %v3207 = vpop.f32.mrb[0].mxu0
        %3208 = vdwg.mxu0
        %v3210 = vsel %vm1635, %v3066, 0
        %v3213 = vsel %vm1635, %v3070, 0
        %3215 = vmatprep.subr.bf16.mxu0 0
        %3216 = vmatpush1.bf16.xpose.msra.mxu0 %v3213
        %3217 = vmatprep.subr.bf16.mxu0 0
        %3218 = vmatpush1.bf16.xpose.msra.mxu0 0
        %3219 = vmatprep.subr.bf16.mxu0 0
        %3220 = vmatpush1.bf16.xpose.msra.mxu0 0
        %3221 = vmatprep.subr.bf16.mxu0 0
        %3222 = vmatpush1.bf16.xpose.msra.mxu0 0
        %3223 = vmatprep.subr.bf16.mxu0 0
        %3224 = vmatpush1.bf16.xpose.msra.mxu0 0
        %3225 = vmatprep.subr.bf16.mxu0 0
        %3226 = vmatpush1.bf16.xpose.msra.mxu0 0
        %3227 = vmatprep.subr.bf16.mxu0 0
        %3228 = vmatpush1.bf16.xpose.msra.mxu0 0
        %3229 = vmatprep.subr.bf16.mxu0 0
        %3230 = vmatpush1.bf16.xpose.msra.mxu0 0
        %3231 = vmatprep.subr.bf16.mxu0 0
        %3232 = vmatpush1.bf16.xpose.msra.mxu0 0
        %3233 = vmatprep.subr.bf16.mxu0 0
        %3234 = vmatpush1.bf16.xpose.msra.mxu0 0
        %3235 = vmatprep.subr.bf16.mxu0 0
        %3236 = vmatpush1.bf16.xpose.msra.mxu0 0
        %3237 = vmatprep.subr.bf16.mxu0 0
        %3238 = vmatpush1.bf16.xpose.msra.mxu0 0
        %3239 = vmatprep.subr.bf16.mxu0 0
        %3240 = vmatpush1.bf16.xpose.msra.mxu0 0
        %3241 = vmatprep.subr.bf16.mxu0 0
        %3242 = vmatpush1.bf16.xpose.msra.mxu0 0
        %3243 = vmatprep.subr.bf16.mxu0 0
        %3244 = vmatpush1.bf16.xpose.msra.mxu0 0
        %3245 = vmatprep.subr.bf16.mxu0 0
        %3246 = vmatpush1.bf16.xpose.msra.mxu0 0
        %3247 = vmatprep.mubr.bf16.mxu0 0
        %3248 = vmatmul.mubr.bf16.gmra.mrb[0].mxu0 %v3210
        %v3249 = vpop.f32.mrb[0].mxu0
        %v3250 = vadd.f32 0.0, %v3249
        %v3251 = vpop.f32.mrb[0].mxu0
        %v3252 = vpop.f32.mrb[0].mxu0
        %v3253 = vpop.f32.mrb[0].mxu0
        %3254 = vdwg.mxu0
        %v3255 = vmul.f32 %v3112, 0.35355338
        %v3256 = vmul.f32 %v3158, 0.35355338
        %v3257 = vmul.f32 %v3204, 0.35355338
        %v3258 = vmul.f32 %v3250, 0.35355338
        %v3259 = vsel %vm1635, %v3255, -inf
        %3260 = vmax.xlane.f32.xlu0 %v3259
        %v3261 = vpop.xlane.xlu0 %3260
        %v3262 = vsel %vm1635, %v3256, -inf
        %3263 = vmax.xlane.f32.xlu0 %v3262
        %v3264 = vpop.xlane.xlu0 %3263
        %v3265 = vsel %vm1635, %v3257, -inf
        %3266 = vmax.xlane.f32.xlu0 %v3265
        %v3267 = vpop.xlane.xlu0 %3266
        %v3268 = vsel %vm1635, %v3258, -inf
        %3269 = vmax.xlane.f32.xlu0 %v3268
        %v3270 = vpop.xlane.xlu0 %3269
        %v3271 = vsub.f32 %v3255, %v3261
        %v3272 = vsub.f32 %v3256, %v3264
        %v3273 = vsub.f32 %v3257, %v3267
        %v3274 = vsub.f32 %v3258, %v3270
        %v3275 = vmul.f32 %v3271, 1.442695
        %v3276 = vpow.pop %v3275
        %v3277 = vmul.f32 %v3272, 1.442695
        %v3278 = vpow.pop %v3277
        %v3279 = vmul.f32 %v3273, 1.442695
        %v3280 = vpow.pop %v3279
        %v3281 = vmul.f32 %v3274, 1.442695
        %v3282 = vpow.pop %v3281
        %v3283 = vsel %vm1635, %v3276, 0.0
        %3284 = vadd.xlane.f32.xlu0 %v3283
        %v3285 = vpop.xlane.xlu0 %3284
        %v3286 = vsel %vm1635, %v3278, 0.0
        %3287 = vadd.xlane.f32.xlu0 %v3286
        %v3288 = vpop.xlane.xlu0 %3287
        %v3289 = vsel %vm1635, %v3280, 0.0
        %3290 = vadd.xlane.f32.xlu0 %v3289
        %v3291 = vpop.xlane.xlu0 %3290
        %v3292 = vsel %vm1635, %v3282, 0.0
        %3293 = vadd.xlane.f32.xlu0 %v3292
        %v3294 = vpop.xlane.xlu0 %3293
        %v3295 = vrcp.pop %v3285
        %v3296 = vrcp.pop %v3288
        %v3297 = vrcp.pop %v3291
        %v3298 = vrcp.pop %v3294
        %v3299 = vmul.f32 %v3276, %v3295
        %v3300 = vmul.f32 %v3278, %v3296
        %v3301 = vmul.f32 %v3280, %v3297
        %v3302 = vmul.f32 %v3282, %v3298
        %v3303 = vpack.c.bf16 %v3299, %v3299
        %v3304 = vpack.c.bf16 %v3300, %v3300
        %v3305 = vpack.c.bf16 %v3301, %v3301
        %v3306 = vpack.c.bf16 %v3302, %v3302
        %v3307 = vpack.c.bf16 %v2902, %v2902
        %v3308 = vpack.c.bf16 %v2954, %v2954
        %v3309 = vpack.c.bf16 %v3006, %v3006
        %v3310 = vpack.c.bf16 %v3058, %v3058
        %v3312 = vsel %vm1635, %v3303, 0
        %v3315 = vsel %vm1879, %v3307, 0
        %3317 = vmatprep.subr.bf16.mxu0 0
        %3318 = vmatpush1.bf16.msra.mxu0 %v3315
        %3319 = vmatprep.subr.bf16.mxu0 0
        %3320 = vmatpush1.bf16.msra.mxu0 0
        %3321 = vmatprep.subr.bf16.mxu0 0
        %3322 = vmatpush1.bf16.msra.mxu0 0
        %3323 = vmatprep.subr.bf16.mxu0 0
        %3324 = vmatpush1.bf16.msra.mxu0 0
        %3325 = vmatprep.subr.bf16.mxu0 0
        %3326 = vmatpush1.bf16.msra.mxu0 0
        %3327 = vmatprep.subr.bf16.mxu0 0
        %3328 = vmatpush1.bf16.msra.mxu0 0
        %3329 = vmatprep.subr.bf16.mxu0 0
        %3330 = vmatpush1.bf16.msra.mxu0 0
        %3331 = vmatprep.subr.bf16.mxu0 0
        %3332 = vmatpush1.bf16.msra.mxu0 0
        %3333 = vmatprep.subr.bf16.mxu0 0
        %3334 = vmatpush1.bf16.msra.mxu0 0
        %3335 = vmatprep.subr.bf16.mxu0 0
        %3336 = vmatpush1.bf16.msra.mxu0 0
        %3337 = vmatprep.subr.bf16.mxu0 0
        %3338 = vmatpush1.bf16.msra.mxu0 0
        %3339 = vmatprep.subr.bf16.mxu0 0
        %3340 = vmatpush1.bf16.msra.mxu0 0
        %3341 = vmatprep.subr.bf16.mxu0 0
        %3342 = vmatpush1.bf16.msra.mxu0 0
        %3343 = vmatprep.subr.bf16.mxu0 0
        %3344 = vmatpush1.bf16.msra.mxu0 0
        %3345 = vmatprep.subr.bf16.mxu0 0
        %3346 = vmatpush1.bf16.msra.mxu0 0
        %3347 = vmatprep.subr.bf16.mxu0 0
        %3348 = vmatpush1.bf16.msra.mxu0 0
        %3349 = vmatprep.mubr.bf16.mxu0 0
        %3350 = vmatmul.mubr.bf16.gmra.mrb[0].mxu0 %v3312
        %v3351 = vpop.f32.mrb[0].mxu0
        %v3352 = vadd.f32 0.0, %v3351
        %v3353 = vpop.f32.mrb[0].mxu0
        %v3354 = vpop.f32.mrb[0].mxu0
        %v3355 = vpop.f32.mrb[0].mxu0
        %3356 = vdwg.mxu0
        %v3358 = vsel %vm1635, %v3304, 0
        %v3361 = vsel %vm1879, %v3308, 0
        %3363 = vmatprep.subr.bf16.mxu0 0
        %3364 = vmatpush1.bf16.msra.mxu0 %v3361
        %3365 = vmatprep.subr.bf16.mxu0 0
        %3366 = vmatpush1.bf16.msra.mxu0 0
        %3367 = vmatprep.subr.bf16.mxu0 0
        %3368 = vmatpush1.bf16.msra.mxu0 0
        %3369 = vmatprep.subr.bf16.mxu0 0
        %3370 = vmatpush1.bf16.msra.mxu0 0
        %3371 = vmatprep.subr.bf16.mxu0 0
        %3372 = vmatpush1.bf16.msra.mxu0 0
        %3373 = vmatprep.subr.bf16.mxu0 0
        %3374 = vmatpush1.bf16.msra.mxu0 0
        %3375 = vmatprep.subr.bf16.mxu0 0
        %3376 = vmatpush1.bf16.msra.mxu0 0
        %3377 = vmatprep.subr.bf16.mxu0 0
        %3378 = vmatpush1.bf16.msra.mxu0 0
        %3379 = vmatprep.subr.bf16.mxu0 0
        %3380 = vmatpush1.bf16.msra.mxu0 0
        %3381 = vmatprep.subr.bf16.mxu0 0
        %3382 = vmatpush1.bf16.msra.mxu0 0
        %3383 = vmatprep.subr.bf16.mxu0 0
        %3384 = vmatpush1.bf16.msra.mxu0 0
        %3385 = vmatprep.subr.bf16.mxu0 0
        %3386 = vmatpush1.bf16.msra.mxu0 0
        %3387 = vmatprep.subr.bf16.mxu0 0
        %3388 = vmatpush1.bf16.msra.mxu0 0
        %3389 = vmatprep.subr.bf16.mxu0 0
        %3390 = vmatpush1.bf16.msra.mxu0 0
        %3391 = vmatprep.subr.bf16.mxu0 0
        %3392 = vmatpush1.bf16.msra.mxu0 0
        %3393 = vmatprep.subr.bf16.mxu0 0
        %3394 = vmatpush1.bf16.msra.mxu0 0
        %3395 = vmatprep.mubr.bf16.mxu0 0
        %3396 = vmatmul.mubr.bf16.gmra.mrb[0].mxu0 %v3358
        %v3397 = vpop.f32.mrb[0].mxu0
        %v3398 = vadd.f32 0.0, %v3397
        %v3399 = vpop.f32.mrb[0].mxu0
        %v3400 = vpop.f32.mrb[0].mxu0
        %v3401 = vpop.f32.mrb[0].mxu0
        %3402 = vdwg.mxu0
        %v3404 = vsel %vm1635, %v3305, 0
        %v3407 = vsel %vm1879, %v3309, 0
        %3409 = vmatprep.subr.bf16.mxu0 0
        %3410 = vmatpush1.bf16.msra.mxu0 %v3407
        %3411 = vmatprep.subr.bf16.mxu0 0
        %3412 = vmatpush1.bf16.msra.mxu0 0
        %3413 = vmatprep.subr.bf16.mxu0 0
        %3414 = vmatpush1.bf16.msra.mxu0 0
        %3415 = vmatprep.subr.bf16.mxu0 0
        %3416 = vmatpush1.bf16.msra.mxu0 0
        %3417 = vmatprep.subr.bf16.mxu0 0
        %3418 = vmatpush1.bf16.msra.mxu0 0
        %3419 = vmatprep.subr.bf16.mxu0 0
        %3420 = vmatpush1.bf16.msra.mxu0 0
        %3421 = vmatprep.subr.bf16.mxu0 0
        %3422 = vmatpush1.bf16.msra.mxu0 0
        %3423 = vmatprep.subr.bf16.mxu0 0
        %3424 = vmatpush1.bf16.msra.mxu0 0
        %3425 = vmatprep.subr.bf16.mxu0 0
        %3426 = vmatpush1.bf16.msra.mxu0 0
        %3427 = vmatprep.subr.bf16.mxu0 0
        %3428 = vmatpush1.bf16.msra.mxu0 0
        %3429 = vmatprep.subr.bf16.mxu0 0
        %3430 = vmatpush1.bf16.msra.mxu0 0
        %3431 = vmatprep.subr.bf16.mxu0 0
        %3432 = vmatpush1.bf16.msra.mxu0 0
        %3433 = vmatprep.subr.bf16.mxu0 0
        %3434 = vmatpush1.bf16.msra.mxu0 0
        %3435 = vmatprep.subr.bf16.mxu0 0
        %3436 = vmatpush1.bf16.msra.mxu0 0
        %3437 = vmatprep.subr.bf16.mxu0 0
        %3438 = vmatpush1.bf16.msra.mxu0 0
        %3439 = vmatprep.subr.bf16.mxu0 0
        %3440 = vmatpush1.bf16.msra.mxu0 0
        %3441 = vmatprep.mubr.bf16.mxu0 0
        %3442 = vmatmul.mubr.bf16.gmra.mrb[0].mxu0 %v3404
        %v3443 = vpop.f32.mrb[0].mxu0
        %v3444 = vadd.f32 0.0, %v3443
        %v3445 = vpop.f32.mrb[0].mxu0
        %v3446 = vpop.f32.mrb[0].mxu0
        %v3447 = vpop.f32.mrb[0].mxu0
        %3448 = vdwg.mxu0
        %v3450 = vsel %vm1635, %v3306, 0
        %v3453 = vsel %vm1879, %v3310, 0
        %3455 = vmatprep.subr.bf16.mxu0 0
        %3456 = vmatpush1.bf16.msra.mxu0 %v3453
        %3457 = vmatprep.subr.bf16.mxu0 0
        %3458 = vmatpush1.bf16.msra.mxu0 0
        %3459 = vmatprep.subr.bf16.mxu0 0
        %3460 = vmatpush1.bf16.msra.mxu0 0
        %3461 = vmatprep.subr.bf16.mxu0 0
        %3462 = vmatpush1.bf16.msra.mxu0 0
        %3463 = vmatprep.subr.bf16.mxu0 0
        %3464 = vmatpush1.bf16.msra.mxu0 0
        %3465 = vmatprep.subr.bf16.mxu0 0
        %3466 = vmatpush1.bf16.msra.mxu0 0
        %3467 = vmatprep.subr.bf16.mxu0 0
        %3468 = vmatpush1.bf16.msra.mxu0 0
        %3469 = vmatprep.subr.bf16.mxu0 0
        %3470 = vmatpush1.bf16.msra.mxu0 0
        %3471 = vmatprep.subr.bf16.mxu0 0
        %3472 = vmatpush1.bf16.msra.mxu0 0
        %3473 = vmatprep.subr.bf16.mxu0 0
        %3474 = vmatpush1.bf16.msra.mxu0 0
        %3475 = vmatprep.subr.bf16.mxu0 0
        %3476 = vmatpush1.bf16.msra.mxu0 0
        %3477 = vmatprep.subr.bf16.mxu0 0
        %3478 = vmatpush1.bf16.msra.mxu0 0
        %3479 = vmatprep.subr.bf16.mxu0 0
        %3480 = vmatpush1.bf16.msra.mxu0 0
        %3481 = vmatprep.subr.bf16.mxu0 0
        %3482 = vmatpush1.bf16.msra.mxu0 0
        %3483 = vmatprep.subr.bf16.mxu0 0
        %3484 = vmatpush1.bf16.msra.mxu0 0
        %3485 = vmatprep.subr.bf16.mxu0 0
        %3486 = vmatpush1.bf16.msra.mxu0 0
        %3487 = vmatprep.mubr.bf16.mxu0 0
        %3488 = vmatmul.mubr.bf16.gmra.mrb[0].mxu0 %v3450
        %v3489 = vpop.f32.mrb[0].mxu0
        %v3490 = vadd.f32 0.0, %v3489
        %v3491 = vpop.f32.mrb[0].mxu0
        %v3492 = vpop.f32.mrb[0].mxu0
        %v3493 = vpop.f32.mrb[0].mxu0
        %3494 = vdwg.mxu0
        %v3495 = vpack.c.bf16 %v3352, %v3352
        %v3496 = vpack.c.bf16 %v3398, %v3398
        %v3497 = vpack.c.bf16 %v3444, %v3444
        %v3498 = vpack.c.bf16 %v3490, %v3490
        %v3500 = vsel %vm1635, %v3495, 0
        %v3503 = vsel %vm1879, %v2354, 0
        %3505 = vmatprep.subr.bf16.mxu0 0
        %3506 = vmatpush1.bf16.msra.mxu0 %v3503
        %3507 = vmatprep.subr.bf16.mxu0 0
        %3508 = vmatpush1.bf16.msra.mxu0 0
        %3509 = vmatprep.subr.bf16.mxu0 0
        %3510 = vmatpush1.bf16.msra.mxu0 0
        %3511 = vmatprep.subr.bf16.mxu0 0
        %3512 = vmatpush1.bf16.msra.mxu0 0
        %3513 = vmatprep.subr.bf16.mxu0 0
        %3514 = vmatpush1.bf16.msra.mxu0 0
        %3515 = vmatprep.subr.bf16.mxu0 0
        %3516 = vmatpush1.bf16.msra.mxu0 0
        %3517 = vmatprep.subr.bf16.mxu0 0
        %3518 = vmatpush1.bf16.msra.mxu0 0
        %3519 = vmatprep.subr.bf16.mxu0 0
        %3520 = vmatpush1.bf16.msra.mxu0 0
        %3521 = vmatprep.subr.bf16.mxu0 0
        %3522 = vmatpush1.bf16.msra.mxu0 0
        %3523 = vmatprep.subr.bf16.mxu0 0
        %3524 = vmatpush1.bf16.msra.mxu0 0
        %3525 = vmatprep.subr.bf16.mxu0 0
        %3526 = vmatpush1.bf16.msra.mxu0 0
        %3527 = vmatprep.subr.bf16.mxu0 0
        %3528 = vmatpush1.bf16.msra.mxu0 0
        %3529 = vmatprep.subr.bf16.mxu0 0
        %3530 = vmatpush1.bf16.msra.mxu0 0
        %3531 = vmatprep.subr.bf16.mxu0 0
        %3532 = vmatpush1.bf16.msra.mxu0 0
        %3533 = vmatprep.subr.bf16.mxu0 0
        %3534 = vmatpush1.bf16.msra.mxu0 0
        %3535 = vmatprep.subr.bf16.mxu0 0
        %3536 = vmatpush1.bf16.msra.mxu0 0
        %3537 = vmatprep.mubr.bf16.mxu0 0
        %3538 = vmatmul.mubr.bf16.gmra.mrb[0].mxu0 %v3500
        %v3539 = vpop.f32.mrb[0].mxu0
        %v3540 = vadd.f32 0.0, %v3539
        %v3541 = vpop.f32.mrb[0].mxu0
        %v3542 = vpop.f32.mrb[0].mxu0
        %v3543 = vpop.f32.mrb[0].mxu0
        %3544 = vdwg.mxu0
        %v3546 = vsel %vm1635, %v3496, 0
        %v3549 = vsel %vm1879, %v2355, 0
        %3551 = vmatprep.subr.bf16.mxu0 0
        %3552 = vmatpush1.bf16.msra.mxu0 %v3549
        %3553 = vmatprep.subr.bf16.mxu0 0
        %3554 = vmatpush1.bf16.msra.mxu0 0
        %3555 = vmatprep.subr.bf16.mxu0 0
        %3556 = vmatpush1.bf16.msra.mxu0 0
        %3557 = vmatprep.subr.bf16.mxu0 0
        %3558 = vmatpush1.bf16.msra.mxu0 0
        %3559 = vmatprep.subr.bf16.mxu0 0
        %3560 = vmatpush1.bf16.msra.mxu0 0
        %3561 = vmatprep.subr.bf16.mxu0 0
        %3562 = vmatpush1.bf16.msra.mxu0 0
        %3563 = vmatprep.subr.bf16.mxu0 0
        %3564 = vmatpush1.bf16.msra.mxu0 0
        %3565 = vmatprep.subr.bf16.mxu0 0
        %3566 = vmatpush1.bf16.msra.mxu0 0
        %3567 = vmatprep.subr.bf16.mxu0 0
        %3568 = vmatpush1.bf16.msra.mxu0 0
        %3569 = vmatprep.subr.bf16.mxu0 0
        %3570 = vmatpush1.bf16.msra.mxu0 0
        %3571 = vmatprep.subr.bf16.mxu0 0
        %3572 = vmatpush1.bf16.msra.mxu0 0
        %3573 = vmatprep.subr.bf16.mxu0 0
        %3574 = vmatpush1.bf16.msra.mxu0 0
        %3575 = vmatprep.subr.bf16.mxu0 0
        %3576 = vmatpush1.bf16.msra.mxu0 0
        %3577 = vmatprep.subr.bf16.mxu0 0
        %3578 = vmatpush1.bf16.msra.mxu0 0
        %3579 = vmatprep.subr.bf16.mxu0 0
        %3580 = vmatpush1.bf16.msra.mxu0 0
        %3581 = vmatprep.subr.bf16.mxu0 0
        %3582 = vmatpush1.bf16.msra.mxu0 0
        %3583 = vmatprep.mubr.bf16.mxu0 0
        %3584 = vmatmul.mubr.bf16.gmra.mrb[0].mxu0 %v3546
        %v3585 = vpop.f32.mrb[0].mxu0
        %v3586 = vadd.f32 0.0, %v3585
        %v3587 = vpop.f32.mrb[0].mxu0
        %v3588 = vpop.f32.mrb[0].mxu0
        %v3589 = vpop.f32.mrb[0].mxu0
        %3590 = vdwg.mxu0
        %v3592 = vsel %vm1635, %v3497, 0
        %v3595 = vsel %vm1879, %v2356, 0
        %3597 = vmatprep.subr.bf16.mxu0 0
        %3598 = vmatpush1.bf16.msra.mxu0 %v3595
        %3599 = vmatprep.subr.bf16.mxu0 0
        %3600 = vmatpush1.bf16.msra.mxu0 0
        %3601 = vmatprep.subr.bf16.mxu0 0
        %3602 = vmatpush1.bf16.msra.mxu0 0
        %3603 = vmatprep.subr.bf16.mxu0 0
        %3604 = vmatpush1.bf16.msra.mxu0 0
        %3605 = vmatprep.subr.bf16.mxu0 0
        %3606 = vmatpush1.bf16.msra.mxu0 0
        %3607 = vmatprep.subr.bf16.mxu0 0
        %3608 = vmatpush1.bf16.msra.mxu0 0
        %3609 = vmatprep.subr.bf16.mxu0 0
        %3610 = vmatpush1.bf16.msra.mxu0 0
        %3611 = vmatprep.subr.bf16.mxu0 0
        %3612 = vmatpush1.bf16.msra.mxu0 0
        %3613 = vmatprep.subr.bf16.mxu0 0
        %3614 = vmatpush1.bf16.msra.mxu0 0
        %3615 = vmatprep.subr.bf16.mxu0 0
        %3616 = vmatpush1.bf16.msra.mxu0 0
        %3617 = vmatprep.subr.bf16.mxu0 0
        %3618 = vmatpush1.bf16.msra.mxu0 0
        %3619 = vmatprep.subr.bf16.mxu0 0
        %3620 = vmatpush1.bf16.msra.mxu0 0
        %3621 = vmatprep.subr.bf16.mxu0 0
        %3622 = vmatpush1.bf16.msra.mxu0 0
        %3623 = vmatprep.subr.bf16.mxu0 0
        %3624 = vmatpush1.bf16.msra.mxu0 0
        %3625 = vmatprep.subr.bf16.mxu0 0
        %3626 = vmatpush1.bf16.msra.mxu0 0
        %3627 = vmatprep.subr.bf16.mxu0 0
        %3628 = vmatpush1.bf16.msra.mxu0 0
        %3629 = vmatprep.mubr.bf16.mxu0 0
        %3630 = vmatmul.mubr.bf16.gmra.mrb[0].mxu0 %v3592
        %v3631 = vpop.f32.mrb[0].mxu0
        %v3632 = vadd.f32 0.0, %v3631
        %v3633 = vpop.f32.mrb[0].mxu0
        %v3634 = vpop.f32.mrb[0].mxu0
        %v3635 = vpop.f32.mrb[0].mxu0
        %3636 = vdwg.mxu0
        %v3638 = vsel %vm1635, %v3498, 0
        %v3641 = vsel %vm1879, %v2357, 0
        %3643 = vmatprep.subr.bf16.mxu0 0
        %3644 = vmatpush1.bf16.msra.mxu0 %v3641
        %3645 = vmatprep.subr.bf16.mxu0 0
        %3646 = vmatpush1.bf16.msra.mxu0 0
        %3647 = vmatprep.subr.bf16.mxu0 0
        %3648 = vmatpush1.bf16.msra.mxu0 0
        %3649 = vmatprep.subr.bf16.mxu0 0
        %3650 = vmatpush1.bf16.msra.mxu0 0
        %3651 = vmatprep.subr.bf16.mxu0 0
        %3652 = vmatpush1.bf16.msra.mxu0 0
        %3653 = vmatprep.subr.bf16.mxu0 0
        %3654 = vmatpush1.bf16.msra.mxu0 0
        %3655 = vmatprep.subr.bf16.mxu0 0
        %3656 = vmatpush1.bf16.msra.mxu0 0
        %3657 = vmatprep.subr.bf16.mxu0 0
        %3658 = vmatpush1.bf16.msra.mxu0 0
        %3659 = vmatprep.subr.bf16.mxu0 0
        %3660 = vmatpush1.bf16.msra.mxu0 0
        %3661 = vmatprep.subr.bf16.mxu0 0
        %3662 = vmatpush1.bf16.msra.mxu0 0
        %3663 = vmatprep.subr.bf16.mxu0 0
        %3664 = vmatpush1.bf16.msra.mxu0 0
        %3665 = vmatprep.subr.bf16.mxu0 0
        %3666 = vmatpush1.bf16.msra.mxu0 0
        %3667 = vmatprep.subr.bf16.mxu0 0
        %3668 = vmatpush1.bf16.msra.mxu0 0
        %3669 = vmatprep.subr.bf16.mxu0 0
        %3670 = vmatpush1.bf16.msra.mxu0 0
        %3671 = vmatprep.subr.bf16.mxu0 0
        %3672 = vmatpush1.bf16.msra.mxu0 0
        %3673 = vmatprep.subr.bf16.mxu0 0
        %3674 = vmatpush1.bf16.msra.mxu0 0
        %3675 = vmatprep.mubr.bf16.mxu0 0
        %3676 = vmatmul.mubr.bf16.gmra.mrb[0].mxu0 %v3638
        %v3677 = vpop.f32.mrb[0].mxu0
        %v3678 = vadd.f32 0.0, %v3677
        %v3679 = vpop.f32.mrb[0].mxu0
        %v3680 = vpop.f32.mrb[0].mxu0
        %v3681 = vpop.f32.mrb[0].mxu0
        %3682 = vdwg.mxu0
        %v3683 = vsel %vm963, %v3540, 0.0
        %v3684 = vsel %vm963, %v3586, 0.0
        %v3685 = vadd.f32 %v3683, %v3684
        %v3686 = vsel %vm963, %v3632, 0.0
        %v3687 = vadd.f32 %v3685, %v3686
        %v3688 = vsel %vm963, %v3678, 0.0
        %v3689 = vadd.f32 %v3687, %v3688
        %v3691 = vlaneseq
        %v3692 = vshrl.u32 %v3691, 7
        %v3693 = vsub.s32 0, %v3692
        %v3694 = vrot.slane %v2358, %v3693
        %v3696 = vadd.f32 %v3689, %v3694
        %v3697 = vadd.f32 %v2293, %v3696
        %v3698 = vld [vmem:[%s24] sm:$0x1]
        %v3699 = vld [vmem:[%s25] sm:$0x1]
        %v3700 = vsel %vm963, %v3697, 0.0
        %3701 = vadd.xlane.f32.xlu0 %v3700
        %v3702 = vpop.xlane.xlu0 %3701
        %v3703 = vmul.f32 %v3702, %v2269
        %v3704 = vsub.f32 %v3697, %v3703
        %v3705 = vmul.f32 %v3704, %v3704
        %v3706 = vsel %vm963, %v3705, 0.0
        %3707 = vadd.xlane.f32.xlu0 %v3706
        %v3708 = vpop.xlane.xlu0 %3707
        %v3709 = vmul.f32 %v3708, %v2269
        %v3710 = vadd.f32 %v3709, 1e-05
        %v3711 = vrsqrt.pop %v3710
        %v3712 = vmul.f32 %v3704, %v3711
        %v3714 = vlaneseq
        %v3715 = vshrl.u32 %v3714, 7
        %v3716 = vsub.s32 0, %v3715
        %v3717 = vrot.slane %v3698, %v3716
        %v3719 = vmul.f32 %v3712, %v3717
        %v3721 = vlaneseq
        %v3722 = vshrl.u32 %v3721, 7
        %v3723 = vsub.s32 0, %v3722
        %v3724 = vrot.slane %v3699, %v3723
        %v3726 = vadd.f32 %v3719, %v3724
        %v3727 = vpack.c.bf16 %v3726, %v3726
        %v3728 = vld [vmem:[%s18] sm:$0xf]
        %v3729 = vld [vmem:[%s18 + $0x4] sm:$0xf]
        %v3730 = vld [vmem:[%s18 + $0x8] sm:$0xf]
        %v3731 = vld [vmem:[%s18 + $0xc] sm:$0xf]
        %v3732 = vld [vmem:[%s19] sm:$0x1]
        %v3734 = vlaneseq
        %v3735 = vshrl.u32 %v3734, 7
        %v3736 = vsub.s32 0, %v3735
        %v3737 = vrot.slane %v3732, %v3736
        %v3743 = vunpack.c.l.b16 %v3728
        %v3744 = vunpack.c.l.b16 %v3729
        %v3745 = vunpack.c.l.b16 %v3730
        %v3746 = vunpack.c.l.b16 %v3731
        %v3747 = vpack.c.b16 %v3744, %v3743
        %v3748 = vpack.c.b16 %v3746, %v3745
        %v3752 = vsel %vm963, %v3727, 0
        %3754 = vmatprep.subr.bf16.mxu0 0
        %3755 = vmatpush1.bf16.msra.mxu0 %v3747
        %3756 = vmatprep.subr.bf16.mxu0 0
        %3757 = vmatpush1.bf16.msra.mxu0 %v3748
        %3758 = vmatprep.subr.bf16.mxu0 0
        %3759 = vmatpush1.bf16.msra.mxu0 0
        %3760 = vmatprep.subr.bf16.mxu0 0
        %3761 = vmatpush1.bf16.msra.mxu0 0
        %3762 = vmatprep.subr.bf16.mxu0 0
        %3763 = vmatpush1.bf16.msra.mxu0 0
        %3764 = vmatprep.subr.bf16.mxu0 0
        %3765 = vmatpush1.bf16.msra.mxu0 0
        %3766 = vmatprep.subr.bf16.mxu0 0
        %3767 = vmatpush1.bf16.msra.mxu0 0
        %3768 = vmatprep.subr.bf16.mxu0 0
        %3769 = vmatpush1.bf16.msra.mxu0 0
        %3770 = vmatprep.subr.bf16.mxu0 0
        %3771 = vmatpush1.bf16.msra.mxu0 0
        %3772 = vmatprep.subr.bf16.mxu0 0
        %3773 = vmatpush1.bf16.msra.mxu0 0
        %3774 = vmatprep.subr.bf16.mxu0 0
        %3775 = vmatpush1.bf16.msra.mxu0 0
        %3776 = vmatprep.subr.bf16.mxu0 0
        %3777 = vmatpush1.bf16.msra.mxu0 0
        %3778 = vmatprep.subr.bf16.mxu0 0
        %3779 = vmatpush1.bf16.msra.mxu0 0
        %3780 = vmatprep.subr.bf16.mxu0 0
        %3781 = vmatpush1.bf16.msra.mxu0 0
        %3782 = vmatprep.subr.bf16.mxu0 0
        %3783 = vmatpush1.bf16.msra.mxu0 0
        %3784 = vmatprep.subr.bf16.mxu0 0
        %3785 = vmatpush1.bf16.msra.mxu0 0
        %3786 = vmatprep.mubr.bf16.mxu0 0
        %3787 = vmatmul.mubr.bf16.gmra.mrb[0].mxu0 %v3752
        %v3788 = vpop.f32.mrb[0].mxu0
        %v3789 = vadd.f32 %v3737, %v3788
        %v3790 = vpop.f32.mrb[0].mxu0
        %v3791 = vpop.f32.mrb[0].mxu0
        %v3792 = vpop.f32.mrb[0].mxu0
        %3793 = vdwg.mxu0
        %v3794 = vmax.f32 %v3789, 0.0
        %v3795 = vpack.c.bf16 %v3794, %v3794
        %v3796 = vld [vmem:[%s20] sm:$0xf]
        %v3797 = vld [vmem:[%s20 + $0x4] sm:$0xf]
        %v3798 = vld [vmem:[%s20 + $0x8] sm:$0xf]
        %v3799 = vld [vmem:[%s20 + $0xc] sm:$0xf]
        %v3800 = vld [vmem:[%s20 + $0x10] sm:$0xf]
        %v3801 = vld [vmem:[%s20 + $0x14] sm:$0xf]
        %v3802 = vld [vmem:[%s20 + $0x18] sm:$0xf]
        %v3803 = vld [vmem:[%s20 + $0x1c] sm:$0xf]
        %v3804 = vld [vmem:[%s21] sm:$0x1]
        %v3806 = vlaneseq
        %v3807 = vshrl.u32 %v3806, 7
        %v3808 = vsub.s32 0, %v3807
        %v3809 = vrot.slane %v3804, %v3808
        %v3819 = vunpack.c.l.b16 %v3796
        %v3820 = vunpack.c.l.b16 %v3797
        %v3821 = vunpack.c.l.b16 %v3798
        %v3822 = vunpack.c.l.b16 %v3799
        %v3823 = vunpack.c.l.b16 %v3800
        %v3824 = vunpack.c.l.b16 %v3801
        %v3825 = vunpack.c.l.b16 %v3802
        %v3826 = vunpack.c.l.b16 %v3803
        %v3827 = vpack.c.b16 %v3820, %v3819
        %v3828 = vpack.c.b16 %v3822, %v3821
        %v3829 = vpack.c.b16 %v3824, %v3823
        %v3830 = vpack.c.b16 %v3826, %v3825
        %vm3835 = vcmask 523264
        %v3837 = vsel %vm3835, %v3795, 0
        %3839 = vmatprep.subr.bf16.mxu0 0
        %3840 = vmatpush1.bf16.msra.mxu0 %v3827
        %3841 = vmatprep.subr.bf16.mxu0 0
        %3842 = vmatpush1.bf16.msra.mxu0 %v3828
        %3843 = vmatprep.subr.bf16.mxu0 0
        %3844 = vmatpush1.bf16.msra.mxu0 %v3829
        %3845 = vmatprep.subr.bf16.mxu0 0
        %3846 = vmatpush1.bf16.msra.mxu0 %v3830
        %3847 = vmatprep.subr.bf16.mxu0 0
        %3848 = vmatpush1.bf16.msra.mxu0 0
        %3849 = vmatprep.subr.bf16.mxu0 0
        %3850 = vmatpush1.bf16.msra.mxu0 0
        %3851 = vmatprep.subr.bf16.mxu0 0
        %3852 = vmatpush1.bf16.msra.mxu0 0
        %3853 = vmatprep.subr.bf16.mxu0 0
        %3854 = vmatpush1.bf16.msra.mxu0 0
        %3855 = vmatprep.subr.bf16.mxu0 0
        %3856 = vmatpush1.bf16.msra.mxu0 0
        %3857 = vmatprep.subr.bf16.mxu0 0
        %3858 = vmatpush1.bf16.msra.mxu0 0
        %3859 = vmatprep.subr.bf16.mxu0 0
        %3860 = vmatpush1.bf16.msra.mxu0 0
        %3861 = vmatprep.subr.bf16.mxu0 0
        %3862 = vmatpush1.bf16.msra.mxu0 0
        %3863 = vmatprep.subr.bf16.mxu0 0
        %3864 = vmatpush1.bf16.msra.mxu0 0
        %3865 = vmatprep.subr.bf16.mxu0 0
        %3866 = vmatpush1.bf16.msra.mxu0 0
        %3867 = vmatprep.subr.bf16.mxu0 0
        %3868 = vmatpush1.bf16.msra.mxu0 0
        %3869 = vmatprep.subr.bf16.mxu0 0
        %3870 = vmatpush1.bf16.msra.mxu0 0
        %3871 = vmatprep.mubr.bf16.mxu0 0
        %3872 = vmatmul.mubr.bf16.gmra.mrb[0].mxu0 %v3837
        %v3873 = vpop.f32.mrb[0].mxu0
        %v3874 = vadd.f32 %v3809, %v3873
        %v3875 = vpop.f32.mrb[0].mxu0
        %v3876 = vpop.f32.mrb[0].mxu0
        %v3877 = vpop.f32.mrb[0].mxu0
        %3878 = vdwg.mxu0
        %v3879 = vadd.f32 %v3726, %v3874
        %v3880 = vld [vmem:[%s26] sm:$0x1]
        %v3881 = vld [vmem:[%s27] sm:$0x1]
        %v3882 = vsel %vm963, %v3879, 0.0
        %3883 = vadd.xlane.f32.xlu0 %v3882
        %v3884 = vpop.xlane.xlu0 %3883
        %v3885 = vmul.f32 %v3884, %v2269
        %v3886 = vsub.f32 %v3879, %v3885
        %v3887 = vmul.f32 %v3886, %v3886
        %v3888 = vsel %vm963, %v3887, 0.0
        %3889 = vadd.xlane.f32.xlu0 %v3888
        %v3890 = vpop.xlane.xlu0 %3889
        %v3891 = vmul.f32 %v3890, %v2269
        %v3892 = vadd.f32 %v3891, 1e-05
        %v3893 = vrsqrt.pop %v3892
        %v3894 = vmul.f32 %v3886, %v3893
        %v3896 = vlaneseq
        %v3897 = vshrl.u32 %v3896, 7
        %v3898 = vsub.s32 0, %v3897
        %v3899 = vrot.slane %v3880, %v3898
        %v3901 = vmul.f32 %v3894, %v3899
        %v3903 = vlaneseq
        %v3904 = vshrl.u32 %v3903, 7
        %v3905 = vsub.s32 0, %v3904
        %v3906 = vrot.slane %v3881, %v3905
        %v3908 = vadd.f32 %v3901, %v3906
        %3909 = vst.msk [vmem:[%s849] sm:$0xff] %vm963, %v3908
        %s3910 = sand.u32 %s648, 1
        %s3911 = scalar_lea.sflag [#allocation3], %s3910
        %s3912 = sand.u32 %s648, 1
        %s3913 = smul.addr %s3912, 8
        %s3914 = scalar_lea.vmem [#allocation2], %s3913
        // Predicated region
        $region133: #{tpu_custom_call.1} parent=131 // pred_check
          %p3915 = pneg %p658
        $region134: #{tpu_custom_call.1} parent=131 // pred_check_branch
          %3917 = sbr.rel (%p3915) target = $region136
        $region135: #{tpu_custom_call.1} parent=131 // pred_region
          %s3919 = ssub.s32 128, 128
          %3920 = vsyncadd %s3911, %s3919
          %s3921 = smul.addr %s42, 128
          %s3922 = scalar_lea.hbm %s28, %s3921
          %s3924 = sshll.u32 %s3914, 4
          %s3925 = int_to_ptr.vmem [resolvable:$true] %s3924
          %3927 = dma.vmem_to_hbm [thread:$0]  %s3925, 128, %s3922, %s3911
        $region136: #{tpu_custom_call.1} parent=131 // pred_fallthru
          _
      $region132: #{tpu_custom_call.1} parent=5 // pred_fallthru
        _
      %p3928 = scmp.le.s32.totalorder 2, %s37
      // Predicated region
      $region137: #{tpu_custom_call.1} parent=5 // pred_check
        %p3929 = pneg %p3928
      $region138: #{tpu_custom_call.1} parent=5 // pred_check_branch
        %3931 = sbr.rel (%p3929) target = $region140
      $region139: #{tpu_custom_call.1} parent=5 // pred_region
        %s3932 = ssub.s32 %s37, 2
        // Predicated region
        $region141: #{tpu_custom_call.1} parent=139 // pred_check
          %p3933 = pneg %p664
        $region142: #{tpu_custom_call.1} parent=139 // pred_check_branch
          %3935 = sbr.rel (%p3933) target = $region144
        $region143: #{tpu_custom_call.1} parent=139 // pred_region
          %s3936 = sand.u32 %s649, 1
          %s3937 = scalar_lea.sflag [#allocation3], %s3936
          %s3938 = sand.u32 %s649, 1
          %s3939 = smul.addr %s3938, 8
          %s3940 = scalar_lea.vmem [#allocation2], %s3939
          %3941 = dma.done %s3937, 128
        $region144: #{tpu_custom_call.1} parent=139 // pred_fallthru
          _
      $region140: #{tpu_custom_call.1} parent=5 // pred_fallthru
        _
    $region6: #{tpu_custom_call.1} parent=1 // loop_footer
      %s41 = sadd.s32 1, %s37
    $region7: #{tpu_custom_call.1} parent=1 // loop_footer_branch
      %36 = sbr.rel target = $region3
    $region8: #{tpu_custom_call.1} parent=1 // loop_exit
      _
    %3942 = vsyncpa [#allocation3], 1
    %s3943 = scalar_lea.sflag [#allocation3], 1
    %3944 = vsyncpa %s3943, 1

</llo_original>
